<compile_context>
chip_gen: v7x
topology: tpu7x:2x2x1
jax: 0.10.0
libtpu: 0.0.40
codegen_flags: <defaults>
</compile_context>

<pallas_src>
import functools

import numpy as np
import jax
import jax.numpy as jnp
from jax.experimental import pallas as pl
from jax.experimental.pallas import tpu as pltpu


def _gat_kernel(x_ref, mask_ref, pool_ref,
                w0_ref, as0_ref, ad0_ref, b0_ref,
                w1_ref, as1_ref, ad1_ref, b1_ref,
                w2_ref, as2_ref, ad2_ref, b2_ref,
                fcw_ref, fcb_ref,
                o_ref,
                h_scr, pooled_scr,
                *, heads, gat_dim):
    gb, n_pad, _ = mask_ref.shape
    hidden = heads * gat_dim

    def gat_layer(h_val, w_ref, asrcT_ref, adst_ref, b_ref):
        # Projection + attention scores batched over all gb*Np nodes.
        # bf16 MXU operands, f32 accumulation.
        h_bf = h_val.astype(jnp.bfloat16)
        feat = jnp.dot(h_bf, w_ref[...],
                       preferred_element_type=jnp.float32)              # (gb*Np, hidden)
        feat_bf = feat.astype(jnp.bfloat16)
        a_dst = jnp.dot(feat_bf, adst_ref[...],
                        preferred_element_type=jnp.float32)             # (gb*Np, H)
        # a_src_rows[h, j] = <att_src_h, feat_j[head h block]>  -> row layout,
        # so per-head source scores are static sublane slices (no transposes).
        a_src_rows = jax.lax.dot_general(
            asrcT_ref[...], feat_bf, (((1,), (1,)), ((), ())),
            preferred_element_type=jnp.float32)                         # (H, gb*Np)
        bias = b_ref[...]                                               # (1, hidden)

        for g in range(gb):
            rs = g * n_pad
            mask_g = mask_ref[g].astype(jnp.float32)                    # (Np, Np) additive
            feat_g = feat_bf[rs:rs + n_pad, :]                          # (Np, hidden)
            for hh in range(heads):
                c0 = hh * gat_dim
                dst_col = a_dst[rs:rs + n_pad, hh:hh + 1]               # (Np, 1)
                src_row = a_src_rows[hh:hh + 1, rs:rs + n_pad]          # (1, Np)
                logits = dst_col + src_row                              # (Np, Np)
                logits = jnp.maximum(logits, 0.2 * logits) + mask_g     # LeakyReLU(0.2)+mask
                m = jnp.max(logits, axis=-1, keepdims=True)
                p = jnp.exp(logits - m)                                 # unnormalized
                s = jnp.sum(p, axis=-1, keepdims=True)                  # (Np, 1)
                agg = jnp.dot(p.astype(jnp.bfloat16),
                              feat_g[:, c0:c0 + gat_dim],
                              preferred_element_type=jnp.float32)       # (Np, gat_dim)
                # normalize after aggregation (EUP approx reciprocal), bias + ReLU
                head_out = jnp.maximum(
                    agg * pl.reciprocal(s, approx=True)
                    + bias[:, c0:c0 + gat_dim], 0.0)
                h_scr[rs:rs + n_pad, c0:c0 + gat_dim] = head_out
        return h_scr[...]

    h = gat_layer(x_ref[...], w0_ref, as0_ref, ad0_ref, b0_ref)
    h = gat_layer(h, w1_ref, as1_ref, ad1_ref, b1_ref)
    h = gat_layer(h, w2_ref, as2_ref, ad2_ref, b2_ref)

    # global_mean_pool per graph, then a single fc matmul + dense output store.
    for g in range(gb):
        rs = g * n_pad
        pooled_scr[g:g + 1, :] = jnp.dot(pool_ref[g], h[rs:rs + n_pad, :],
                                         preferred_element_type=jnp.float32)
    out = jnp.dot(pooled_scr[...].astype(jnp.bfloat16), fcw_ref[...],
                  preferred_element_type=jnp.float32) + fcb_ref[...]
    o_ref[0] = out.astype(o_ref.dtype)


def se_gat_no_edge_attrs(x_dense, mask, pool, params, graph_batch=8):
    """Fused forward. x_dense: (G, Np, F) f32; mask: (G, Np, Np) bf16; pool: (G, 1, Np)."""
    (w0, a0s, a0d, b0), (w1, a1s, a1d, b1), (w2, a2s, a2d, b2), (fcw, fcb) = params
    num_graphs, n_pad, num_feat = x_dense.shape
    heads, hidden = a0s.shape
    gat_dim = hidden // heads
    out_dim = fcw.shape[1]

    # Graph batching per grid step (amortize per-step overhead / small DMAs).
    gb = max(1, min(int(graph_batch), num_graphs))
    g_pad = -(-num_graphs // gb) * gb
    # TODO(synk): on v7x pad g_pad to a multiple of 2*gb so both TensorCores get work.
    if g_pad > num_graphs:
        pad = g_pad - num_graphs
        x_dense = jnp.pad(x_dense, ((0, pad), (0, 0), (0, 0)))
        mask = jnp.pad(mask, ((0, pad), (0, 0), (0, 0)))
        pool = jnp.pad(pool, ((0, pad), (0, 0), (0, 0)))
    num_blocks = g_pad // gb
    x_flat = x_dense.reshape(g_pad * n_pad, num_feat)   # flattened node axis

    # bf16 MXU operands (f32 accumulation in-kernel); biases stay f32.
    bf = lambda a: a.astype(jnp.bfloat16)
    weight_args = (bf(w0), bf(a0s), bf(a0d), b0,
                   bf(w1), bf(a1s), bf(a1d), b1,
                   bf(w2), bf(a2s), bf(a2d), b2,
                   bf(fcw), fcb)

    in_specs = [
        pl.BlockSpec((gb * n_pad, num_feat), lambda g: (g, 0)),
        pl.BlockSpec((gb, n_pad, n_pad), lambda g: (g, 0, 0)),
        pl.BlockSpec((gb, 1, n_pad), lambda g: (g, 0, 0)),
    ] + [pl.BlockSpec(a.shape, lambda g: (0, 0)) for a in weight_args]  # resident weights

    out_specs = pl.BlockSpec((1, gb, out_dim), lambda g: (g, 0, 0))
    out_shape = jax.ShapeDtypeStruct((num_blocks, gb, out_dim), jnp.float32)
    scratch_shapes = [pltpu.VMEM((gb * n_pad, hidden), jnp.float32),  # per-layer activations
                      pltpu.VMEM((gb, hidden), jnp.float32)]          # pooled features

    # Advisory cost estimate.
    per_graph = 0
    for din in (num_feat, hidden, hidden):
        per_graph += 2 * n_pad * din * hidden                     # projection
        per_graph += 2 * 2 * n_pad * hidden * heads               # alpha scores
        per_graph += heads * 2 * n_pad * n_pad * gat_dim          # aggregation
        per_graph += heads * 6 * n_pad * n_pad                    # softmax/leaky elementwise
    per_graph += 2 * n_pad * hidden + 2 * hidden * out_dim        # pool + fc
    flops = g_pad * per_graph
    transcendentals = g_pad * 3 * heads * n_pad * n_pad
    bytes_accessed = int(x_flat.size * x_flat.dtype.itemsize
                         + mask.size * mask.dtype.itemsize
                         + pool.size * pool.dtype.itemsize
                         + sum(int(a.size) * a.dtype.itemsize for a in weight_args)
                         + g_pad * out_dim * 4)

    out = pl.pallas_call(
        functools.partial(_gat_kernel, heads=heads, gat_dim=gat_dim),
        out_shape=out_shape,
        grid=(num_blocks,),
        in_specs=in_specs,
        out_specs=out_specs,
        scratch_shapes=scratch_shapes,
        compiler_params=pltpu.CompilerParams(
            dimension_semantics=("parallel",),
            vmem_limit_bytes=32 * 1024 * 1024),
        cost_estimate=pl.CostEstimate(flops=int(flops),
                                      transcendentals=int(transcendentals),
                                      bytes_accessed=bytes_accessed),
    )(x_flat, mask, pool, *weight_args)
    return out.reshape(g_pad, out_dim)[:num_graphs]


def build_dense_batch(x, edge_index, batch, num_graphs):
    """PyG-style (x, edge_index, batch) -> dense (x_dense, additive bf16 mask, pool)."""
    x = np.asarray(x, np.float32)
    edge_index = np.asarray(edge_index)
    batch = np.asarray(batch)
    n_total, num_feat = x.shape

    counts = np.zeros(num_graphs, np.int64)
    local = np.zeros(n_total, np.int64)
    for n in range(n_total):
        g = int(batch[n]); local[n] = counts[g]; counts[g] += 1
    n_pad = int(max(8, -(-int(counts.max()) // 8) * 8))     # sublane multiple

    x_dense = np.zeros((num_graphs, n_pad, num_feat), np.float32)
    mask = np.full((num_graphs, n_pad, n_pad), -1e9, np.float32)   # additive mask
    pool = np.zeros((num_graphs, 1, n_pad), np.float32)
    for n in range(n_total):
        x_dense[int(batch[n]), int(local[n])] = x[n]
    for e in range(edge_index.shape[1]):
        s, t = int(edge_index[0, e]), int(edge_index[1, e])
        mask[int(batch[s]), int(local[t]), int(local[s])] = 0.0     # message s -> t
    idx = np.arange(n_pad)
    for g in range(num_graphs):
        mask[g, idx, idx] = 0.0                                     # self-loops
        pool[g, 0, :int(counts[g])] = 1.0 / max(int(counts[g]), 1)
    return (jnp.asarray(x_dense),
            jnp.asarray(mask, jnp.bfloat16),   # bf16: halves the O(Np^2) HBM stream
            jnp.asarray(pool))


def init_params(key, num_features, output_dim, gat_dim=16, heads=4, gat_layers=3):
    """Deterministic init mirroring GATConv / Linear parameter shapes.

    att_src is packed transposed as (H, hidden) rows (block structure) so all
    per-head source scores come from one dot_general per layer; att_dst is
    packed block-diagonal as (hidden, H).
    """
    hidden = heads * gat_dim
    dims_in = [num_features] + [hidden] * (gat_layers - 1)
    keys = jax.random.split(key, 4 * gat_layers + 2)
    scale = 0.1
    layers = []
    ki = 0
    for l in range(gat_layers):
        w = scale * jax.random.normal(keys[ki], (dims_in[l], hidden), jnp.float32); ki += 1
        att_src = scale * jax.random.normal(keys[ki], (heads, gat_dim), jnp.float32); ki += 1
        att_dst = scale * jax.random.normal(keys[ki], (heads, gat_dim), jnp.float32); ki += 1
        b = scale * jax.random.normal(keys[ki], (1, hidden), jnp.float32); ki += 1
        asrcT = np.zeros((heads, hidden), np.float32)
        adst = np.zeros((hidden, heads), np.float32)
        att_src_np = np.asarray(att_src); att_dst_np = np.asarray(att_dst)
        for h in range(heads):
            asrcT[h, h * gat_dim:(h + 1) * gat_dim] = att_src_np[h]
            adst[h * gat_dim:(h + 1) * gat_dim, h] = att_dst_np[h]
        layers.append((w, jnp.asarray(asrcT), jnp.asarray(adst), b))
    fcw = scale * jax.random.normal(keys[ki], (hidden, output_dim), jnp.float32); ki += 1
    fcb = scale * jax.random.normal(keys[ki], (1, output_dim), jnp.float32)
    return tuple(layers) + ((fcw, fcb),)


def _reference(x_dense, mask, pool, params):
    """Pure-JAX f32 dense reference of the same forward pass."""
    *gat_params, (fcw, fcb) = params
    heads, hidden = gat_params[0][1].shape
    gat_dim = hidden // heads
    outs = []
    for g in range(x_dense.shape[0]):
        h = x_dense[g]
        m = mask[g].astype(jnp.float32)
        for (w, asrcT, adst, b) in gat_params:
            feat = h @ w
            a_dst = feat @ adst
            a_src = feat @ asrcT.T
            head_outs = []
            for hh in range(heads):
                logits = a_dst[:, hh:hh + 1] + a_src[:, hh][None, :]
                logits = jnp.maximum(logits, 0.2 * logits) + m
                mx = logits.max(axis=-1, keepdims=True)
                p = jnp.exp(logits - mx)
                att = p / p.sum(axis=-1, keepdims=True)
                head_outs.append(att @ feat[:, hh * gat_dim:(hh + 1) * gat_dim])
            h = jnp.maximum(jnp.concatenate(head_outs, axis=1) + b, 0.0)
        pooled = pool[g] @ h
        outs.append(pooled @ fcw + fcb)
    return jnp.concatenate(outs, axis=0)


if __name__ == "__main__":
    key = jax.random.PRNGKey(0)
    kx, kp = jax.random.split(key)

    num_graphs, nodes_per_graph = 2, 8
    num_features, gat_dim, heads, output_dim = 8, 16, 4, 8

    n_total = num_graphs * nodes_per_graph
    x = jax.random.normal(kx, (n_total, num_features), jnp.float32)
    batch = np.repeat(np.arange(num_graphs), nodes_per_graph)

    # Undirected ring within each graph.
    edges = []
    for g in range(num_graphs):
        base = g * nodes_per_graph
        for i in range(nodes_per_graph):
            s, t = base + i, base + (i + 1) % nodes_per_graph
            edges.append((s, t))
            edges.append((t, s))
    edge_index = np.asarray(edges, np.int64).T          # (2, E)

    x_dense, mask, pool = build_dense_batch(np.asarray(x), edge_index, batch, num_graphs)
    params = init_params(kp, num_features, output_dim,
                         gat_dim=gat_dim, heads=heads, gat_layers=3)

    out = se_gat_no_edge_attrs(x_dense, mask, pool, params, graph_batch=8)
    out = jax.block_until_ready(out)

    ref = _reference(x_dense, mask, pool, params)
    assert out.shape == (num_graphs, output_dim)
    assert not bool(jnp.any(jnp.isnan(out)))
    # bf16 MXU operands + approx reciprocal vs f32 reference -> loose-ish tolerance.
    assert jnp.allclose(out, ref, atol=2e-2, rtol=2e-2), (np.asarray(out), np.asarray(ref))

    print("KERNEL_OK")
</pallas_src>

<mosaic_0001>
module attributes {stable_mosaic.version = 11 : i64} {
  func.func @_gat_kernel(%arg0: i32, %arg1: memref<16x8xf32, #tpu.memory_space<vmem>>, %arg2: memref<2x8x8xbf16, #tpu.memory_space<vmem>>, %arg3: memref<2x1x8xf32, #tpu.memory_space<vmem>>, %arg4: memref<8x64xbf16, #tpu.memory_space<vmem>>, %arg5: memref<4x64xbf16, #tpu.memory_space<vmem>>, %arg6: memref<64x4xbf16, #tpu.memory_space<vmem>>, %arg7: memref<1x64xf32, #tpu.memory_space<vmem>>, %arg8: memref<64x64xbf16, #tpu.memory_space<vmem>>, %arg9: memref<4x64xbf16, #tpu.memory_space<vmem>>, %arg10: memref<64x4xbf16, #tpu.memory_space<vmem>>, %arg11: memref<1x64xf32, #tpu.memory_space<vmem>>, %arg12: memref<64x64xbf16, #tpu.memory_space<vmem>>, %arg13: memref<4x64xbf16, #tpu.memory_space<vmem>>, %arg14: memref<64x4xbf16, #tpu.memory_space<vmem>>, %arg15: memref<1x64xf32, #tpu.memory_space<vmem>>, %arg16: memref<64x8xbf16, #tpu.memory_space<vmem>>, %arg17: memref<1x8xf32, #tpu.memory_space<vmem>>, %arg18: memref<1x2x8xf32, #tpu.memory_space<vmem>>, %arg19: memref<16x64xf32, #tpu.memory_space<vmem>>, %arg20: memref<2x64xf32, #tpu.memory_space<vmem>>) attributes {dimension_semantics = [#tpu.dimension_semantics<parallel>], iteration_bounds = array<i64: 1>, scalar_prefetch = 0 : i64, scratch_operands = 2 : i64, tpu.core_type = #tpu.core_type<tc>, window_params = [{transform_indices = @transform_0, window_bounds = array<i64: 16, 8>}, {transform_indices = @transform_1, window_bounds = array<i64: 2, 8, 8>}, {transform_indices = @transform_2, window_bounds = array<i64: 2, 1, 8>}, {pipeline_mode = #tpu.pipeline_mode<synchronous>, transform_indices = @transform_3, window_bounds = array<i64: 8, 64>}, {pipeline_mode = #tpu.pipeline_mode<synchronous>, transform_indices = @transform_4, window_bounds = array<i64: 4, 64>}, {pipeline_mode = #tpu.pipeline_mode<synchronous>, transform_indices = @transform_5, window_bounds = array<i64: 64, 4>}, {pipeline_mode = #tpu.pipeline_mode<synchronous>, transform_indices = @transform_6, window_bounds = array<i64: 1, 64>}, {pipeline_mode = #tpu.pipeline_mode<synchronous>, transform_indices = @transform_7, window_bounds = array<i64: 64, 64>}, {pipeline_mode = #tpu.pipeline_mode<synchronous>, transform_indices = @transform_8, window_bounds = array<i64: 4, 64>}, {pipeline_mode = #tpu.pipeline_mode<synchronous>, transform_indices = @transform_9, window_bounds = array<i64: 64, 4>}, {pipeline_mode = #tpu.pipeline_mode<synchronous>, transform_indices = @transform_10, window_bounds = array<i64: 1, 64>}, {pipeline_mode = #tpu.pipeline_mode<synchronous>, transform_indices = @transform_11, window_bounds = array<i64: 64, 64>}, {pipeline_mode = #tpu.pipeline_mode<synchronous>, transform_indices = @transform_12, window_bounds = array<i64: 4, 64>}, {pipeline_mode = #tpu.pipeline_mode<synchronous>, transform_indices = @transform_13, window_bounds = array<i64: 64, 4>}, {pipeline_mode = #tpu.pipeline_mode<synchronous>, transform_indices = @transform_14, window_bounds = array<i64: 1, 64>}, {pipeline_mode = #tpu.pipeline_mode<synchronous>, transform_indices = @transform_15, window_bounds = array<i64: 64, 8>}, {pipeline_mode = #tpu.pipeline_mode<synchronous>, transform_indices = @transform_16, window_bounds = array<i64: 1, 8>}, {transform_indices = @transform_17, window_bounds = array<i64: 1, 2, 8>}]} {
    %c0 = arith.constant 0 : index
    %c0_0 = arith.constant 0 : index
    %0 = vector.load %arg1[%c0, %c0_0] : memref<16x8xf32, #tpu.memory_space<vmem>>, vector<16x8xf32>
    %1 = arith.truncf %0 : vector<16x8xf32> to vector<16x8xbf16>
    %c0_1 = arith.constant 0 : index
    %c0_2 = arith.constant 0 : index
    %2 = vector.load %arg4[%c0_1, %c0_2] : memref<8x64xbf16, #tpu.memory_space<vmem>>, vector<8x64xbf16>
    %cst = arith.constant dense<0.000000e+00> : vector<16x64xf32>
    %3 = tpu.matmul %1, %2, %cst {dimension_numbers = #tpu.dot_dimension_numbers<[1], [0], [0], [1], [0, 0, 1, 1], [], []>} : vector<16x8xbf16>, vector<8x64xbf16>, vector<16x64xf32> -> vector<16x64xf32>
    %4 = arith.truncf %3 : vector<16x64xf32> to vector<16x64xbf16>
    %c0_3 = arith.constant 0 : index
    %c0_4 = arith.constant 0 : index
    %5 = vector.load %arg6[%c0_3, %c0_4] : memref<64x4xbf16, #tpu.memory_space<vmem>>, vector<64x4xbf16>
    %cst_5 = arith.constant dense<0.000000e+00> : vector<16x4xf32>
    %6 = tpu.matmul %4, %5, %cst_5 {dimension_numbers = #tpu.dot_dimension_numbers<[1], [0], [0], [1], [0, 0, 1, 1], [], []>} : vector<16x64xbf16>, vector<64x4xbf16>, vector<16x4xf32> -> vector<16x4xf32>
    %c0_6 = arith.constant 0 : index
    %c0_7 = arith.constant 0 : index
    %7 = vector.load %arg5[%c0_6, %c0_7] : memref<4x64xbf16, #tpu.memory_space<vmem>>, vector<4x64xbf16>
    %cst_8 = arith.constant dense<0.000000e+00> : vector<4x16xf32>
    %8 = tpu.matmul %7, %4, %cst_8 {dimension_numbers = #tpu.dot_dimension_numbers<[1], [1], [0], [0], [0, 0, 1, 0], [], []>} : vector<4x64xbf16>, vector<16x64xbf16>, vector<4x16xf32> -> vector<4x16xf32>
    %c0_9 = arith.constant 0 : index
    %c0_10 = arith.constant 0 : index
    %9 = vector.load %arg7[%c0_9, %c0_10] : memref<1x64xf32, #tpu.memory_space<vmem>>, vector<1x64xf32>
    %c0_11 = arith.constant 0 : index
    %c0_12 = arith.constant 0 : index
    %c0_13 = arith.constant 0 : index
    %10 = vector.load %arg2[%c0_11, %c0_12, %c0_13] : memref<2x8x8xbf16, #tpu.memory_space<vmem>>, vector<1x8x8xbf16>
    %11 = vector.shape_cast %10 : vector<1x8x8xbf16> to vector<8x8xbf16>
    %12 = arith.extf %11 : vector<8x8xbf16> to vector<8x8xf32>
    %13 = vector.extract_strided_slice %4 {offsets = [0, 0], sizes = [8, 64], strides = [1, 1]} : vector<16x64xbf16> to vector<8x64xbf16>
    %14 = vector.extract_strided_slice %6 {offsets = [0, 0], sizes = [8, 1], strides = [1, 1]} : vector<16x4xf32> to vector<8x1xf32>
    %15 = vector.extract_strided_slice %8 {offsets = [0, 0], sizes = [1, 8], strides = [1, 1]} : vector<4x16xf32> to vector<1x8xf32>
    %16 = vector.broadcast %14 : vector<8x1xf32> to vector<8x8xf32>
    %17 = vector.broadcast %15 : vector<1x8xf32> to vector<8x8xf32>
    %18 = arith.addf %16, %17 : vector<8x8xf32>
    %cst_14 = arith.constant 2.000000e-01 : f32
    %19 = vector.broadcast %cst_14 : f32 to vector<8x8xf32>
    %20 = arith.mulf %19, %18 : vector<8x8xf32>
    %21 = arith.maximumf %18, %20 : vector<8x8xf32>
    %22 = arith.addf %21, %12 : vector<8x8xf32>
    %cst_15 = arith.constant dense<0xFF800000> : vector<8xf32>
    %23 = vector.multi_reduction <maximumf>, %22, %cst_15 [1] : vector<8x8xf32> to vector<8xf32>
    %24 = vector.shape_cast %23 : vector<8xf32> to vector<8x1xf32>
    %25 = vector.broadcast %24 : vector<8x1xf32> to vector<8x8xf32>
    %26 = arith.subf %22, %25 : vector<8x8xf32>
    %27 = math.exp %26 : vector<8x8xf32>
    %cst_16 = arith.constant dense<0.000000e+00> : vector<8xf32>
    %28 = vector.multi_reduction <add>, %27, %cst_16 [1] : vector<8x8xf32> to vector<8xf32>
    %29 = vector.shape_cast %28 : vector<8xf32> to vector<8x1xf32>
    %30 = arith.truncf %27 : vector<8x8xf32> to vector<8x8xbf16>
    %31 = vector.extract_strided_slice %13 {offsets = [0, 0], sizes = [8, 16], strides = [1, 1]} : vector<8x64xbf16> to vector<8x16xbf16>
    %cst_17 = arith.constant dense<0.000000e+00> : vector<8x16xf32>
    %32 = tpu.matmul %30, %31, %cst_17 {dimension_numbers = #tpu.dot_dimension_numbers<[1], [0], [0], [1], [0, 0, 1, 1], [], []>} : vector<8x8xbf16>, vector<8x16xbf16>, vector<8x16xf32> -> vector<8x16xf32>
    %33 = tpu.reciprocal %29 {approx = true} : vector<8x1xf32> -> vector<8x1xf32>
    %34 = vector.broadcast %33 : vector<8x1xf32> to vector<8x16xf32>
    %35 = arith.mulf %32, %34 : vector<8x16xf32>
    %36 = vector.extract_strided_slice %9 {offsets = [0, 0], sizes = [1, 16], strides = [1, 1]} : vector<1x64xf32> to vector<1x16xf32>
    %37 = vector.broadcast %36 : vector<1x16xf32> to vector<8x16xf32>
    %38 = arith.addf %35, %37 : vector<8x16xf32>
    %cst_18 = arith.constant 0.000000e+00 : f32
    %39 = vector.broadcast %cst_18 : f32 to vector<8x16xf32>
    %40 = arith.maximumf %38, %39 : vector<8x16xf32>
    %c0_19 = arith.constant 0 : index
    %c0_20 = arith.constant 0 : index
    %41 = vector.load %arg19[%c0_19, %c0_20] : memref<16x64xf32, #tpu.memory_space<vmem>>, vector<8x16xf32>
    tpu.vector_store %arg19[%c0_19, %c0_20], %40 {strides = array<i32>} : memref<16x64xf32, #tpu.memory_space<vmem>>, vector<8x16xf32>,
    %42 = vector.extract_strided_slice %6 {offsets = [0, 1], sizes = [8, 1], strides = [1, 1]} : vector<16x4xf32> to vector<8x1xf32>
    %43 = vector.extract_strided_slice %8 {offsets = [1, 0], sizes = [1, 8], strides = [1, 1]} : vector<4x16xf32> to vector<1x8xf32>
    %44 = vector.broadcast %42 : vector<8x1xf32> to vector<8x8xf32>
    %45 = vector.broadcast %43 : vector<1x8xf32> to vector<8x8xf32>
    %46 = arith.addf %44, %45 : vector<8x8xf32>
    %cst_21 = arith.constant 2.000000e-01 : f32
    %47 = vector.broadcast %cst_21 : f32 to vector<8x8xf32>
    %48 = arith.mulf %47, %46 : vector<8x8xf32>
    %49 = arith.maximumf %46, %48 : vector<8x8xf32>
    %50 = arith.addf %49, %12 : vector<8x8xf32>
    %cst_22 = arith.constant dense<0xFF800000> : vector<8xf32>
    %51 = vector.multi_reduction <maximumf>, %50, %cst_22 [1] : vector<8x8xf32> to vector<8xf32>
    %52 = vector.shape_cast %51 : vector<8xf32> to vector<8x1xf32>
    %53 = vector.broadcast %52 : vector<8x1xf32> to vector<8x8xf32>
    %54 = arith.subf %50, %53 : vector<8x8xf32>
    %55 = math.exp %54 : vector<8x8xf32>
    %cst_23 = arith.constant dense<0.000000e+00> : vector<8xf32>
    %56 = vector.multi_reduction <add>, %55, %cst_23 [1] : vector<8x8xf32> to vector<8xf32>
    %57 = vector.shape_cast %56 : vector<8xf32> to vector<8x1xf32>
    %58 = arith.truncf %55 : vector<8x8xf32> to vector<8x8xbf16>
    %59 = vector.extract_strided_slice %13 {offsets = [0, 16], sizes = [8, 16], strides = [1, 1]} : vector<8x64xbf16> to vector<8x16xbf16>
    %cst_24 = arith.constant dense<0.000000e+00> : vector<8x16xf32>
    %60 = tpu.matmul %58, %59, %cst_24 {dimension_numbers = #tpu.dot_dimension_numbers<[1], [0], [0], [1], [0, 0, 1, 1], [], []>} : vector<8x8xbf16>, vector<8x16xbf16>, vector<8x16xf32> -> vector<8x16xf32>
    %61 = tpu.reciprocal %57 {approx = true} : vector<8x1xf32> -> vector<8x1xf32>
    %62 = vector.broadcast %61 : vector<8x1xf32> to vector<8x16xf32>
    %63 = arith.mulf %60, %62 : vector<8x16xf32>
    %64 = vector.extract_strided_slice %9 {offsets = [0, 16], sizes = [1, 16], strides = [1, 1]} : vector<1x64xf32> to vector<1x16xf32>
    %65 = vector.broadcast %64 : vector<1x16xf32> to vector<8x16xf32>
    %66 = arith.addf %63, %65 : vector<8x16xf32>
    %cst_25 = arith.constant 0.000000e+00 : f32
    %67 = vector.broadcast %cst_25 : f32 to vector<8x16xf32>
    %68 = arith.maximumf %66, %67 : vector<8x16xf32>
    %c0_26 = arith.constant 0 : index
    %c16 = arith.constant 16 : index
    %69 = vector.load %arg19[%c0_26, %c16] : memref<16x64xf32, #tpu.memory_space<vmem>>, vector<8x16xf32>
    tpu.vector_store %arg19[%c0_26, %c16], %68 {strides = array<i32>} : memref<16x64xf32, #tpu.memory_space<vmem>>, vector<8x16xf32>,
    %70 = vector.extract_strided_slice %6 {offsets = [0, 2], sizes = [8, 1], strides = [1, 1]} : vector<16x4xf32> to vector<8x1xf32>
    %71 = vector.extract_strided_slice %8 {offsets = [2, 0], sizes = [1, 8], strides = [1, 1]} : vector<4x16xf32> to vector<1x8xf32>
    %72 = vector.broadcast %70 : vector<8x1xf32> to vector<8x8xf32>
    %73 = vector.broadcast %71 : vector<1x8xf32> to vector<8x8xf32>
    %74 = arith.addf %72, %73 : vector<8x8xf32>
    %cst_27 = arith.constant 2.000000e-01 : f32
    %75 = vector.broadcast %cst_27 : f32 to vector<8x8xf32>
    %76 = arith.mulf %75, %74 : vector<8x8xf32>
    %77 = arith.maximumf %74, %76 : vector<8x8xf32>
    %78 = arith.addf %77, %12 : vector<8x8xf32>
    %cst_28 = arith.constant dense<0xFF800000> : vector<8xf32>
    %79 = vector.multi_reduction <maximumf>, %78, %cst_28 [1] : vector<8x8xf32> to vector<8xf32>
    %80 = vector.shape_cast %79 : vector<8xf32> to vector<8x1xf32>
    %81 = vector.broadcast %80 : vector<8x1xf32> to vector<8x8xf32>
    %82 = arith.subf %78, %81 : vector<8x8xf32>
    %83 = math.exp %82 : vector<8x8xf32>
    %cst_29 = arith.constant dense<0.000000e+00> : vector<8xf32>
    %84 = vector.multi_reduction <add>, %83, %cst_29 [1] : vector<8x8xf32> to vector<8xf32>
    %85 = vector.shape_cast %84 : vector<8xf32> to vector<8x1xf32>
    %86 = arith.truncf %83 : vector<8x8xf32> to vector<8x8xbf16>
    %87 = vector.extract_strided_slice %13 {offsets = [0, 32], sizes = [8, 16], strides = [1, 1]} : vector<8x64xbf16> to vector<8x16xbf16>
    %cst_30 = arith.constant dense<0.000000e+00> : vector<8x16xf32>
    %88 = tpu.matmul %86, %87, %cst_30 {dimension_numbers = #tpu.dot_dimension_numbers<[1], [0], [0], [1], [0, 0, 1, 1], [], []>} : vector<8x8xbf16>, vector<8x16xbf16>, vector<8x16xf32> -> vector<8x16xf32>
    %89 = tpu.reciprocal %85 {approx = true} : vector<8x1xf32> -> vector<8x1xf32>
    %90 = vector.broadcast %89 : vector<8x1xf32> to vector<8x16xf32>
    %91 = arith.mulf %88, %90 : vector<8x16xf32>
    %92 = vector.extract_strided_slice %9 {offsets = [0, 32], sizes = [1, 16], strides = [1, 1]} : vector<1x64xf32> to vector<1x16xf32>
    %93 = vector.broadcast %92 : vector<1x16xf32> to vector<8x16xf32>
    %94 = arith.addf %91, %93 : vector<8x16xf32>
    %cst_31 = arith.constant 0.000000e+00 : f32
    %95 = vector.broadcast %cst_31 : f32 to vector<8x16xf32>
    %96 = arith.maximumf %94, %95 : vector<8x16xf32>
    %c0_32 = arith.constant 0 : index
    %c32 = arith.constant 32 : index
    %97 = vector.load %arg19[%c0_32, %c32] : memref<16x64xf32, #tpu.memory_space<vmem>>, vector<8x16xf32>
    tpu.vector_store %arg19[%c0_32, %c32], %96 {strides = array<i32>} : memref<16x64xf32, #tpu.memory_space<vmem>>, vector<8x16xf32>,
    %98 = vector.extract_strided_slice %6 {offsets = [0, 3], sizes = [8, 1], strides = [1, 1]} : vector<16x4xf32> to vector<8x1xf32>
    %99 = vector.extract_strided_slice %8 {offsets = [3, 0], sizes = [1, 8], strides = [1, 1]} : vector<4x16xf32> to vector<1x8xf32>
    %100 = vector.broadcast %98 : vector<8x1xf32> to vector<8x8xf32>
    %101 = vector.broadcast %99 : vector<1x8xf32> to vector<8x8xf32>
    %102 = arith.addf %100, %101 : vector<8x8xf32>
    %cst_33 = arith.constant 2.000000e-01 : f32
    %103 = vector.broadcast %cst_33 : f32 to vector<8x8xf32>
    %104 = arith.mulf %103, %102 : vector<8x8xf32>
    %105 = arith.maximumf %102, %104 : vector<8x8xf32>
    %106 = arith.addf %105, %12 : vector<8x8xf32>
    %cst_34 = arith.constant dense<0xFF800000> : vector<8xf32>
    %107 = vector.multi_reduction <maximumf>, %106, %cst_34 [1] : vector<8x8xf32> to vector<8xf32>
    %108 = vector.shape_cast %107 : vector<8xf32> to vector<8x1xf32>
    %109 = vector.broadcast %108 : vector<8x1xf32> to vector<8x8xf32>
    %110 = arith.subf %106, %109 : vector<8x8xf32>
    %111 = math.exp %110 : vector<8x8xf32>
    %cst_35 = arith.constant dense<0.000000e+00> : vector<8xf32>
    %112 = vector.multi_reduction <add>, %111, %cst_35 [1] : vector<8x8xf32> to vector<8xf32>
    %113 = vector.shape_cast %112 : vector<8xf32> to vector<8x1xf32>
    %114 = arith.truncf %111 : vector<8x8xf32> to vector<8x8xbf16>
    %115 = vector.extract_strided_slice %13 {offsets = [0, 48], sizes = [8, 16], strides = [1, 1]} : vector<8x64xbf16> to vector<8x16xbf16>
    %cst_36 = arith.constant dense<0.000000e+00> : vector<8x16xf32>
    %116 = tpu.matmul %114, %115, %cst_36 {dimension_numbers = #tpu.dot_dimension_numbers<[1], [0], [0], [1], [0, 0, 1, 1], [], []>} : vector<8x8xbf16>, vector<8x16xbf16>, vector<8x16xf32> -> vector<8x16xf32>
    %117 = tpu.reciprocal %113 {approx = true} : vector<8x1xf32> -> vector<8x1xf32>
    %118 = vector.broadcast %117 : vector<8x1xf32> to vector<8x16xf32>
    %119 = arith.mulf %116, %118 : vector<8x16xf32>
    %120 = vector.extract_strided_slice %9 {offsets = [0, 48], sizes = [1, 16], strides = [1, 1]} : vector<1x64xf32> to vector<1x16xf32>
    %121 = vector.broadcast %120 : vector<1x16xf32> to vector<8x16xf32>
    %122 = arith.addf %119, %121 : vector<8x16xf32>
    %cst_37 = arith.constant 0.000000e+00 : f32
    %123 = vector.broadcast %cst_37 : f32 to vector<8x16xf32>
    %124 = arith.maximumf %122, %123 : vector<8x16xf32>
    %c0_38 = arith.constant 0 : index
    %c48 = arith.constant 48 : index
    %125 = vector.load %arg19[%c0_38, %c48] : memref<16x64xf32, #tpu.memory_space<vmem>>, vector<8x16xf32>
    tpu.vector_store %arg19[%c0_38, %c48], %124 {strides = array<i32>} : memref<16x64xf32, #tpu.memory_space<vmem>>, vector<8x16xf32>,
    %c1 = arith.constant 1 : index
    %c0_39 = arith.constant 0 : index
    %c0_40 = arith.constant 0 : index
    %126 = vector.load %arg2[%c1, %c0_39, %c0_40] : memref<2x8x8xbf16, #tpu.memory_space<vmem>>, vector<1x8x8xbf16>
    %127 = vector.shape_cast %126 : vector<1x8x8xbf16> to vector<8x8xbf16>
    %128 = arith.extf %127 : vector<8x8xbf16> to vector<8x8xf32>
    %129 = vector.extract_strided_slice %4 {offsets = [8, 0], sizes = [8, 64], strides = [1, 1]} : vector<16x64xbf16> to vector<8x64xbf16>
    %130 = vector.extract_strided_slice %6 {offsets = [8, 0], sizes = [8, 1], strides = [1, 1]} : vector<16x4xf32> to vector<8x1xf32>
    %131 = vector.extract_strided_slice %8 {offsets = [0, 8], sizes = [1, 8], strides = [1, 1]} : vector<4x16xf32> to vector<1x8xf32>
    %132 = vector.broadcast %130 : vector<8x1xf32> to vector<8x8xf32>
    %133 = vector.broadcast %131 : vector<1x8xf32> to vector<8x8xf32>
    %134 = arith.addf %132, %133 : vector<8x8xf32>
    %cst_41 = arith.constant 2.000000e-01 : f32
    %135 = vector.broadcast %cst_41 : f32 to vector<8x8xf32>
    %136 = arith.mulf %135, %134 : vector<8x8xf32>
    %137 = arith.maximumf %134, %136 : vector<8x8xf32>
    %138 = arith.addf %137, %128 : vector<8x8xf32>
    %cst_42 = arith.constant dense<0xFF800000> : vector<8xf32>
    %139 = vector.multi_reduction <maximumf>, %138, %cst_42 [1] : vector<8x8xf32> to vector<8xf32>
    %140 = vector.shape_cast %139 : vector<8xf32> to vector<8x1xf32>
    %141 = vector.broadcast %140 : vector<8x1xf32> to vector<8x8xf32>
    %142 = arith.subf %138, %141 : vector<8x8xf32>
    %143 = math.exp %142 : vector<8x8xf32>
    %cst_43 = arith.constant dense<0.000000e+00> : vector<8xf32>
    %144 = vector.multi_reduction <add>, %143, %cst_43 [1] : vector<8x8xf32> to vector<8xf32>
    %145 = vector.shape_cast %144 : vector<8xf32> to vector<8x1xf32>
    %146 = arith.truncf %143 : vector<8x8xf32> to vector<8x8xbf16>
    %147 = vector.extract_strided_slice %129 {offsets = [0, 0], sizes = [8, 16], strides = [1, 1]} : vector<8x64xbf16> to vector<8x16xbf16>
    %cst_44 = arith.constant dense<0.000000e+00> : vector<8x16xf32>
    %148 = tpu.matmul %146, %147, %cst_44 {dimension_numbers = #tpu.dot_dimension_numbers<[1], [0], [0], [1], [0, 0, 1, 1], [], []>} : vector<8x8xbf16>, vector<8x16xbf16>, vector<8x16xf32> -> vector<8x16xf32>
    %149 = tpu.reciprocal %145 {approx = true} : vector<8x1xf32> -> vector<8x1xf32>
    %150 = vector.broadcast %149 : vector<8x1xf32> to vector<8x16xf32>
    %151 = arith.mulf %148, %150 : vector<8x16xf32>
    %152 = vector.extract_strided_slice %9 {offsets = [0, 0], sizes = [1, 16], strides = [1, 1]} : vector<1x64xf32> to vector<1x16xf32>
    %153 = vector.broadcast %152 : vector<1x16xf32> to vector<8x16xf32>
    %154 = arith.addf %151, %153 : vector<8x16xf32>
    %cst_45 = arith.constant 0.000000e+00 : f32
    %155 = vector.broadcast %cst_45 : f32 to vector<8x16xf32>
    %156 = arith.maximumf %154, %155 : vector<8x16xf32>
    %c8 = arith.constant 8 : index
    %c0_46 = arith.constant 0 : index
    %157 = vector.load %arg19[%c8, %c0_46] : memref<16x64xf32, #tpu.memory_space<vmem>>, vector<8x16xf32>
    tpu.vector_store %arg19[%c8, %c0_46], %156 {strides = array<i32>} : memref<16x64xf32, #tpu.memory_space<vmem>>, vector<8x16xf32>,
    %158 = vector.extract_strided_slice %6 {offsets = [8, 1], sizes = [8, 1], strides = [1, 1]} : vector<16x4xf32> to vector<8x1xf32>
    %159 = vector.extract_strided_slice %8 {offsets = [1, 8], sizes = [1, 8], strides = [1, 1]} : vector<4x16xf32> to vector<1x8xf32>
    %160 = vector.broadcast %158 : vector<8x1xf32> to vector<8x8xf32>
    %161 = vector.broadcast %159 : vector<1x8xf32> to vector<8x8xf32>
    %162 = arith.addf %160, %161 : vector<8x8xf32>
    %cst_47 = arith.constant 2.000000e-01 : f32
    %163 = vector.broadcast %cst_47 : f32 to vector<8x8xf32>
    %164 = arith.mulf %163, %162 : vector<8x8xf32>
    %165 = arith.maximumf %162, %164 : vector<8x8xf32>
    %166 = arith.addf %165, %128 : vector<8x8xf32>
    %cst_48 = arith.constant dense<0xFF800000> : vector<8xf32>
    %167 = vector.multi_reduction <maximumf>, %166, %cst_48 [1] : vector<8x8xf32> to vector<8xf32>
    %168 = vector.shape_cast %167 : vector<8xf32> to vector<8x1xf32>
    %169 = vector.broadcast %168 : vector<8x1xf32> to vector<8x8xf32>
    %170 = arith.subf %166, %169 : vector<8x8xf32>
    %171 = math.exp %170 : vector<8x8xf32>
    %cst_49 = arith.constant dense<0.000000e+00> : vector<8xf32>
    %172 = vector.multi_reduction <add>, %171, %cst_49 [1] : vector<8x8xf32> to vector<8xf32>
    %173 = vector.shape_cast %172 : vector<8xf32> to vector<8x1xf32>
    %174 = arith.truncf %171 : vector<8x8xf32> to vector<8x8xbf16>
    %175 = vector.extract_strided_slice %129 {offsets = [0, 16], sizes = [8, 16], strides = [1, 1]} : vector<8x64xbf16> to vector<8x16xbf16>
    %cst_50 = arith.constant dense<0.000000e+00> : vector<8x16xf32>
    %176 = tpu.matmul %174, %175, %cst_50 {dimension_numbers = #tpu.dot_dimension_numbers<[1], [0], [0], [1], [0, 0, 1, 1], [], []>} : vector<8x8xbf16>, vector<8x16xbf16>, vector<8x16xf32> -> vector<8x16xf32>
    %177 = tpu.reciprocal %173 {approx = true} : vector<8x1xf32> -> vector<8x1xf32>
    %178 = vector.broadcast %177 : vector<8x1xf32> to vector<8x16xf32>
    %179 = arith.mulf %176, %178 : vector<8x16xf32>
    %180 = vector.extract_strided_slice %9 {offsets = [0, 16], sizes = [1, 16], strides = [1, 1]} : vector<1x64xf32> to vector<1x16xf32>
    %181 = vector.broadcast %180 : vector<1x16xf32> to vector<8x16xf32>
    %182 = arith.addf %179, %181 : vector<8x16xf32>
    %cst_51 = arith.constant 0.000000e+00 : f32
    %183 = vector.broadcast %cst_51 : f32 to vector<8x16xf32>
    %184 = arith.maximumf %182, %183 : vector<8x16xf32>
    %c8_52 = arith.constant 8 : index
    %c16_53 = arith.constant 16 : index
    %185 = vector.load %arg19[%c8_52, %c16_53] : memref<16x64xf32, #tpu.memory_space<vmem>>, vector<8x16xf32>
    tpu.vector_store %arg19[%c8_52, %c16_53], %184 {strides = array<i32>} : memref<16x64xf32, #tpu.memory_space<vmem>>, vector<8x16xf32>,
    %186 = vector.extract_strided_slice %6 {offsets = [8, 2], sizes = [8, 1], strides = [1, 1]} : vector<16x4xf32> to vector<8x1xf32>
    %187 = vector.extract_strided_slice %8 {offsets = [2, 8], sizes = [1, 8], strides = [1, 1]} : vector<4x16xf32> to vector<1x8xf32>
    %188 = vector.broadcast %186 : vector<8x1xf32> to vector<8x8xf32>
    %189 = vector.broadcast %187 : vector<1x8xf32> to vector<8x8xf32>
    %190 = arith.addf %188, %189 : vector<8x8xf32>
    %cst_54 = arith.constant 2.000000e-01 : f32
    %191 = vector.broadcast %cst_54 : f32 to vector<8x8xf32>
    %192 = arith.mulf %191, %190 : vector<8x8xf32>
    %193 = arith.maximumf %190, %192 : vector<8x8xf32>
    %194 = arith.addf %193, %128 : vector<8x8xf32>
    %cst_55 = arith.constant dense<0xFF800000> : vector<8xf32>
    %195 = vector.multi_reduction <maximumf>, %194, %cst_55 [1] : vector<8x8xf32> to vector<8xf32>
    %196 = vector.shape_cast %195 : vector<8xf32> to vector<8x1xf32>
    %197 = vector.broadcast %196 : vector<8x1xf32> to vector<8x8xf32>
    %198 = arith.subf %194, %197 : vector<8x8xf32>
    %199 = math.exp %198 : vector<8x8xf32>
    %cst_56 = arith.constant dense<0.000000e+00> : vector<8xf32>
    %200 = vector.multi_reduction <add>, %199, %cst_56 [1] : vector<8x8xf32> to vector<8xf32>
    %201 = vector.shape_cast %200 : vector<8xf32> to vector<8x1xf32>
    %202 = arith.truncf %199 : vector<8x8xf32> to vector<8x8xbf16>
    %203 = vector.extract_strided_slice %129 {offsets = [0, 32], sizes = [8, 16], strides = [1, 1]} : vector<8x64xbf16> to vector<8x16xbf16>
    %cst_57 = arith.constant dense<0.000000e+00> : vector<8x16xf32>
    %204 = tpu.matmul %202, %203, %cst_57 {dimension_numbers = #tpu.dot_dimension_numbers<[1], [0], [0], [1], [0, 0, 1, 1], [], []>} : vector<8x8xbf16>, vector<8x16xbf16>, vector<8x16xf32> -> vector<8x16xf32>
    %205 = tpu.reciprocal %201 {approx = true} : vector<8x1xf32> -> vector<8x1xf32>
    %206 = vector.broadcast %205 : vector<8x1xf32> to vector<8x16xf32>
    %207 = arith.mulf %204, %206 : vector<8x16xf32>
    %208 = vector.extract_strided_slice %9 {offsets = [0, 32], sizes = [1, 16], strides = [1, 1]} : vector<1x64xf32> to vector<1x16xf32>
    %209 = vector.broadcast %208 : vector<1x16xf32> to vector<8x16xf32>
    %210 = arith.addf %207, %209 : vector<8x16xf32>
    %cst_58 = arith.constant 0.000000e+00 : f32
    %211 = vector.broadcast %cst_58 : f32 to vector<8x16xf32>
    %212 = arith.maximumf %210, %211 : vector<8x16xf32>
    %c8_59 = arith.constant 8 : index
    %c32_60 = arith.constant 32 : index
    %213 = vector.load %arg19[%c8_59, %c32_60] : memref<16x64xf32, #tpu.memory_space<vmem>>, vector<8x16xf32>
    tpu.vector_store %arg19[%c8_59, %c32_60], %212 {strides = array<i32>} : memref<16x64xf32, #tpu.memory_space<vmem>>, vector<8x16xf32>,
    %214 = vector.extract_strided_slice %6 {offsets = [8, 3], sizes = [8, 1], strides = [1, 1]} : vector<16x4xf32> to vector<8x1xf32>
    %215 = vector.extract_strided_slice %8 {offsets = [3, 8], sizes = [1, 8], strides = [1, 1]} : vector<4x16xf32> to vector<1x8xf32>
    %216 = vector.broadcast %214 : vector<8x1xf32> to vector<8x8xf32>
    %217 = vector.broadcast %215 : vector<1x8xf32> to vector<8x8xf32>
    %218 = arith.addf %216, %217 : vector<8x8xf32>
    %cst_61 = arith.constant 2.000000e-01 : f32
    %219 = vector.broadcast %cst_61 : f32 to vector<8x8xf32>
    %220 = arith.mulf %219, %218 : vector<8x8xf32>
    %221 = arith.maximumf %218, %220 : vector<8x8xf32>
    %222 = arith.addf %221, %128 : vector<8x8xf32>
    %cst_62 = arith.constant dense<0xFF800000> : vector<8xf32>
    %223 = vector.multi_reduction <maximumf>, %222, %cst_62 [1] : vector<8x8xf32> to vector<8xf32>
    %224 = vector.shape_cast %223 : vector<8xf32> to vector<8x1xf32>
    %225 = vector.broadcast %224 : vector<8x1xf32> to vector<8x8xf32>
    %226 = arith.subf %222, %225 : vector<8x8xf32>
    %227 = math.exp %226 : vector<8x8xf32>
    %cst_63 = arith.constant dense<0.000000e+00> : vector<8xf32>
    %228 = vector.multi_reduction <add>, %227, %cst_63 [1] : vector<8x8xf32> to vector<8xf32>
    %229 = vector.shape_cast %228 : vector<8xf32> to vector<8x1xf32>
    %230 = arith.truncf %227 : vector<8x8xf32> to vector<8x8xbf16>
    %231 = vector.extract_strided_slice %129 {offsets = [0, 48], sizes = [8, 16], strides = [1, 1]} : vector<8x64xbf16> to vector<8x16xbf16>
    %cst_64 = arith.constant dense<0.000000e+00> : vector<8x16xf32>
    %232 = tpu.matmul %230, %231, %cst_64 {dimension_numbers = #tpu.dot_dimension_numbers<[1], [0], [0], [1], [0, 0, 1, 1], [], []>} : vector<8x8xbf16>, vector<8x16xbf16>, vector<8x16xf32> -> vector<8x16xf32>
    %233 = tpu.reciprocal %229 {approx = true} : vector<8x1xf32> -> vector<8x1xf32>
    %234 = vector.broadcast %233 : vector<8x1xf32> to vector<8x16xf32>
    %235 = arith.mulf %232, %234 : vector<8x16xf32>
    %236 = vector.extract_strided_slice %9 {offsets = [0, 48], sizes = [1, 16], strides = [1, 1]} : vector<1x64xf32> to vector<1x16xf32>
    %237 = vector.broadcast %236 : vector<1x16xf32> to vector<8x16xf32>
    %238 = arith.addf %235, %237 : vector<8x16xf32>
    %cst_65 = arith.constant 0.000000e+00 : f32
    %239 = vector.broadcast %cst_65 : f32 to vector<8x16xf32>
    %240 = arith.maximumf %238, %239 : vector<8x16xf32>
    %c8_66 = arith.constant 8 : index
    %c48_67 = arith.constant 48 : index
    %241 = vector.load %arg19[%c8_66, %c48_67] : memref<16x64xf32, #tpu.memory_space<vmem>>, vector<8x16xf32>
    tpu.vector_store %arg19[%c8_66, %c48_67], %240 {strides = array<i32>} : memref<16x64xf32, #tpu.memory_space<vmem>>, vector<8x16xf32>,
    %c0_68 = arith.constant 0 : index
    %c0_69 = arith.constant 0 : index
    %242 = vector.load %arg19[%c0_68, %c0_69] : memref<16x64xf32, #tpu.memory_space<vmem>>, vector<16x64xf32>
    %243 = arith.truncf %242 : vector<16x64xf32> to vector<16x64xbf16>
    %c0_70 = arith.constant 0 : index
    %c0_71 = arith.constant 0 : index
    %244 = vector.load %arg8[%c0_70, %c0_71] : memref<64x64xbf16, #tpu.memory_space<vmem>>, vector<64x64xbf16>
    %cst_72 = arith.constant dense<0.000000e+00> : vector<16x64xf32>
    %245 = tpu.matmul %243, %244, %cst_72 {dimension_numbers = #tpu.dot_dimension_numbers<[1], [0], [0], [1], [0, 0, 1, 1], [], []>} : vector<16x64xbf16>, vector<64x64xbf16>, vector<16x64xf32> -> vector<16x64xf32>
    %246 = arith.truncf %245 : vector<16x64xf32> to vector<16x64xbf16>
    %c0_73 = arith.constant 0 : index
    %c0_74 = arith.constant 0 : index
    %247 = vector.load %arg10[%c0_73, %c0_74] : memref<64x4xbf16, #tpu.memory_space<vmem>>, vector<64x4xbf16>
    %cst_75 = arith.constant dense<0.000000e+00> : vector<16x4xf32>
    %248 = tpu.matmul %246, %247, %cst_75 {dimension_numbers = #tpu.dot_dimension_numbers<[1], [0], [0], [1], [0, 0, 1, 1], [], []>} : vector<16x64xbf16>, vector<64x4xbf16>, vector<16x4xf32> -> vector<16x4xf32>
    %c0_76 = arith.constant 0 : index
    %c0_77 = arith.constant 0 : index
    %249 = vector.load %arg9[%c0_76, %c0_77] : memref<4x64xbf16, #tpu.memory_space<vmem>>, vector<4x64xbf16>
    %cst_78 = arith.constant dense<0.000000e+00> : vector<4x16xf32>
    %250 = tpu.matmul %249, %246, %cst_78 {dimension_numbers = #tpu.dot_dimension_numbers<[1], [1], [0], [0], [0, 0, 1, 0], [], []>} : vector<4x64xbf16>, vector<16x64xbf16>, vector<4x16xf32> -> vector<4x16xf32>
    %c0_79 = arith.constant 0 : index
    %c0_80 = arith.constant 0 : index
    %251 = vector.load %arg11[%c0_79, %c0_80] : memref<1x64xf32, #tpu.memory_space<vmem>>, vector<1x64xf32>
    %c0_81 = arith.constant 0 : index
    %c0_82 = arith.constant 0 : index
    %c0_83 = arith.constant 0 : index
    %252 = vector.load %arg2[%c0_81, %c0_82, %c0_83] : memref<2x8x8xbf16, #tpu.memory_space<vmem>>, vector<1x8x8xbf16>
    %253 = vector.shape_cast %252 : vector<1x8x8xbf16> to vector<8x8xbf16>
    %254 = arith.extf %253 : vector<8x8xbf16> to vector<8x8xf32>
    %255 = vector.extract_strided_slice %246 {offsets = [0, 0], sizes = [8, 64], strides = [1, 1]} : vector<16x64xbf16> to vector<8x64xbf16>
    %256 = vector.extract_strided_slice %248 {offsets = [0, 0], sizes = [8, 1], strides = [1, 1]} : vector<16x4xf32> to vector<8x1xf32>
    %257 = vector.extract_strided_slice %250 {offsets = [0, 0], sizes = [1, 8], strides = [1, 1]} : vector<4x16xf32> to vector<1x8xf32>
    %258 = vector.broadcast %256 : vector<8x1xf32> to vector<8x8xf32>
    %259 = vector.broadcast %257 : vector<1x8xf32> to vector<8x8xf32>
    %260 = arith.addf %258, %259 : vector<8x8xf32>
    %cst_84 = arith.constant 2.000000e-01 : f32
    %261 = vector.broadcast %cst_84 : f32 to vector<8x8xf32>
    %262 = arith.mulf %261, %260 : vector<8x8xf32>
    %263 = arith.maximumf %260, %262 : vector<8x8xf32>
    %264 = arith.addf %263, %254 : vector<8x8xf32>
    %cst_85 = arith.constant dense<0xFF800000> : vector<8xf32>
    %265 = vector.multi_reduction <maximumf>, %264, %cst_85 [1] : vector<8x8xf32> to vector<8xf32>
    %266 = vector.shape_cast %265 : vector<8xf32> to vector<8x1xf32>
    %267 = vector.broadcast %266 : vector<8x1xf32> to vector<8x8xf32>
    %268 = arith.subf %264, %267 : vector<8x8xf32>
    %269 = math.exp %268 : vector<8x8xf32>
    %cst_86 = arith.constant dense<0.000000e+00> : vector<8xf32>
    %270 = vector.multi_reduction <add>, %269, %cst_86 [1] : vector<8x8xf32> to vector<8xf32>
    %271 = vector.shape_cast %270 : vector<8xf32> to vector<8x1xf32>
    %272 = arith.truncf %269 : vector<8x8xf32> to vector<8x8xbf16>
    %273 = vector.extract_strided_slice %255 {offsets = [0, 0], sizes = [8, 16], strides = [1, 1]} : vector<8x64xbf16> to vector<8x16xbf16>
    %cst_87 = arith.constant dense<0.000000e+00> : vector<8x16xf32>
    %274 = tpu.matmul %272, %273, %cst_87 {dimension_numbers = #tpu.dot_dimension_numbers<[1], [0], [0], [1], [0, 0, 1, 1], [], []>} : vector<8x8xbf16>, vector<8x16xbf16>, vector<8x16xf32> -> vector<8x16xf32>
    %275 = tpu.reciprocal %271 {approx = true} : vector<8x1xf32> -> vector<8x1xf32>
    %276 = vector.broadcast %275 : vector<8x1xf32> to vector<8x16xf32>
    %277 = arith.mulf %274, %276 : vector<8x16xf32>
    %278 = vector.extract_strided_slice %251 {offsets = [0, 0], sizes = [1, 16], strides = [1, 1]} : vector<1x64xf32> to vector<1x16xf32>
    %279 = vector.broadcast %278 : vector<1x16xf32> to vector<8x16xf32>
    %280 = arith.addf %277, %279 : vector<8x16xf32>
    %cst_88 = arith.constant 0.000000e+00 : f32
    %281 = vector.broadcast %cst_88 : f32 to vector<8x16xf32>
    %282 = arith.maximumf %280, %281 : vector<8x16xf32>
    %c0_89 = arith.constant 0 : index
    %c0_90 = arith.constant 0 : index
    %283 = vector.load %arg19[%c0_89, %c0_90] : memref<16x64xf32, #tpu.memory_space<vmem>>, vector<8x16xf32>
    tpu.vector_store %arg19[%c0_89, %c0_90], %282 {strides = array<i32>} : memref<16x64xf32, #tpu.memory_space<vmem>>, vector<8x16xf32>,
    %284 = vector.extract_strided_slice %248 {offsets = [0, 1], sizes = [8, 1], strides = [1, 1]} : vector<16x4xf32> to vector<8x1xf32>
    %285 = vector.extract_strided_slice %250 {offsets = [1, 0], sizes = [1, 8], strides = [1, 1]} : vector<4x16xf32> to vector<1x8xf32>
    %286 = vector.broadcast %284 : vector<8x1xf32> to vector<8x8xf32>
    %287 = vector.broadcast %285 : vector<1x8xf32> to vector<8x8xf32>
    %288 = arith.addf %286, %287 : vector<8x8xf32>
    %cst_91 = arith.constant 2.000000e-01 : f32
    %289 = vector.broadcast %cst_91 : f32 to vector<8x8xf32>
    %290 = arith.mulf %289, %288 : vector<8x8xf32>
    %291 = arith.maximumf %288, %290 : vector<8x8xf32>
    %292 = arith.addf %291, %254 : vector<8x8xf32>
    %cst_92 = arith.constant dense<0xFF800000> : vector<8xf32>
    %293 = vector.multi_reduction <maximumf>, %292, %cst_92 [1] : vector<8x8xf32> to vector<8xf32>
    %294 = vector.shape_cast %293 : vector<8xf32> to vector<8x1xf32>
    %295 = vector.broadcast %294 : vector<8x1xf32> to vector<8x8xf32>
    %296 = arith.subf %292, %295 : vector<8x8xf32>
    %297 = math.exp %296 : vector<8x8xf32>
    %cst_93 = arith.constant dense<0.000000e+00> : vector<8xf32>
    %298 = vector.multi_reduction <add>, %297, %cst_93 [1] : vector<8x8xf32> to vector<8xf32>
    %299 = vector.shape_cast %298 : vector<8xf32> to vector<8x1xf32>
    %300 = arith.truncf %297 : vector<8x8xf32> to vector<8x8xbf16>
    %301 = vector.extract_strided_slice %255 {offsets = [0, 16], sizes = [8, 16], strides = [1, 1]} : vector<8x64xbf16> to vector<8x16xbf16>
    %cst_94 = arith.constant dense<0.000000e+00> : vector<8x16xf32>
    %302 = tpu.matmul %300, %301, %cst_94 {dimension_numbers = #tpu.dot_dimension_numbers<[1], [0], [0], [1], [0, 0, 1, 1], [], []>} : vector<8x8xbf16>, vector<8x16xbf16>, vector<8x16xf32> -> vector<8x16xf32>
    %303 = tpu.reciprocal %299 {approx = true} : vector<8x1xf32> -> vector<8x1xf32>
    %304 = vector.broadcast %303 : vector<8x1xf32> to vector<8x16xf32>
    %305 = arith.mulf %302, %304 : vector<8x16xf32>
    %306 = vector.extract_strided_slice %251 {offsets = [0, 16], sizes = [1, 16], strides = [1, 1]} : vector<1x64xf32> to vector<1x16xf32>
    %307 = vector.broadcast %306 : vector<1x16xf32> to vector<8x16xf32>
    %308 = arith.addf %305, %307 : vector<8x16xf32>
    %cst_95 = arith.constant 0.000000e+00 : f32
    %309 = vector.broadcast %cst_95 : f32 to vector<8x16xf32>
    %310 = arith.maximumf %308, %309 : vector<8x16xf32>
    %c0_96 = arith.constant 0 : index
    %c16_97 = arith.constant 16 : index
    %311 = vector.load %arg19[%c0_96, %c16_97] : memref<16x64xf32, #tpu.memory_space<vmem>>, vector<8x16xf32>
    tpu.vector_store %arg19[%c0_96, %c16_97], %310 {strides = array<i32>} : memref<16x64xf32, #tpu.memory_space<vmem>>, vector<8x16xf32>,
    %312 = vector.extract_strided_slice %248 {offsets = [0, 2], sizes = [8, 1], strides = [1, 1]} : vector<16x4xf32> to vector<8x1xf32>
    %313 = vector.extract_strided_slice %250 {offsets = [2, 0], sizes = [1, 8], strides = [1, 1]} : vector<4x16xf32> to vector<1x8xf32>
    %314 = vector.broadcast %312 : vector<8x1xf32> to vector<8x8xf32>
    %315 = vector.broadcast %313 : vector<1x8xf32> to vector<8x8xf32>
    %316 = arith.addf %314, %315 : vector<8x8xf32>
    %cst_98 = arith.constant 2.000000e-01 : f32
    %317 = vector.broadcast %cst_98 : f32 to vector<8x8xf32>
    %318 = arith.mulf %317, %316 : vector<8x8xf32>
    %319 = arith.maximumf %316, %318 : vector<8x8xf32>
    %320 = arith.addf %319, %254 : vector<8x8xf32>
    %cst_99 = arith.constant dense<0xFF800000> : vector<8xf32>
    %321 = vector.multi_reduction <maximumf>, %320, %cst_99 [1] : vector<8x8xf32> to vector<8xf32>
    %322 = vector.shape_cast %321 : vector<8xf32> to vector<8x1xf32>
    %323 = vector.broadcast %322 : vector<8x1xf32> to vector<8x8xf32>
    %324 = arith.subf %320, %323 : vector<8x8xf32>
    %325 = math.exp %324 : vector<8x8xf32>
    %cst_100 = arith.constant dense<0.000000e+00> : vector<8xf32>
    %326 = vector.multi_reduction <add>, %325, %cst_100 [1] : vector<8x8xf32> to vector<8xf32>
    %327 = vector.shape_cast %326 : vector<8xf32> to vector<8x1xf32>
    %328 = arith.truncf %325 : vector<8x8xf32> to vector<8x8xbf16>
    %329 = vector.extract_strided_slice %255 {offsets = [0, 32], sizes = [8, 16], strides = [1, 1]} : vector<8x64xbf16> to vector<8x16xbf16>
    %cst_101 = arith.constant dense<0.000000e+00> : vector<8x16xf32>
    %330 = tpu.matmul %328, %329, %cst_101 {dimension_numbers = #tpu.dot_dimension_numbers<[1], [0], [0], [1], [0, 0, 1, 1], [], []>} : vector<8x8xbf16>, vector<8x16xbf16>, vector<8x16xf32> -> vector<8x16xf32>
    %331 = tpu.reciprocal %327 {approx = true} : vector<8x1xf32> -> vector<8x1xf32>
    %332 = vector.broadcast %331 : vector<8x1xf32> to vector<8x16xf32>
    %333 = arith.mulf %330, %332 : vector<8x16xf32>
    %334 = vector.extract_strided_slice %251 {offsets = [0, 32], sizes = [1, 16], strides = [1, 1]} : vector<1x64xf32> to vector<1x16xf32>
    %335 = vector.broadcast %334 : vector<1x16xf32> to vector<8x16xf32>
    %336 = arith.addf %333, %335 : vector<8x16xf32>
    %cst_102 = arith.constant 0.000000e+00 : f32
    %337 = vector.broadcast %cst_102 : f32 to vector<8x16xf32>
    %338 = arith.maximumf %336, %337 : vector<8x16xf32>
    %c0_103 = arith.constant 0 : index
    %c32_104 = arith.constant 32 : index
    %339 = vector.load %arg19[%c0_103, %c32_104] : memref<16x64xf32, #tpu.memory_space<vmem>>, vector<8x16xf32>
    tpu.vector_store %arg19[%c0_103, %c32_104], %338 {strides = array<i32>} : memref<16x64xf32, #tpu.memory_space<vmem>>, vector<8x16xf32>,
    %340 = vector.extract_strided_slice %248 {offsets = [0, 3], sizes = [8, 1], strides = [1, 1]} : vector<16x4xf32> to vector<8x1xf32>
    %341 = vector.extract_strided_slice %250 {offsets = [3, 0], sizes = [1, 8], strides = [1, 1]} : vector<4x16xf32> to vector<1x8xf32>
    %342 = vector.broadcast %340 : vector<8x1xf32> to vector<8x8xf32>
    %343 = vector.broadcast %341 : vector<1x8xf32> to vector<8x8xf32>
    %344 = arith.addf %342, %343 : vector<8x8xf32>
    %cst_105 = arith.constant 2.000000e-01 : f32
    %345 = vector.broadcast %cst_105 : f32 to vector<8x8xf32>
    %346 = arith.mulf %345, %344 : vector<8x8xf32>
    %347 = arith.maximumf %344, %346 : vector<8x8xf32>
    %348 = arith.addf %347, %254 : vector<8x8xf32>
    %cst_106 = arith.constant dense<0xFF800000> : vector<8xf32>
    %349 = vector.multi_reduction <maximumf>, %348, %cst_106 [1] : vector<8x8xf32> to vector<8xf32>
    %350 = vector.shape_cast %349 : vector<8xf32> to vector<8x1xf32>
    %351 = vector.broadcast %350 : vector<8x1xf32> to vector<8x8xf32>
    %352 = arith.subf %348, %351 : vector<8x8xf32>
    %353 = math.exp %352 : vector<8x8xf32>
    %cst_107 = arith.constant dense<0.000000e+00> : vector<8xf32>
    %354 = vector.multi_reduction <add>, %353, %cst_107 [1] : vector<8x8xf32> to vector<8xf32>
    %355 = vector.shape_cast %354 : vector<8xf32> to vector<8x1xf32>
    %356 = arith.truncf %353 : vector<8x8xf32> to vector<8x8xbf16>
    %357 = vector.extract_strided_slice %255 {offsets = [0, 48], sizes = [8, 16], strides = [1, 1]} : vector<8x64xbf16> to vector<8x16xbf16>
    %cst_108 = arith.constant dense<0.000000e+00> : vector<8x16xf32>
    %358 = tpu.matmul %356, %357, %cst_108 {dimension_numbers = #tpu.dot_dimension_numbers<[1], [0], [0], [1], [0, 0, 1, 1], [], []>} : vector<8x8xbf16>, vector<8x16xbf16>, vector<8x16xf32> -> vector<8x16xf32>
    %359 = tpu.reciprocal %355 {approx = true} : vector<8x1xf32> -> vector<8x1xf32>
    %360 = vector.broadcast %359 : vector<8x1xf32> to vector<8x16xf32>
    %361 = arith.mulf %358, %360 : vector<8x16xf32>
    %362 = vector.extract_strided_slice %251 {offsets = [0, 48], sizes = [1, 16], strides = [1, 1]} : vector<1x64xf32> to vector<1x16xf32>
    %363 = vector.broadcast %362 : vector<1x16xf32> to vector<8x16xf32>
    %364 = arith.addf %361, %363 : vector<8x16xf32>
    %cst_109 = arith.constant 0.000000e+00 : f32
    %365 = vector.broadcast %cst_109 : f32 to vector<8x16xf32>
    %366 = arith.maximumf %364, %365 : vector<8x16xf32>
    %c0_110 = arith.constant 0 : index
    %c48_111 = arith.constant 48 : index
    %367 = vector.load %arg19[%c0_110, %c48_111] : memref<16x64xf32, #tpu.memory_space<vmem>>, vector<8x16xf32>
    tpu.vector_store %arg19[%c0_110, %c48_111], %366 {strides = array<i32>} : memref<16x64xf32, #tpu.memory_space<vmem>>, vector<8x16xf32>,
    %c1_112 = arith.constant 1 : index
    %c0_113 = arith.constant 0 : index
    %c0_114 = arith.constant 0 : index
    %368 = vector.load %arg2[%c1_112, %c0_113, %c0_114] : memref<2x8x8xbf16, #tpu.memory_space<vmem>>, vector<1x8x8xbf16>
    %369 = vector.shape_cast %368 : vector<1x8x8xbf16> to vector<8x8xbf16>
    %370 = arith.extf %369 : vector<8x8xbf16> to vector<8x8xf32>
    %371 = vector.extract_strided_slice %246 {offsets = [8, 0], sizes = [8, 64], strides = [1, 1]} : vector<16x64xbf16> to vector<8x64xbf16>
    %372 = vector.extract_strided_slice %248 {offsets = [8, 0], sizes = [8, 1], strides = [1, 1]} : vector<16x4xf32> to vector<8x1xf32>
    %373 = vector.extract_strided_slice %250 {offsets = [0, 8], sizes = [1, 8], strides = [1, 1]} : vector<4x16xf32> to vector<1x8xf32>
    %374 = vector.broadcast %372 : vector<8x1xf32> to vector<8x8xf32>
    %375 = vector.broadcast %373 : vector<1x8xf32> to vector<8x8xf32>
    %376 = arith.addf %374, %375 : vector<8x8xf32>
    %cst_115 = arith.constant 2.000000e-01 : f32
    %377 = vector.broadcast %cst_115 : f32 to vector<8x8xf32>
    %378 = arith.mulf %377, %376 : vector<8x8xf32>
    %379 = arith.maximumf %376, %378 : vector<8x8xf32>
    %380 = arith.addf %379, %370 : vector<8x8xf32>
    %cst_116 = arith.constant dense<0xFF800000> : vector<8xf32>
    %381 = vector.multi_reduction <maximumf>, %380, %cst_116 [1] : vector<8x8xf32> to vector<8xf32>
    %382 = vector.shape_cast %381 : vector<8xf32> to vector<8x1xf32>
    %383 = vector.broadcast %382 : vector<8x1xf32> to vector<8x8xf32>
    %384 = arith.subf %380, %383 : vector<8x8xf32>
    %385 = math.exp %384 : vector<8x8xf32>
    %cst_117 = arith.constant dense<0.000000e+00> : vector<8xf32>
    %386 = vector.multi_reduction <add>, %385, %cst_117 [1] : vector<8x8xf32> to vector<8xf32>
    %387 = vector.shape_cast %386 : vector<8xf32> to vector<8x1xf32>
    %388 = arith.truncf %385 : vector<8x8xf32> to vector<8x8xbf16>
    %389 = vector.extract_strided_slice %371 {offsets = [0, 0], sizes = [8, 16], strides = [1, 1]} : vector<8x64xbf16> to vector<8x16xbf16>
    %cst_118 = arith.constant dense<0.000000e+00> : vector<8x16xf32>
    %390 = tpu.matmul %388, %389, %cst_118 {dimension_numbers = #tpu.dot_dimension_numbers<[1], [0], [0], [1], [0, 0, 1, 1], [], []>} : vector<8x8xbf16>, vector<8x16xbf16>, vector<8x16xf32> -> vector<8x16xf32>
    %391 = tpu.reciprocal %387 {approx = true} : vector<8x1xf32> -> vector<8x1xf32>
    %392 = vector.broadcast %391 : vector<8x1xf32> to vector<8x16xf32>
    %393 = arith.mulf %390, %392 : vector<8x16xf32>
    %394 = vector.extract_strided_slice %251 {offsets = [0, 0], sizes = [1, 16], strides = [1, 1]} : vector<1x64xf32> to vector<1x16xf32>
    %395 = vector.broadcast %394 : vector<1x16xf32> to vector<8x16xf32>
    %396 = arith.addf %393, %395 : vector<8x16xf32>
    %cst_119 = arith.constant 0.000000e+00 : f32
    %397 = vector.broadcast %cst_119 : f32 to vector<8x16xf32>
    %398 = arith.maximumf %396, %397 : vector<8x16xf32>
    %c8_120 = arith.constant 8 : index
    %c0_121 = arith.constant 0 : index
    %399 = vector.load %arg19[%c8_120, %c0_121] : memref<16x64xf32, #tpu.memory_space<vmem>>, vector<8x16xf32>
    tpu.vector_store %arg19[%c8_120, %c0_121], %398 {strides = array<i32>} : memref<16x64xf32, #tpu.memory_space<vmem>>, vector<8x16xf32>,
    %400 = vector.extract_strided_slice %248 {offsets = [8, 1], sizes = [8, 1], strides = [1, 1]} : vector<16x4xf32> to vector<8x1xf32>
    %401 = vector.extract_strided_slice %250 {offsets = [1, 8], sizes = [1, 8], strides = [1, 1]} : vector<4x16xf32> to vector<1x8xf32>
    %402 = vector.broadcast %400 : vector<8x1xf32> to vector<8x8xf32>
    %403 = vector.broadcast %401 : vector<1x8xf32> to vector<8x8xf32>
    %404 = arith.addf %402, %403 : vector<8x8xf32>
    %cst_122 = arith.constant 2.000000e-01 : f32
    %405 = vector.broadcast %cst_122 : f32 to vector<8x8xf32>
    %406 = arith.mulf %405, %404 : vector<8x8xf32>
    %407 = arith.maximumf %404, %406 : vector<8x8xf32>
    %408 = arith.addf %407, %370 : vector<8x8xf32>
    %cst_123 = arith.constant dense<0xFF800000> : vector<8xf32>
    %409 = vector.multi_reduction <maximumf>, %408, %cst_123 [1] : vector<8x8xf32> to vector<8xf32>
    %410 = vector.shape_cast %409 : vector<8xf32> to vector<8x1xf32>
    %411 = vector.broadcast %410 : vector<8x1xf32> to vector<8x8xf32>
    %412 = arith.subf %408, %411 : vector<8x8xf32>
    %413 = math.exp %412 : vector<8x8xf32>
    %cst_124 = arith.constant dense<0.000000e+00> : vector<8xf32>
    %414 = vector.multi_reduction <add>, %413, %cst_124 [1] : vector<8x8xf32> to vector<8xf32>
    %415 = vector.shape_cast %414 : vector<8xf32> to vector<8x1xf32>
    %416 = arith.truncf %413 : vector<8x8xf32> to vector<8x8xbf16>
    %417 = vector.extract_strided_slice %371 {offsets = [0, 16], sizes = [8, 16], strides = [1, 1]} : vector<8x64xbf16> to vector<8x16xbf16>
    %cst_125 = arith.constant dense<0.000000e+00> : vector<8x16xf32>
    %418 = tpu.matmul %416, %417, %cst_125 {dimension_numbers = #tpu.dot_dimension_numbers<[1], [0], [0], [1], [0, 0, 1, 1], [], []>} : vector<8x8xbf16>, vector<8x16xbf16>, vector<8x16xf32> -> vector<8x16xf32>
    %419 = tpu.reciprocal %415 {approx = true} : vector<8x1xf32> -> vector<8x1xf32>
    %420 = vector.broadcast %419 : vector<8x1xf32> to vector<8x16xf32>
    %421 = arith.mulf %418, %420 : vector<8x16xf32>
    %422 = vector.extract_strided_slice %251 {offsets = [0, 16], sizes = [1, 16], strides = [1, 1]} : vector<1x64xf32> to vector<1x16xf32>
    %423 = vector.broadcast %422 : vector<1x16xf32> to vector<8x16xf32>
    %424 = arith.addf %421, %423 : vector<8x16xf32>
    %cst_126 = arith.constant 0.000000e+00 : f32
    %425 = vector.broadcast %cst_126 : f32 to vector<8x16xf32>
    %426 = arith.maximumf %424, %425 : vector<8x16xf32>
    %c8_127 = arith.constant 8 : index
    %c16_128 = arith.constant 16 : index
    %427 = vector.load %arg19[%c8_127, %c16_128] : memref<16x64xf32, #tpu.memory_space<vmem>>, vector<8x16xf32>
    tpu.vector_store %arg19[%c8_127, %c16_128], %426 {strides = array<i32>} : memref<16x64xf32, #tpu.memory_space<vmem>>, vector<8x16xf32>,
    %428 = vector.extract_strided_slice %248 {offsets = [8, 2], sizes = [8, 1], strides = [1, 1]} : vector<16x4xf32> to vector<8x1xf32>
    %429 = vector.extract_strided_slice %250 {offsets = [2, 8], sizes = [1, 8], strides = [1, 1]} : vector<4x16xf32> to vector<1x8xf32>
    %430 = vector.broadcast %428 : vector<8x1xf32> to vector<8x8xf32>
    %431 = vector.broadcast %429 : vector<1x8xf32> to vector<8x8xf32>
    %432 = arith.addf %430, %431 : vector<8x8xf32>
    %cst_129 = arith.constant 2.000000e-01 : f32
    %433 = vector.broadcast %cst_129 : f32 to vector<8x8xf32>
    %434 = arith.mulf %433, %432 : vector<8x8xf32>
    %435 = arith.maximumf %432, %434 : vector<8x8xf32>
    %436 = arith.addf %435, %370 : vector<8x8xf32>
    %cst_130 = arith.constant dense<0xFF800000> : vector<8xf32>
    %437 = vector.multi_reduction <maximumf>, %436, %cst_130 [1] : vector<8x8xf32> to vector<8xf32>
    %438 = vector.shape_cast %437 : vector<8xf32> to vector<8x1xf32>
    %439 = vector.broadcast %438 : vector<8x1xf32> to vector<8x8xf32>
    %440 = arith.subf %436, %439 : vector<8x8xf32>
    %441 = math.exp %440 : vector<8x8xf32>
    %cst_131 = arith.constant dense<0.000000e+00> : vector<8xf32>
    %442 = vector.multi_reduction <add>, %441, %cst_131 [1] : vector<8x8xf32> to vector<8xf32>
    %443 = vector.shape_cast %442 : vector<8xf32> to vector<8x1xf32>
    %444 = arith.truncf %441 : vector<8x8xf32> to vector<8x8xbf16>
    %445 = vector.extract_strided_slice %371 {offsets = [0, 32], sizes = [8, 16], strides = [1, 1]} : vector<8x64xbf16> to vector<8x16xbf16>
    %cst_132 = arith.constant dense<0.000000e+00> : vector<8x16xf32>
    %446 = tpu.matmul %444, %445, %cst_132 {dimension_numbers = #tpu.dot_dimension_numbers<[1], [0], [0], [1], [0, 0, 1, 1], [], []>} : vector<8x8xbf16>, vector<8x16xbf16>, vector<8x16xf32> -> vector<8x16xf32>
    %447 = tpu.reciprocal %443 {approx = true} : vector<8x1xf32> -> vector<8x1xf32>
    %448 = vector.broadcast %447 : vector<8x1xf32> to vector<8x16xf32>
    %449 = arith.mulf %446, %448 : vector<8x16xf32>
    %450 = vector.extract_strided_slice %251 {offsets = [0, 32], sizes = [1, 16], strides = [1, 1]} : vector<1x64xf32> to vector<1x16xf32>
    %451 = vector.broadcast %450 : vector<1x16xf32> to vector<8x16xf32>
    %452 = arith.addf %449, %451 : vector<8x16xf32>
    %cst_133 = arith.constant 0.000000e+00 : f32
    %453 = vector.broadcast %cst_133 : f32 to vector<8x16xf32>
    %454 = arith.maximumf %452, %453 : vector<8x16xf32>
    %c8_134 = arith.constant 8 : index
    %c32_135 = arith.constant 32 : index
    %455 = vector.load %arg19[%c8_134, %c32_135] : memref<16x64xf32, #tpu.memory_space<vmem>>, vector<8x16xf32>
    tpu.vector_store %arg19[%c8_134, %c32_135], %454 {strides = array<i32>} : memref<16x64xf32, #tpu.memory_space<vmem>>, vector<8x16xf32>,
    %456 = vector.extract_strided_slice %248 {offsets = [8, 3], sizes = [8, 1], strides = [1, 1]} : vector<16x4xf32> to vector<8x1xf32>
    %457 = vector.extract_strided_slice %250 {offsets = [3, 8], sizes = [1, 8], strides = [1, 1]} : vector<4x16xf32> to vector<1x8xf32>
    %458 = vector.broadcast %456 : vector<8x1xf32> to vector<8x8xf32>
    %459 = vector.broadcast %457 : vector<1x8xf32> to vector<8x8xf32>
    %460 = arith.addf %458, %459 : vector<8x8xf32>
    %cst_136 = arith.constant 2.000000e-01 : f32
    %461 = vector.broadcast %cst_136 : f32 to vector<8x8xf32>
    %462 = arith.mulf %461, %460 : vector<8x8xf32>
    %463 = arith.maximumf %460, %462 : vector<8x8xf32>
    %464 = arith.addf %463, %370 : vector<8x8xf32>
    %cst_137 = arith.constant dense<0xFF800000> : vector<8xf32>
    %465 = vector.multi_reduction <maximumf>, %464, %cst_137 [1] : vector<8x8xf32> to vector<8xf32>
    %466 = vector.shape_cast %465 : vector<8xf32> to vector<8x1xf32>
    %467 = vector.broadcast %466 : vector<8x1xf32> to vector<8x8xf32>
    %468 = arith.subf %464, %467 : vector<8x8xf32>
    %469 = math.exp %468 : vector<8x8xf32>
    %cst_138 = arith.constant dense<0.000000e+00> : vector<8xf32>
    %470 = vector.multi_reduction <add>, %469, %cst_138 [1] : vector<8x8xf32> to vector<8xf32>
    %471 = vector.shape_cast %470 : vector<8xf32> to vector<8x1xf32>
    %472 = arith.truncf %469 : vector<8x8xf32> to vector<8x8xbf16>
    %473 = vector.extract_strided_slice %371 {offsets = [0, 48], sizes = [8, 16], strides = [1, 1]} : vector<8x64xbf16> to vector<8x16xbf16>
    %cst_139 = arith.constant dense<0.000000e+00> : vector<8x16xf32>
    %474 = tpu.matmul %472, %473, %cst_139 {dimension_numbers = #tpu.dot_dimension_numbers<[1], [0], [0], [1], [0, 0, 1, 1], [], []>} : vector<8x8xbf16>, vector<8x16xbf16>, vector<8x16xf32> -> vector<8x16xf32>
    %475 = tpu.reciprocal %471 {approx = true} : vector<8x1xf32> -> vector<8x1xf32>
    %476 = vector.broadcast %475 : vector<8x1xf32> to vector<8x16xf32>
    %477 = arith.mulf %474, %476 : vector<8x16xf32>
    %478 = vector.extract_strided_slice %251 {offsets = [0, 48], sizes = [1, 16], strides = [1, 1]} : vector<1x64xf32> to vector<1x16xf32>
    %479 = vector.broadcast %478 : vector<1x16xf32> to vector<8x16xf32>
    %480 = arith.addf %477, %479 : vector<8x16xf32>
    %cst_140 = arith.constant 0.000000e+00 : f32
    %481 = vector.broadcast %cst_140 : f32 to vector<8x16xf32>
    %482 = arith.maximumf %480, %481 : vector<8x16xf32>
    %c8_141 = arith.constant 8 : index
    %c48_142 = arith.constant 48 : index
    %483 = vector.load %arg19[%c8_141, %c48_142] : memref<16x64xf32, #tpu.memory_space<vmem>>, vector<8x16xf32>
    tpu.vector_store %arg19[%c8_141, %c48_142], %482 {strides = array<i32>} : memref<16x64xf32, #tpu.memory_space<vmem>>, vector<8x16xf32>,
    %c0_143 = arith.constant 0 : index
    %c0_144 = arith.constant 0 : index
    %484 = vector.load %arg19[%c0_143, %c0_144] : memref<16x64xf32, #tpu.memory_space<vmem>>, vector<16x64xf32>
    %485 = arith.truncf %484 : vector<16x64xf32> to vector<16x64xbf16>
    %c0_145 = arith.constant 0 : index
    %c0_146 = arith.constant 0 : index
    %486 = vector.load %arg12[%c0_145, %c0_146] : memref<64x64xbf16, #tpu.memory_space<vmem>>, vector<64x64xbf16>
    %cst_147 = arith.constant dense<0.000000e+00> : vector<16x64xf32>
    %487 = tpu.matmul %485, %486, %cst_147 {dimension_numbers = #tpu.dot_dimension_numbers<[1], [0], [0], [1], [0, 0, 1, 1], [], []>} : vector<16x64xbf16>, vector<64x64xbf16>, vector<16x64xf32> -> vector<16x64xf32>
    %488 = arith.truncf %487 : vector<16x64xf32> to vector<16x64xbf16>
    %c0_148 = arith.constant 0 : index
    %c0_149 = arith.constant 0 : index
    %489 = vector.load %arg14[%c0_148, %c0_149] : memref<64x4xbf16, #tpu.memory_space<vmem>>, vector<64x4xbf16>
    %cst_150 = arith.constant dense<0.000000e+00> : vector<16x4xf32>
    %490 = tpu.matmul %488, %489, %cst_150 {dimension_numbers = #tpu.dot_dimension_numbers<[1], [0], [0], [1], [0, 0, 1, 1], [], []>} : vector<16x64xbf16>, vector<64x4xbf16>, vector<16x4xf32> -> vector<16x4xf32>
    %c0_151 = arith.constant 0 : index
    %c0_152 = arith.constant 0 : index
    %491 = vector.load %arg13[%c0_151, %c0_152] : memref<4x64xbf16, #tpu.memory_space<vmem>>, vector<4x64xbf16>
    %cst_153 = arith.constant dense<0.000000e+00> : vector<4x16xf32>
    %492 = tpu.matmul %491, %488, %cst_153 {dimension_numbers = #tpu.dot_dimension_numbers<[1], [1], [0], [0], [0, 0, 1, 0], [], []>} : vector<4x64xbf16>, vector<16x64xbf16>, vector<4x16xf32> -> vector<4x16xf32>
    %c0_154 = arith.constant 0 : index
    %c0_155 = arith.constant 0 : index
    %493 = vector.load %arg15[%c0_154, %c0_155] : memref<1x64xf32, #tpu.memory_space<vmem>>, vector<1x64xf32>
    %c0_156 = arith.constant 0 : index
    %c0_157 = arith.constant 0 : index
    %c0_158 = arith.constant 0 : index
    %494 = vector.load %arg2[%c0_156, %c0_157, %c0_158] : memref<2x8x8xbf16, #tpu.memory_space<vmem>>, vector<1x8x8xbf16>
    %495 = vector.shape_cast %494 : vector<1x8x8xbf16> to vector<8x8xbf16>
    %496 = arith.extf %495 : vector<8x8xbf16> to vector<8x8xf32>
    %497 = vector.extract_strided_slice %488 {offsets = [0, 0], sizes = [8, 64], strides = [1, 1]} : vector<16x64xbf16> to vector<8x64xbf16>
    %498 = vector.extract_strided_slice %490 {offsets = [0, 0], sizes = [8, 1], strides = [1, 1]} : vector<16x4xf32> to vector<8x1xf32>
    %499 = vector.extract_strided_slice %492 {offsets = [0, 0], sizes = [1, 8], strides = [1, 1]} : vector<4x16xf32> to vector<1x8xf32>
    %500 = vector.broadcast %498 : vector<8x1xf32> to vector<8x8xf32>
    %501 = vector.broadcast %499 : vector<1x8xf32> to vector<8x8xf32>
    %502 = arith.addf %500, %501 : vector<8x8xf32>
    %cst_159 = arith.constant 2.000000e-01 : f32
    %503 = vector.broadcast %cst_159 : f32 to vector<8x8xf32>
    %504 = arith.mulf %503, %502 : vector<8x8xf32>
    %505 = arith.maximumf %502, %504 : vector<8x8xf32>
    %506 = arith.addf %505, %496 : vector<8x8xf32>
    %cst_160 = arith.constant dense<0xFF800000> : vector<8xf32>
    %507 = vector.multi_reduction <maximumf>, %506, %cst_160 [1] : vector<8x8xf32> to vector<8xf32>
    %508 = vector.shape_cast %507 : vector<8xf32> to vector<8x1xf32>
    %509 = vector.broadcast %508 : vector<8x1xf32> to vector<8x8xf32>
    %510 = arith.subf %506, %509 : vector<8x8xf32>
    %511 = math.exp %510 : vector<8x8xf32>
    %cst_161 = arith.constant dense<0.000000e+00> : vector<8xf32>
    %512 = vector.multi_reduction <add>, %511, %cst_161 [1] : vector<8x8xf32> to vector<8xf32>
    %513 = vector.shape_cast %512 : vector<8xf32> to vector<8x1xf32>
    %514 = arith.truncf %511 : vector<8x8xf32> to vector<8x8xbf16>
    %515 = vector.extract_strided_slice %497 {offsets = [0, 0], sizes = [8, 16], strides = [1, 1]} : vector<8x64xbf16> to vector<8x16xbf16>
    %cst_162 = arith.constant dense<0.000000e+00> : vector<8x16xf32>
    %516 = tpu.matmul %514, %515, %cst_162 {dimension_numbers = #tpu.dot_dimension_numbers<[1], [0], [0], [1], [0, 0, 1, 1], [], []>} : vector<8x8xbf16>, vector<8x16xbf16>, vector<8x16xf32> -> vector<8x16xf32>
    %517 = tpu.reciprocal %513 {approx = true} : vector<8x1xf32> -> vector<8x1xf32>
    %518 = vector.broadcast %517 : vector<8x1xf32> to vector<8x16xf32>
    %519 = arith.mulf %516, %518 : vector<8x16xf32>
    %520 = vector.extract_strided_slice %493 {offsets = [0, 0], sizes = [1, 16], strides = [1, 1]} : vector<1x64xf32> to vector<1x16xf32>
    %521 = vector.broadcast %520 : vector<1x16xf32> to vector<8x16xf32>
    %522 = arith.addf %519, %521 : vector<8x16xf32>
    %cst_163 = arith.constant 0.000000e+00 : f32
    %523 = vector.broadcast %cst_163 : f32 to vector<8x16xf32>
    %524 = arith.maximumf %522, %523 : vector<8x16xf32>
    %c0_164 = arith.constant 0 : index
    %c0_165 = arith.constant 0 : index
    %525 = vector.load %arg19[%c0_164, %c0_165] : memref<16x64xf32, #tpu.memory_space<vmem>>, vector<8x16xf32>
    tpu.vector_store %arg19[%c0_164, %c0_165], %524 {strides = array<i32>} : memref<16x64xf32, #tpu.memory_space<vmem>>, vector<8x16xf32>,
    %526 = vector.extract_strided_slice %490 {offsets = [0, 1], sizes = [8, 1], strides = [1, 1]} : vector<16x4xf32> to vector<8x1xf32>
    %527 = vector.extract_strided_slice %492 {offsets = [1, 0], sizes = [1, 8], strides = [1, 1]} : vector<4x16xf32> to vector<1x8xf32>
    %528 = vector.broadcast %526 : vector<8x1xf32> to vector<8x8xf32>
    %529 = vector.broadcast %527 : vector<1x8xf32> to vector<8x8xf32>
    %530 = arith.addf %528, %529 : vector<8x8xf32>
    %cst_166 = arith.constant 2.000000e-01 : f32
    %531 = vector.broadcast %cst_166 : f32 to vector<8x8xf32>
    %532 = arith.mulf %531, %530 : vector<8x8xf32>
    %533 = arith.maximumf %530, %532 : vector<8x8xf32>
    %534 = arith.addf %533, %496 : vector<8x8xf32>
    %cst_167 = arith.constant dense<0xFF800000> : vector<8xf32>
    %535 = vector.multi_reduction <maximumf>, %534, %cst_167 [1] : vector<8x8xf32> to vector<8xf32>
    %536 = vector.shape_cast %535 : vector<8xf32> to vector<8x1xf32>
    %537 = vector.broadcast %536 : vector<8x1xf32> to vector<8x8xf32>
    %538 = arith.subf %534, %537 : vector<8x8xf32>
    %539 = math.exp %538 : vector<8x8xf32>
    %cst_168 = arith.constant dense<0.000000e+00> : vector<8xf32>
    %540 = vector.multi_reduction <add>, %539, %cst_168 [1] : vector<8x8xf32> to vector<8xf32>
    %541 = vector.shape_cast %540 : vector<8xf32> to vector<8x1xf32>
    %542 = arith.truncf %539 : vector<8x8xf32> to vector<8x8xbf16>
    %543 = vector.extract_strided_slice %497 {offsets = [0, 16], sizes = [8, 16], strides = [1, 1]} : vector<8x64xbf16> to vector<8x16xbf16>
    %cst_169 = arith.constant dense<0.000000e+00> : vector<8x16xf32>
    %544 = tpu.matmul %542, %543, %cst_169 {dimension_numbers = #tpu.dot_dimension_numbers<[1], [0], [0], [1], [0, 0, 1, 1], [], []>} : vector<8x8xbf16>, vector<8x16xbf16>, vector<8x16xf32> -> vector<8x16xf32>
    %545 = tpu.reciprocal %541 {approx = true} : vector<8x1xf32> -> vector<8x1xf32>
    %546 = vector.broadcast %545 : vector<8x1xf32> to vector<8x16xf32>
    %547 = arith.mulf %544, %546 : vector<8x16xf32>
    %548 = vector.extract_strided_slice %493 {offsets = [0, 16], sizes = [1, 16], strides = [1, 1]} : vector<1x64xf32> to vector<1x16xf32>
    %549 = vector.broadcast %548 : vector<1x16xf32> to vector<8x16xf32>
    %550 = arith.addf %547, %549 : vector<8x16xf32>
    %cst_170 = arith.constant 0.000000e+00 : f32
    %551 = vector.broadcast %cst_170 : f32 to vector<8x16xf32>
    %552 = arith.maximumf %550, %551 : vector<8x16xf32>
    %c0_171 = arith.constant 0 : index
    %c16_172 = arith.constant 16 : index
    %553 = vector.load %arg19[%c0_171, %c16_172] : memref<16x64xf32, #tpu.memory_space<vmem>>, vector<8x16xf32>
    tpu.vector_store %arg19[%c0_171, %c16_172], %552 {strides = array<i32>} : memref<16x64xf32, #tpu.memory_space<vmem>>, vector<8x16xf32>,
    %554 = vector.extract_strided_slice %490 {offsets = [0, 2], sizes = [8, 1], strides = [1, 1]} : vector<16x4xf32> to vector<8x1xf32>
    %555 = vector.extract_strided_slice %492 {offsets = [2, 0], sizes = [1, 8], strides = [1, 1]} : vector<4x16xf32> to vector<1x8xf32>
    %556 = vector.broadcast %554 : vector<8x1xf32> to vector<8x8xf32>
    %557 = vector.broadcast %555 : vector<1x8xf32> to vector<8x8xf32>
    %558 = arith.addf %556, %557 : vector<8x8xf32>
    %cst_173 = arith.constant 2.000000e-01 : f32
    %559 = vector.broadcast %cst_173 : f32 to vector<8x8xf32>
    %560 = arith.mulf %559, %558 : vector<8x8xf32>
    %561 = arith.maximumf %558, %560 : vector<8x8xf32>
    %562 = arith.addf %561, %496 : vector<8x8xf32>
    %cst_174 = arith.constant dense<0xFF800000> : vector<8xf32>
    %563 = vector.multi_reduction <maximumf>, %562, %cst_174 [1] : vector<8x8xf32> to vector<8xf32>
    %564 = vector.shape_cast %563 : vector<8xf32> to vector<8x1xf32>
    %565 = vector.broadcast %564 : vector<8x1xf32> to vector<8x8xf32>
    %566 = arith.subf %562, %565 : vector<8x8xf32>
    %567 = math.exp %566 : vector<8x8xf32>
    %cst_175 = arith.constant dense<0.000000e+00> : vector<8xf32>
    %568 = vector.multi_reduction <add>, %567, %cst_175 [1] : vector<8x8xf32> to vector<8xf32>
    %569 = vector.shape_cast %568 : vector<8xf32> to vector<8x1xf32>
    %570 = arith.truncf %567 : vector<8x8xf32> to vector<8x8xbf16>
    %571 = vector.extract_strided_slice %497 {offsets = [0, 32], sizes = [8, 16], strides = [1, 1]} : vector<8x64xbf16> to vector<8x16xbf16>
    %cst_176 = arith.constant dense<0.000000e+00> : vector<8x16xf32>
    %572 = tpu.matmul %570, %571, %cst_176 {dimension_numbers = #tpu.dot_dimension_numbers<[1], [0], [0], [1], [0, 0, 1, 1], [], []>} : vector<8x8xbf16>, vector<8x16xbf16>, vector<8x16xf32> -> vector<8x16xf32>
    %573 = tpu.reciprocal %569 {approx = true} : vector<8x1xf32> -> vector<8x1xf32>
    %574 = vector.broadcast %573 : vector<8x1xf32> to vector<8x16xf32>
    %575 = arith.mulf %572, %574 : vector<8x16xf32>
    %576 = vector.extract_strided_slice %493 {offsets = [0, 32], sizes = [1, 16], strides = [1, 1]} : vector<1x64xf32> to vector<1x16xf32>
    %577 = vector.broadcast %576 : vector<1x16xf32> to vector<8x16xf32>
    %578 = arith.addf %575, %577 : vector<8x16xf32>
    %cst_177 = arith.constant 0.000000e+00 : f32
    %579 = vector.broadcast %cst_177 : f32 to vector<8x16xf32>
    %580 = arith.maximumf %578, %579 : vector<8x16xf32>
    %c0_178 = arith.constant 0 : index
    %c32_179 = arith.constant 32 : index
    %581 = vector.load %arg19[%c0_178, %c32_179] : memref<16x64xf32, #tpu.memory_space<vmem>>, vector<8x16xf32>
    tpu.vector_store %arg19[%c0_178, %c32_179], %580 {strides = array<i32>} : memref<16x64xf32, #tpu.memory_space<vmem>>, vector<8x16xf32>,
    %582 = vector.extract_strided_slice %490 {offsets = [0, 3], sizes = [8, 1], strides = [1, 1]} : vector<16x4xf32> to vector<8x1xf32>
    %583 = vector.extract_strided_slice %492 {offsets = [3, 0], sizes = [1, 8], strides = [1, 1]} : vector<4x16xf32> to vector<1x8xf32>
    %584 = vector.broadcast %582 : vector<8x1xf32> to vector<8x8xf32>
    %585 = vector.broadcast %583 : vector<1x8xf32> to vector<8x8xf32>
    %586 = arith.addf %584, %585 : vector<8x8xf32>
    %cst_180 = arith.constant 2.000000e-01 : f32
    %587 = vector.broadcast %cst_180 : f32 to vector<8x8xf32>
    %588 = arith.mulf %587, %586 : vector<8x8xf32>
    %589 = arith.maximumf %586, %588 : vector<8x8xf32>
    %590 = arith.addf %589, %496 : vector<8x8xf32>
    %cst_181 = arith.constant dense<0xFF800000> : vector<8xf32>
    %591 = vector.multi_reduction <maximumf>, %590, %cst_181 [1] : vector<8x8xf32> to vector<8xf32>
    %592 = vector.shape_cast %591 : vector<8xf32> to vector<8x1xf32>
    %593 = vector.broadcast %592 : vector<8x1xf32> to vector<8x8xf32>
    %594 = arith.subf %590, %593 : vector<8x8xf32>
    %595 = math.exp %594 : vector<8x8xf32>
    %cst_182 = arith.constant dense<0.000000e+00> : vector<8xf32>
    %596 = vector.multi_reduction <add>, %595, %cst_182 [1] : vector<8x8xf32> to vector<8xf32>
    %597 = vector.shape_cast %596 : vector<8xf32> to vector<8x1xf32>
    %598 = arith.truncf %595 : vector<8x8xf32> to vector<8x8xbf16>
    %599 = vector.extract_strided_slice %497 {offsets = [0, 48], sizes = [8, 16], strides = [1, 1]} : vector<8x64xbf16> to vector<8x16xbf16>
    %cst_183 = arith.constant dense<0.000000e+00> : vector<8x16xf32>
    %600 = tpu.matmul %598, %599, %cst_183 {dimension_numbers = #tpu.dot_dimension_numbers<[1], [0], [0], [1], [0, 0, 1, 1], [], []>} : vector<8x8xbf16>, vector<8x16xbf16>, vector<8x16xf32> -> vector<8x16xf32>
    %601 = tpu.reciprocal %597 {approx = true} : vector<8x1xf32> -> vector<8x1xf32>
    %602 = vector.broadcast %601 : vector<8x1xf32> to vector<8x16xf32>
    %603 = arith.mulf %600, %602 : vector<8x16xf32>
    %604 = vector.extract_strided_slice %493 {offsets = [0, 48], sizes = [1, 16], strides = [1, 1]} : vector<1x64xf32> to vector<1x16xf32>
    %605 = vector.broadcast %604 : vector<1x16xf32> to vector<8x16xf32>
    %606 = arith.addf %603, %605 : vector<8x16xf32>
    %cst_184 = arith.constant 0.000000e+00 : f32
    %607 = vector.broadcast %cst_184 : f32 to vector<8x16xf32>
    %608 = arith.maximumf %606, %607 : vector<8x16xf32>
    %c0_185 = arith.constant 0 : index
    %c48_186 = arith.constant 48 : index
    %609 = vector.load %arg19[%c0_185, %c48_186] : memref<16x64xf32, #tpu.memory_space<vmem>>, vector<8x16xf32>
    tpu.vector_store %arg19[%c0_185, %c48_186], %608 {strides = array<i32>} : memref<16x64xf32, #tpu.memory_space<vmem>>, vector<8x16xf32>,
    %c1_187 = arith.constant 1 : index
    %c0_188 = arith.constant 0 : index
    %c0_189 = arith.constant 0 : index
    %610 = vector.load %arg2[%c1_187, %c0_188, %c0_189] : memref<2x8x8xbf16, #tpu.memory_space<vmem>>, vector<1x8x8xbf16>
    %611 = vector.shape_cast %610 : vector<1x8x8xbf16> to vector<8x8xbf16>
    %612 = arith.extf %611 : vector<8x8xbf16> to vector<8x8xf32>
    %613 = vector.extract_strided_slice %488 {offsets = [8, 0], sizes = [8, 64], strides = [1, 1]} : vector<16x64xbf16> to vector<8x64xbf16>
    %614 = vector.extract_strided_slice %490 {offsets = [8, 0], sizes = [8, 1], strides = [1, 1]} : vector<16x4xf32> to vector<8x1xf32>
    %615 = vector.extract_strided_slice %492 {offsets = [0, 8], sizes = [1, 8], strides = [1, 1]} : vector<4x16xf32> to vector<1x8xf32>
    %616 = vector.broadcast %614 : vector<8x1xf32> to vector<8x8xf32>
    %617 = vector.broadcast %615 : vector<1x8xf32> to vector<8x8xf32>
    %618 = arith.addf %616, %617 : vector<8x8xf32>
    %cst_190 = arith.constant 2.000000e-01 : f32
    %619 = vector.broadcast %cst_190 : f32 to vector<8x8xf32>
    %620 = arith.mulf %619, %618 : vector<8x8xf32>
    %621 = arith.maximumf %618, %620 : vector<8x8xf32>
    %622 = arith.addf %621, %612 : vector<8x8xf32>
    %cst_191 = arith.constant dense<0xFF800000> : vector<8xf32>
    %623 = vector.multi_reduction <maximumf>, %622, %cst_191 [1] : vector<8x8xf32> to vector<8xf32>
    %624 = vector.shape_cast %623 : vector<8xf32> to vector<8x1xf32>
    %625 = vector.broadcast %624 : vector<8x1xf32> to vector<8x8xf32>
    %626 = arith.subf %622, %625 : vector<8x8xf32>
    %627 = math.exp %626 : vector<8x8xf32>
    %cst_192 = arith.constant dense<0.000000e+00> : vector<8xf32>
    %628 = vector.multi_reduction <add>, %627, %cst_192 [1] : vector<8x8xf32> to vector<8xf32>
    %629 = vector.shape_cast %628 : vector<8xf32> to vector<8x1xf32>
    %630 = arith.truncf %627 : vector<8x8xf32> to vector<8x8xbf16>
    %631 = vector.extract_strided_slice %613 {offsets = [0, 0], sizes = [8, 16], strides = [1, 1]} : vector<8x64xbf16> to vector<8x16xbf16>
    %cst_193 = arith.constant dense<0.000000e+00> : vector<8x16xf32>
    %632 = tpu.matmul %630, %631, %cst_193 {dimension_numbers = #tpu.dot_dimension_numbers<[1], [0], [0], [1], [0, 0, 1, 1], [], []>} : vector<8x8xbf16>, vector<8x16xbf16>, vector<8x16xf32> -> vector<8x16xf32>
    %633 = tpu.reciprocal %629 {approx = true} : vector<8x1xf32> -> vector<8x1xf32>
    %634 = vector.broadcast %633 : vector<8x1xf32> to vector<8x16xf32>
    %635 = arith.mulf %632, %634 : vector<8x16xf32>
    %636 = vector.extract_strided_slice %493 {offsets = [0, 0], sizes = [1, 16], strides = [1, 1]} : vector<1x64xf32> to vector<1x16xf32>
    %637 = vector.broadcast %636 : vector<1x16xf32> to vector<8x16xf32>
    %638 = arith.addf %635, %637 : vector<8x16xf32>
    %cst_194 = arith.constant 0.000000e+00 : f32
    %639 = vector.broadcast %cst_194 : f32 to vector<8x16xf32>
    %640 = arith.maximumf %638, %639 : vector<8x16xf32>
    %c8_195 = arith.constant 8 : index
    %c0_196 = arith.constant 0 : index
    %641 = vector.load %arg19[%c8_195, %c0_196] : memref<16x64xf32, #tpu.memory_space<vmem>>, vector<8x16xf32>
    tpu.vector_store %arg19[%c8_195, %c0_196], %640 {strides = array<i32>} : memref<16x64xf32, #tpu.memory_space<vmem>>, vector<8x16xf32>,
    %642 = vector.extract_strided_slice %490 {offsets = [8, 1], sizes = [8, 1], strides = [1, 1]} : vector<16x4xf32> to vector<8x1xf32>
    %643 = vector.extract_strided_slice %492 {offsets = [1, 8], sizes = [1, 8], strides = [1, 1]} : vector<4x16xf32> to vector<1x8xf32>
    %644 = vector.broadcast %642 : vector<8x1xf32> to vector<8x8xf32>
    %645 = vector.broadcast %643 : vector<1x8xf32> to vector<8x8xf32>
    %646 = arith.addf %644, %645 : vector<8x8xf32>
    %cst_197 = arith.constant 2.000000e-01 : f32
    %647 = vector.broadcast %cst_197 : f32 to vector<8x8xf32>
    %648 = arith.mulf %647, %646 : vector<8x8xf32>
    %649 = arith.maximumf %646, %648 : vector<8x8xf32>
    %650 = arith.addf %649, %612 : vector<8x8xf32>
    %cst_198 = arith.constant dense<0xFF800000> : vector<8xf32>
    %651 = vector.multi_reduction <maximumf>, %650, %cst_198 [1] : vector<8x8xf32> to vector<8xf32>
    %652 = vector.shape_cast %651 : vector<8xf32> to vector<8x1xf32>
    %653 = vector.broadcast %652 : vector<8x1xf32> to vector<8x8xf32>
    %654 = arith.subf %650, %653 : vector<8x8xf32>
    %655 = math.exp %654 : vector<8x8xf32>
    %cst_199 = arith.constant dense<0.000000e+00> : vector<8xf32>
    %656 = vector.multi_reduction <add>, %655, %cst_199 [1] : vector<8x8xf32> to vector<8xf32>
    %657 = vector.shape_cast %656 : vector<8xf32> to vector<8x1xf32>
    %658 = arith.truncf %655 : vector<8x8xf32> to vector<8x8xbf16>
    %659 = vector.extract_strided_slice %613 {offsets = [0, 16], sizes = [8, 16], strides = [1, 1]} : vector<8x64xbf16> to vector<8x16xbf16>
    %cst_200 = arith.constant dense<0.000000e+00> : vector<8x16xf32>
    %660 = tpu.matmul %658, %659, %cst_200 {dimension_numbers = #tpu.dot_dimension_numbers<[1], [0], [0], [1], [0, 0, 1, 1], [], []>} : vector<8x8xbf16>, vector<8x16xbf16>, vector<8x16xf32> -> vector<8x16xf32>
    %661 = tpu.reciprocal %657 {approx = true} : vector<8x1xf32> -> vector<8x1xf32>
    %662 = vector.broadcast %661 : vector<8x1xf32> to vector<8x16xf32>
    %663 = arith.mulf %660, %662 : vector<8x16xf32>
    %664 = vector.extract_strided_slice %493 {offsets = [0, 16], sizes = [1, 16], strides = [1, 1]} : vector<1x64xf32> to vector<1x16xf32>
    %665 = vector.broadcast %664 : vector<1x16xf32> to vector<8x16xf32>
    %666 = arith.addf %663, %665 : vector<8x16xf32>
    %cst_201 = arith.constant 0.000000e+00 : f32
    %667 = vector.broadcast %cst_201 : f32 to vector<8x16xf32>
    %668 = arith.maximumf %666, %667 : vector<8x16xf32>
    %c8_202 = arith.constant 8 : index
    %c16_203 = arith.constant 16 : index
    %669 = vector.load %arg19[%c8_202, %c16_203] : memref<16x64xf32, #tpu.memory_space<vmem>>, vector<8x16xf32>
    tpu.vector_store %arg19[%c8_202, %c16_203], %668 {strides = array<i32>} : memref<16x64xf32, #tpu.memory_space<vmem>>, vector<8x16xf32>,
    %670 = vector.extract_strided_slice %490 {offsets = [8, 2], sizes = [8, 1], strides = [1, 1]} : vector<16x4xf32> to vector<8x1xf32>
    %671 = vector.extract_strided_slice %492 {offsets = [2, 8], sizes = [1, 8], strides = [1, 1]} : vector<4x16xf32> to vector<1x8xf32>
    %672 = vector.broadcast %670 : vector<8x1xf32> to vector<8x8xf32>
    %673 = vector.broadcast %671 : vector<1x8xf32> to vector<8x8xf32>
    %674 = arith.addf %672, %673 : vector<8x8xf32>
    %cst_204 = arith.constant 2.000000e-01 : f32
    %675 = vector.broadcast %cst_204 : f32 to vector<8x8xf32>
    %676 = arith.mulf %675, %674 : vector<8x8xf32>
    %677 = arith.maximumf %674, %676 : vector<8x8xf32>
    %678 = arith.addf %677, %612 : vector<8x8xf32>
    %cst_205 = arith.constant dense<0xFF800000> : vector<8xf32>
    %679 = vector.multi_reduction <maximumf>, %678, %cst_205 [1] : vector<8x8xf32> to vector<8xf32>
    %680 = vector.shape_cast %679 : vector<8xf32> to vector<8x1xf32>
    %681 = vector.broadcast %680 : vector<8x1xf32> to vector<8x8xf32>
    %682 = arith.subf %678, %681 : vector<8x8xf32>
    %683 = math.exp %682 : vector<8x8xf32>
    %cst_206 = arith.constant dense<0.000000e+00> : vector<8xf32>
    %684 = vector.multi_reduction <add>, %683, %cst_206 [1] : vector<8x8xf32> to vector<8xf32>
    %685 = vector.shape_cast %684 : vector<8xf32> to vector<8x1xf32>
    %686 = arith.truncf %683 : vector<8x8xf32> to vector<8x8xbf16>
    %687 = vector.extract_strided_slice %613 {offsets = [0, 32], sizes = [8, 16], strides = [1, 1]} : vector<8x64xbf16> to vector<8x16xbf16>
    %cst_207 = arith.constant dense<0.000000e+00> : vector<8x16xf32>
    %688 = tpu.matmul %686, %687, %cst_207 {dimension_numbers = #tpu.dot_dimension_numbers<[1], [0], [0], [1], [0, 0, 1, 1], [], []>} : vector<8x8xbf16>, vector<8x16xbf16>, vector<8x16xf32> -> vector<8x16xf32>
    %689 = tpu.reciprocal %685 {approx = true} : vector<8x1xf32> -> vector<8x1xf32>
    %690 = vector.broadcast %689 : vector<8x1xf32> to vector<8x16xf32>
    %691 = arith.mulf %688, %690 : vector<8x16xf32>
    %692 = vector.extract_strided_slice %493 {offsets = [0, 32], sizes = [1, 16], strides = [1, 1]} : vector<1x64xf32> to vector<1x16xf32>
    %693 = vector.broadcast %692 : vector<1x16xf32> to vector<8x16xf32>
    %694 = arith.addf %691, %693 : vector<8x16xf32>
    %cst_208 = arith.constant 0.000000e+00 : f32
    %695 = vector.broadcast %cst_208 : f32 to vector<8x16xf32>
    %696 = arith.maximumf %694, %695 : vector<8x16xf32>
    %c8_209 = arith.constant 8 : index
    %c32_210 = arith.constant 32 : index
    %697 = vector.load %arg19[%c8_209, %c32_210] : memref<16x64xf32, #tpu.memory_space<vmem>>, vector<8x16xf32>
    tpu.vector_store %arg19[%c8_209, %c32_210], %696 {strides = array<i32>} : memref<16x64xf32, #tpu.memory_space<vmem>>, vector<8x16xf32>,
    %698 = vector.extract_strided_slice %490 {offsets = [8, 3], sizes = [8, 1], strides = [1, 1]} : vector<16x4xf32> to vector<8x1xf32>
    %699 = vector.extract_strided_slice %492 {offsets = [3, 8], sizes = [1, 8], strides = [1, 1]} : vector<4x16xf32> to vector<1x8xf32>
    %700 = vector.broadcast %698 : vector<8x1xf32> to vector<8x8xf32>
    %701 = vector.broadcast %699 : vector<1x8xf32> to vector<8x8xf32>
    %702 = arith.addf %700, %701 : vector<8x8xf32>
    %cst_211 = arith.constant 2.000000e-01 : f32
    %703 = vector.broadcast %cst_211 : f32 to vector<8x8xf32>
    %704 = arith.mulf %703, %702 : vector<8x8xf32>
    %705 = arith.maximumf %702, %704 : vector<8x8xf32>
    %706 = arith.addf %705, %612 : vector<8x8xf32>
    %cst_212 = arith.constant dense<0xFF800000> : vector<8xf32>
    %707 = vector.multi_reduction <maximumf>, %706, %cst_212 [1] : vector<8x8xf32> to vector<8xf32>
    %708 = vector.shape_cast %707 : vector<8xf32> to vector<8x1xf32>
    %709 = vector.broadcast %708 : vector<8x1xf32> to vector<8x8xf32>
    %710 = arith.subf %706, %709 : vector<8x8xf32>
    %711 = math.exp %710 : vector<8x8xf32>
    %cst_213 = arith.constant dense<0.000000e+00> : vector<8xf32>
    %712 = vector.multi_reduction <add>, %711, %cst_213 [1] : vector<8x8xf32> to vector<8xf32>
    %713 = vector.shape_cast %712 : vector<8xf32> to vector<8x1xf32>
    %714 = arith.truncf %711 : vector<8x8xf32> to vector<8x8xbf16>
    %715 = vector.extract_strided_slice %613 {offsets = [0, 48], sizes = [8, 16], strides = [1, 1]} : vector<8x64xbf16> to vector<8x16xbf16>
    %cst_214 = arith.constant dense<0.000000e+00> : vector<8x16xf32>
    %716 = tpu.matmul %714, %715, %cst_214 {dimension_numbers = #tpu.dot_dimension_numbers<[1], [0], [0], [1], [0, 0, 1, 1], [], []>} : vector<8x8xbf16>, vector<8x16xbf16>, vector<8x16xf32> -> vector<8x16xf32>
    %717 = tpu.reciprocal %713 {approx = true} : vector<8x1xf32> -> vector<8x1xf32>
    %718 = vector.broadcast %717 : vector<8x1xf32> to vector<8x16xf32>
    %719 = arith.mulf %716, %718 : vector<8x16xf32>
    %720 = vector.extract_strided_slice %493 {offsets = [0, 48], sizes = [1, 16], strides = [1, 1]} : vector<1x64xf32> to vector<1x16xf32>
    %721 = vector.broadcast %720 : vector<1x16xf32> to vector<8x16xf32>
    %722 = arith.addf %719, %721 : vector<8x16xf32>
    %cst_215 = arith.constant 0.000000e+00 : f32
    %723 = vector.broadcast %cst_215 : f32 to vector<8x16xf32>
    %724 = arith.maximumf %722, %723 : vector<8x16xf32>
    %c8_216 = arith.constant 8 : index
    %c48_217 = arith.constant 48 : index
    %725 = vector.load %arg19[%c8_216, %c48_217] : memref<16x64xf32, #tpu.memory_space<vmem>>, vector<8x16xf32>
    tpu.vector_store %arg19[%c8_216, %c48_217], %724 {strides = array<i32>} : memref<16x64xf32, #tpu.memory_space<vmem>>, vector<8x16xf32>,
    %c0_218 = arith.constant 0 : index
    %c0_219 = arith.constant 0 : index
    %726 = vector.load %arg19[%c0_218, %c0_219] : memref<16x64xf32, #tpu.memory_space<vmem>>, vector<16x64xf32>
    %c0_220 = arith.constant 0 : index
    %c0_221 = arith.constant 0 : index
    %c0_222 = arith.constant 0 : index
    %727 = vector.load %arg3[%c0_220, %c0_221, %c0_222] : memref<2x1x8xf32, #tpu.memory_space<vmem>>, vector<1x1x8xf32>
    %728 = vector.shape_cast %727 : vector<1x1x8xf32> to vector<1x8xf32>
    %729 = vector.extract_strided_slice %726 {offsets = [0, 0], sizes = [8, 64], strides = [1, 1]} : vector<16x64xf32> to vector<8x64xf32>
    %cst_223 = arith.constant dense<0.000000e+00> : vector<1x64xf32>
    %730 = tpu.matmul %728, %729, %cst_223 {dimension_numbers = #tpu.dot_dimension_numbers<[1], [0], [0], [1], [0, 0, 1, 1], [], []>} : vector<1x8xf32>, vector<8x64xf32>, vector<1x64xf32> -> vector<1x64xf32>
    %c0_224 = arith.constant 0 : index
    %c0_225 = arith.constant 0 : index
    %731 = vector.load %arg20[%c0_224, %c0_225] : memref<2x64xf32, #tpu.memory_space<vmem>>, vector<1x64xf32>
    tpu.vector_store %arg20[%c0_224, %c0_225], %730 {strides = array<i32>} : memref<2x64xf32, #tpu.memory_space<vmem>>, vector<1x64xf32>,
    %c1_226 = arith.constant 1 : index
    %c0_227 = arith.constant 0 : index
    %c0_228 = arith.constant 0 : index
    %732 = vector.load %arg3[%c1_226, %c0_227, %c0_228] : memref<2x1x8xf32, #tpu.memory_space<vmem>>, vector<1x1x8xf32>
    %733 = vector.shape_cast %732 : vector<1x1x8xf32> to vector<1x8xf32>
    %734 = vector.extract_strided_slice %726 {offsets = [8, 0], sizes = [8, 64], strides = [1, 1]} : vector<16x64xf32> to vector<8x64xf32>
    %cst_229 = arith.constant dense<0.000000e+00> : vector<1x64xf32>
    %735 = tpu.matmul %733, %734, %cst_229 {dimension_numbers = #tpu.dot_dimension_numbers<[1], [0], [0], [1], [0, 0, 1, 1], [], []>} : vector<1x8xf32>, vector<8x64xf32>, vector<1x64xf32> -> vector<1x64xf32>
    %c1_230 = arith.constant 1 : index
    %c0_231 = arith.constant 0 : index
    %736 = vector.load %arg20[%c1_230, %c0_231] : memref<2x64xf32, #tpu.memory_space<vmem>>, vector<1x64xf32>
    tpu.vector_store %arg20[%c1_230, %c0_231], %735 {strides = array<i32>} : memref<2x64xf32, #tpu.memory_space<vmem>>, vector<1x64xf32>,
    %c0_232 = arith.constant 0 : index
    %c0_233 = arith.constant 0 : index
    %737 = vector.load %arg20[%c0_232, %c0_233] : memref<2x64xf32, #tpu.memory_space<vmem>>, vector<2x64xf32>
    %738 = arith.truncf %737 : vector<2x64xf32> to vector<2x64xbf16>
    %c0_234 = arith.constant 0 : index
    %c0_235 = arith.constant 0 : index
    %739 = vector.load %arg16[%c0_234, %c0_235] : memref<64x8xbf16, #tpu.memory_space<vmem>>, vector<64x8xbf16>
    %cst_236 = arith.constant dense<0.000000e+00> : vector<2x8xf32>
    %740 = tpu.matmul %738, %739, %cst_236 {dimension_numbers = #tpu.dot_dimension_numbers<[1], [0], [0], [1], [0, 0, 1, 1], [], []>} : vector<2x64xbf16>, vector<64x8xbf16>, vector<2x8xf32> -> vector<2x8xf32>
    %c0_237 = arith.constant 0 : index
    %c0_238 = arith.constant 0 : index
    %741 = vector.load %arg17[%c0_237, %c0_238] : memref<1x8xf32, #tpu.memory_space<vmem>>, vector<1x8xf32>
    %742 = vector.broadcast %741 : vector<1x8xf32> to vector<2x8xf32>
    %743 = arith.addf %740, %742 : vector<2x8xf32>
    %c0_239 = arith.constant 0 : index
    %c0_240 = arith.constant 0 : index
    %c0_241 = arith.constant 0 : index
    %744 = vector.load %arg18[%c0_239, %c0_240, %c0_241] : memref<1x2x8xf32, #tpu.memory_space<vmem>>, vector<1x2x8xf32>
    %745 = vector.shape_cast %744 : vector<1x2x8xf32> to vector<2x8xf32>
    %746 = vector.shape_cast %743 : vector<2x8xf32> to vector<1x2x8xf32>
    tpu.vector_store %arg18[%c0_239, %c0_240, %c0_241], %746 {strides = array<i32>} : memref<1x2x8xf32, #tpu.memory_space<vmem>>, vector<1x2x8xf32>,
    return
  }
  func.func @transform_0(%arg0: i32) -> (i32, i32) {
    %c0_i32 = arith.constant 0 : i32
    %c0_i32_0 = arith.constant 0 : i32
    return %arg0, %c0_i32 : i32, i32
  }
  func.func @transform_1(%arg0: i32) -> (i32, i32, i32) {
    %c0_i32 = arith.constant 0 : i32
    %c0_i32_0 = arith.constant 0 : i32
    %c0_i32_1 = arith.constant 0 : i32
    return %arg0, %c0_i32, %c0_i32_0 : i32, i32, i32
  }
  func.func @transform_2(%arg0: i32) -> (i32, i32, i32) {
    %c0_i32 = arith.constant 0 : i32
    %c0_i32_0 = arith.constant 0 : i32
    %c0_i32_1 = arith.constant 0 : i32
    return %arg0, %c0_i32, %c0_i32_0 : i32, i32, i32
  }
  func.func @transform_3(%arg0: i32) -> (i32, i32) {
    %c0_i32 = arith.constant 0 : i32
    %c0_i32_0 = arith.constant 0 : i32
    %c0_i32_1 = arith.constant 0 : i32
    return %c0_i32, %c0_i32_0 : i32, i32
  }
  func.func @transform_4(%arg0: i32) -> (i32, i32) {
    %c0_i32 = arith.constant 0 : i32
    %c0_i32_0 = arith.constant 0 : i32
    %c0_i32_1 = arith.constant 0 : i32
    return %c0_i32, %c0_i32_0 : i32, i32
  }
  func.func @transform_5(%arg0: i32) -> (i32, i32) {
    %c0_i32 = arith.constant 0 : i32
    %c0_i32_0 = arith.constant 0 : i32
    %c0_i32_1 = arith.constant 0 : i32
    return %c0_i32, %c0_i32_0 : i32, i32
  }
  func.func @transform_6(%arg0: i32) -> (i32, i32) {
    %c0_i32 = arith.constant 0 : i32
    %c0_i32_0 = arith.constant 0 : i32
    %c0_i32_1 = arith.constant 0 : i32
    return %c0_i32, %c0_i32_0 : i32, i32
  }
  func.func @transform_7(%arg0: i32) -> (i32, i32) {
    %c0_i32 = arith.constant 0 : i32
    %c0_i32_0 = arith.constant 0 : i32
    %c0_i32_1 = arith.constant 0 : i32
    return %c0_i32, %c0_i32_0 : i32, i32
  }
  func.func @transform_8(%arg0: i32) -> (i32, i32) {
    %c0_i32 = arith.constant 0 : i32
    %c0_i32_0 = arith.constant 0 : i32
    %c0_i32_1 = arith.constant 0 : i32
    return %c0_i32, %c0_i32_0 : i32, i32
  }
  func.func @transform_9(%arg0: i32) -> (i32, i32) {
    %c0_i32 = arith.constant 0 : i32
    %c0_i32_0 = arith.constant 0 : i32
    %c0_i32_1 = arith.constant 0 : i32
    return %c0_i32, %c0_i32_0 : i32, i32
  }
  func.func @transform_10(%arg0: i32) -> (i32, i32) {
    %c0_i32 = arith.constant 0 : i32
    %c0_i32_0 = arith.constant 0 : i32
    %c0_i32_1 = arith.constant 0 : i32
    return %c0_i32, %c0_i32_0 : i32, i32
  }
  func.func @transform_11(%arg0: i32) -> (i32, i32) {
    %c0_i32 = arith.constant 0 : i32
    %c0_i32_0 = arith.constant 0 : i32
    %c0_i32_1 = arith.constant 0 : i32
    return %c0_i32, %c0_i32_0 : i32, i32
  }
  func.func @transform_12(%arg0: i32) -> (i32, i32) {
    %c0_i32 = arith.constant 0 : i32
    %c0_i32_0 = arith.constant 0 : i32
    %c0_i32_1 = arith.constant 0 : i32
    return %c0_i32, %c0_i32_0 : i32, i32
  }
  func.func @transform_13(%arg0: i32) -> (i32, i32) {
    %c0_i32 = arith.constant 0 : i32
    %c0_i32_0 = arith.constant 0 : i32
    %c0_i32_1 = arith.constant 0 : i32
    return %c0_i32, %c0_i32_0 : i32, i32
  }
  func.func @transform_14(%arg0: i32) -> (i32, i32) {
    %c0_i32 = arith.constant 0 : i32
    %c0_i32_0 = arith.constant 0 : i32
    %c0_i32_1 = arith.constant 0 : i32
    return %c0_i32, %c0_i32_0 : i32, i32
  }
  func.func @transform_15(%arg0: i32) -> (i32, i32) {
    %c0_i32 = arith.constant 0 : i32
    %c0_i32_0 = arith.constant 0 : i32
    %c0_i32_1 = arith.constant 0 : i32
    return %c0_i32, %c0_i32_0 : i32, i32
  }
  func.func @transform_16(%arg0: i32) -> (i32, i32) {
    %c0_i32 = arith.constant 0 : i32
    %c0_i32_0 = arith.constant 0 : i32
    %c0_i32_1 = arith.constant 0 : i32
    return %c0_i32, %c0_i32_0 : i32, i32
  }
  func.func @transform_17(%arg0: i32) -> (i32, i32, i32) {
    %c0_i32 = arith.constant 0 : i32
    %c0_i32_0 = arith.constant 0 : i32
    %c0_i32_1 = arith.constant 0 : i32
    return %arg0, %c0_i32, %c0_i32_0 : i32, i32, i32
  }
}

</mosaic_0001>

<llo_original>
// kernel: tpu_custom_call.1
$region0: #{tpu_custom_call.1}
  #allocation0 [shape = 'u32[]', space=smem, size = 0x4, offset = 0x4, fixed_abs, tag = 'smem constant byte address 0x4 - core index']
  #allocation1 [shape = 'u32[144,128]{1,0:T(1,128)}', space=vmem, size = 0x12000, scoped, tag = 'internal scratch']
  #allocation2 [shape = 'f32[16,64]{1,0:T(8,128)}', space=vmem, size = 0x2000, scoped, tag = 'scratch operand']
  #allocation3 [shape = 'f32[2,64]{1,0:T(2,128)}', space=vmem, size = 0x400, scoped, tag = 'scratch operand']
  %s0 = inlined_call_operand.vmem [shape: f32[16,8], index: 0, kind: input, shape index: {}]
  %s1 = inlined_call_operand.vmem [shape: bf16[2,8,8], index: 1, kind: input, shape index: {}]
  %s2 = inlined_call_operand.vmem [shape: f32[2,1,8], index: 2, kind: input, shape index: {}]
  %s3 = inlined_call_operand.vmem [shape: bf16[8,64], index: 3, kind: input, shape index: {}]
  %s4 = inlined_call_operand.vmem [shape: bf16[4,64], index: 4, kind: input, shape index: {}]
  %s5 = inlined_call_operand.vmem [shape: bf16[64,4], index: 5, kind: input, shape index: {}]
  %s6 = inlined_call_operand.vmem [shape: f32[1,64], index: 6, kind: input, shape index: {}]
  %s7 = inlined_call_operand.vmem [shape: bf16[64,64], index: 7, kind: input, shape index: {}]
  %s8 = inlined_call_operand.vmem [shape: bf16[4,64], index: 8, kind: input, shape index: {}]
  %s9 = inlined_call_operand.vmem [shape: bf16[64,4], index: 9, kind: input, shape index: {}]
  %s10 = inlined_call_operand.vmem [shape: f32[1,64], index: 10, kind: input, shape index: {}]
  %s11 = inlined_call_operand.vmem [shape: bf16[64,64], index: 11, kind: input, shape index: {}]
  %s12 = inlined_call_operand.vmem [shape: bf16[4,64], index: 12, kind: input, shape index: {}]
  %s13 = inlined_call_operand.vmem [shape: bf16[64,4], index: 13, kind: input, shape index: {}]
  %s14 = inlined_call_operand.vmem [shape: f32[1,64], index: 14, kind: input, shape index: {}]
  %s15 = inlined_call_operand.vmem [shape: bf16[64,8], index: 15, kind: input, shape index: {}]
  %s16 = inlined_call_operand.vmem [shape: f32[1,8], index: 16, kind: input, shape index: {}]
  %s17 = inlined_call_operand.hbm [shape: f32[1,2,8], index: 17, kind: output, shape index: {}]
  %s18 = sld [smem:[#allocation0]]
  $region78: #{tpu_custom_call.1} parent=0
    _
  %s20 = ssub.s32 1, %s18
  %s21 = scalar_select 0, %s20, %s18
  $region1: #{tpu_custom_call.1} parent=0
    #allocation4 [shape = 'u8[1024]{0}', space=vmem, size = 0x400, scoped, tag = 'output window, operand 0, single buffered']
    #allocation5 [shape = 's32[1]{0}', space=sflag, size = 0x4, scoped, tag = 'scoped memory for tpu_custom_call.1']
    %22 = vsyncpa [#allocation5], 0
    // Predicated region
    $region2: #{tpu_custom_call.1} parent=1 // pred_check
      _
    $region3: #{tpu_custom_call.1} parent=1 // pred_check_branch
      %24 = sbr.rel (0) target = $region5
    $region4: #{tpu_custom_call.1} parent=1 // pred_region
      _
    $region5: #{tpu_custom_call.1} parent=1 // pred_fallthru
      _
    // Predicated region
    $region6: #{tpu_custom_call.1} parent=1 // pred_check
      _
    $region7: #{tpu_custom_call.1} parent=1 // pred_check_branch
      %26 = sbr.rel (0) target = $region9
    $region8: #{tpu_custom_call.1} parent=1 // pred_region
      _
    $region9: #{tpu_custom_call.1} parent=1 // pred_fallthru
      _
    // Predicated region
    $region10: #{tpu_custom_call.1} parent=1 // pred_check
      _
    $region11: #{tpu_custom_call.1} parent=1 // pred_check_branch
      %28 = sbr.rel (0) target = $region13
    $region12: #{tpu_custom_call.1} parent=1 // pred_region
      _
    $region13: #{tpu_custom_call.1} parent=1 // pred_fallthru
      _
    // Predicated region
    $region14: #{tpu_custom_call.1} parent=1 // pred_check
      _
    $region15: #{tpu_custom_call.1} parent=1 // pred_check_branch
      %30 = sbr.rel (0) target = $region17
    $region16: #{tpu_custom_call.1} parent=1 // pred_region
      _
    $region17: #{tpu_custom_call.1} parent=1 // pred_fallthru
      _
    // Predicated region
    $region18: #{tpu_custom_call.1} parent=1 // pred_check
      _
    $region19: #{tpu_custom_call.1} parent=1 // pred_check_branch
      %32 = sbr.rel (0) target = $region21
    $region20: #{tpu_custom_call.1} parent=1 // pred_region
      _
    $region21: #{tpu_custom_call.1} parent=1 // pred_fallthru
      _
    // Predicated region
    $region22: #{tpu_custom_call.1} parent=1 // pred_check
      _
    $region23: #{tpu_custom_call.1} parent=1 // pred_check_branch
      %34 = sbr.rel (0) target = $region25
    $region24: #{tpu_custom_call.1} parent=1 // pred_region
      _
    $region25: #{tpu_custom_call.1} parent=1 // pred_fallthru
      _
    // Predicated region
    $region26: #{tpu_custom_call.1} parent=1 // pred_check
      _
    $region27: #{tpu_custom_call.1} parent=1 // pred_check_branch
      %36 = sbr.rel (0) target = $region29
    $region28: #{tpu_custom_call.1} parent=1 // pred_region
      _
    $region29: #{tpu_custom_call.1} parent=1 // pred_fallthru
      _
    // Predicated region
    $region30: #{tpu_custom_call.1} parent=1 // pred_check
      _
    $region31: #{tpu_custom_call.1} parent=1 // pred_check_branch
      %38 = sbr.rel (0) target = $region33
    $region32: #{tpu_custom_call.1} parent=1 // pred_region
      _
    $region33: #{tpu_custom_call.1} parent=1 // pred_fallthru
      _
    // Predicated region
    $region34: #{tpu_custom_call.1} parent=1 // pred_check
      _
    $region35: #{tpu_custom_call.1} parent=1 // pred_check_branch
      %40 = sbr.rel (0) target = $region37
    $region36: #{tpu_custom_call.1} parent=1 // pred_region
      _
    $region37: #{tpu_custom_call.1} parent=1 // pred_fallthru
      _
    // Predicated region
    $region38: #{tpu_custom_call.1} parent=1 // pred_check
      _
    $region39: #{tpu_custom_call.1} parent=1 // pred_check_branch
      %42 = sbr.rel (0) target = $region41
    $region40: #{tpu_custom_call.1} parent=1 // pred_region
      _
    $region41: #{tpu_custom_call.1} parent=1 // pred_fallthru
      _
    // Predicated region
    $region42: #{tpu_custom_call.1} parent=1 // pred_check
      _
    $region43: #{tpu_custom_call.1} parent=1 // pred_check_branch
      %44 = sbr.rel (0) target = $region45
    $region44: #{tpu_custom_call.1} parent=1 // pred_region
      _
    $region45: #{tpu_custom_call.1} parent=1 // pred_fallthru
      _
    // Predicated region
    $region46: #{tpu_custom_call.1} parent=1 // pred_check
      _
    $region47: #{tpu_custom_call.1} parent=1 // pred_check_branch
      %46 = sbr.rel (0) target = $region49
    $region48: #{tpu_custom_call.1} parent=1 // pred_region
      _
    $region49: #{tpu_custom_call.1} parent=1 // pred_fallthru
      _
    // Predicated region
    $region50: #{tpu_custom_call.1} parent=1 // pred_check
      _
    $region51: #{tpu_custom_call.1} parent=1 // pred_check_branch
      %48 = sbr.rel (0) target = $region53
    $region52: #{tpu_custom_call.1} parent=1 // pred_region
      _
    $region53: #{tpu_custom_call.1} parent=1 // pred_fallthru
      _
    // Predicated region
    $region54: #{tpu_custom_call.1} parent=1 // pred_check
      _
    $region55: #{tpu_custom_call.1} parent=1 // pred_check_branch
      %50 = sbr.rel (0) target = $region57
    $region56: #{tpu_custom_call.1} parent=1 // pred_region
      _
    $region57: #{tpu_custom_call.1} parent=1 // pred_fallthru
      _
    // Predicated region
    $region58: #{tpu_custom_call.1} parent=1 // pred_check
      _
    $region59: #{tpu_custom_call.1} parent=1 // pred_check_branch
      %52 = sbr.rel (0) target = $region61
    $region60: #{tpu_custom_call.1} parent=1 // pred_region
      _
    $region61: #{tpu_custom_call.1} parent=1 // pred_fallthru
      _
    // Predicated region
    $region62: #{tpu_custom_call.1} parent=1 // pred_check
      _
    $region63: #{tpu_custom_call.1} parent=1 // pred_check_branch
      %54 = sbr.rel (0) target = $region65
    $region64: #{tpu_custom_call.1} parent=1 // pred_region
      _
    $region65: #{tpu_custom_call.1} parent=1 // pred_fallthru
      _
    // Predicated region
    $region66: #{tpu_custom_call.1} parent=1 // pred_check
      _
    $region67: #{tpu_custom_call.1} parent=1 // pred_check_branch
      %56 = sbr.rel (0) target = $region69
    $region68: #{tpu_custom_call.1} parent=1 // pred_region
      _
    $region69: #{tpu_custom_call.1} parent=1 // pred_fallthru
      _
    %v58 = vld [vmem:[%s0] sm:$0xff]
    %v59 = vld [vmem:[%s0 + $0x8] sm:$0xff]
    %v60 = vpack.c.bf16 %v59, %v58
    %v61 = vld [vmem:[%s3] sm:$0xf]
    %vm62 = vcmask 64512
    %v64 = vsel %vm62, %v60, 0
    %vm66 = vcmask 1043456
    %v68 = vsel %vm66, %v61, 0
    %70 = vmatprep.subr.bf16.mxu0 0
    %71 = vmatpush1.bf16.msra.mxu0 %v68
    %72 = vmatprep.subr.bf16.mxu0 0
    %73 = vmatpush1.bf16.msra.mxu0 0
    %74 = vmatprep.subr.bf16.mxu0 0
    %75 = vmatpush1.bf16.msra.mxu0 0
    %76 = vmatprep.subr.bf16.mxu0 0
    %77 = vmatpush1.bf16.msra.mxu0 0
    %78 = vmatprep.subr.bf16.mxu0 0
    %79 = vmatpush1.bf16.msra.mxu0 0
    %80 = vmatprep.subr.bf16.mxu0 0
    %81 = vmatpush1.bf16.msra.mxu0 0
    %82 = vmatprep.subr.bf16.mxu0 0
    %83 = vmatpush1.bf16.msra.mxu0 0
    %84 = vmatprep.subr.bf16.mxu0 0
    %85 = vmatpush1.bf16.msra.mxu0 0
    %86 = vmatprep.subr.bf16.mxu0 0
    %87 = vmatpush1.bf16.msra.mxu0 0
    %88 = vmatprep.subr.bf16.mxu0 0
    %89 = vmatpush1.bf16.msra.mxu0 0
    %90 = vmatprep.subr.bf16.mxu0 0
    %91 = vmatpush1.bf16.msra.mxu0 0
    %92 = vmatprep.subr.bf16.mxu0 0
    %93 = vmatpush1.bf16.msra.mxu0 0
    %94 = vmatprep.subr.bf16.mxu0 0
    %95 = vmatpush1.bf16.msra.mxu0 0
    %96 = vmatprep.subr.bf16.mxu0 0
    %97 = vmatpush1.bf16.msra.mxu0 0
    %98 = vmatprep.subr.bf16.mxu0 0
    %99 = vmatpush1.bf16.msra.mxu0 0
    %100 = vmatprep.subr.bf16.mxu0 0
    %101 = vmatpush1.bf16.msra.mxu0 0
    %102 = vmatprep.mubr.bf16.mxu0 0
    %103 = vmatmul.mubr.bf16.gmra.mrb[0].mxu0 %v64
    %v104 = vpop.f32.mrb[0].mxu0
    %v105 = vadd.f32 0.0, %v104
    %v106 = vpop.f32.mrb[0].mxu0
    %v107 = vpop.f32.mrb[0].mxu0
    %v108 = vadd.f32 0.0, %v107
    %v109 = vpop.f32.mrb[0].mxu0
    %110 = vdwg.mxu0
    %v111 = vpack.c.bf16 %v108, %v105
    %v112 = vld [vmem:[%s5] sm:$0xf]
    %v113 = vld [vmem:[%s5 + $0x4] sm:$0xf]
    %v114 = vld [vmem:[%s5 + $0x8] sm:$0xf]
    %v115 = vld [vmem:[%s5 + $0xc] sm:$0xf]
    %v116 = vld [vmem:[%s5 + $0x10] sm:$0xf]
    %v117 = vld [vmem:[%s5 + $0x14] sm:$0xf]
    %v118 = vld [vmem:[%s5 + $0x18] sm:$0xf]
    %v119 = vld [vmem:[%s5 + $0x1c] sm:$0xf]
    %v128 = vunpack.c.l.b16 %v112
    %v129 = vunpack.c.l.b16 %v113
    %v130 = vunpack.c.l.b16 %v114
    %v131 = vunpack.c.l.b16 %v115
    %v132 = vunpack.c.l.b16 %v116
    %v133 = vunpack.c.l.b16 %v117
    %v134 = vunpack.c.l.b16 %v118
    %v135 = vunpack.c.l.b16 %v119
    %v136 = vpack.c.b16 %v129, %v128
    %v137 = vpack.c.b16 %v131, %v130
    %v138 = vpack.c.b16 %v133, %v132
    %v139 = vpack.c.b16 %v135, %v134
    %vm144 = vcmask 523264
    %v146 = vsel %vm144, %v111, 0
    %148 = vmatprep.subr.bf16.mxu0 0
    %149 = vmatpush1.bf16.msra.mxu0 %v136
    %150 = vmatprep.subr.bf16.mxu0 0
    %151 = vmatpush1.bf16.msra.mxu0 %v137
    %152 = vmatprep.subr.bf16.mxu0 0
    %153 = vmatpush1.bf16.msra.mxu0 %v138
    %154 = vmatprep.subr.bf16.mxu0 0
    %155 = vmatpush1.bf16.msra.mxu0 %v139
    %156 = vmatprep.subr.bf16.mxu0 0
    %157 = vmatpush1.bf16.msra.mxu0 0
    %158 = vmatprep.subr.bf16.mxu0 0
    %159 = vmatpush1.bf16.msra.mxu0 0
    %160 = vmatprep.subr.bf16.mxu0 0
    %161 = vmatpush1.bf16.msra.mxu0 0
    %162 = vmatprep.subr.bf16.mxu0 0
    %163 = vmatpush1.bf16.msra.mxu0 0
    %164 = vmatprep.subr.bf16.mxu0 0
    %165 = vmatpush1.bf16.msra.mxu0 0
    %166 = vmatprep.subr.bf16.mxu0 0
    %167 = vmatpush1.bf16.msra.mxu0 0
    %168 = vmatprep.subr.bf16.mxu0 0
    %169 = vmatpush1.bf16.msra.mxu0 0
    %170 = vmatprep.subr.bf16.mxu0 0
    %171 = vmatpush1.bf16.msra.mxu0 0
    %172 = vmatprep.subr.bf16.mxu0 0
    %173 = vmatpush1.bf16.msra.mxu0 0
    %174 = vmatprep.subr.bf16.mxu0 0
    %175 = vmatpush1.bf16.msra.mxu0 0
    %176 = vmatprep.subr.bf16.mxu0 0
    %177 = vmatpush1.bf16.msra.mxu0 0
    %178 = vmatprep.subr.bf16.mxu0 0
    %179 = vmatpush1.bf16.msra.mxu0 0
    %180 = vmatprep.mubr.bf16.mxu0 0
    %181 = vmatmul.mubr.bf16.gmra.mrb[0].mxu0 %v146
    %v182 = vpop.f32.mrb[0].mxu0
    %v183 = vadd.f32 0.0, %v182
    %v184 = vpop.f32.mrb[0].mxu0
    %v185 = vpop.f32.mrb[0].mxu0
    %v186 = vadd.f32 0.0, %v185
    %v187 = vpop.f32.mrb[0].mxu0
    %188 = vdwg.mxu0
    %v189 = vld [vmem:[%s4] sm:$0x3]
    %v191 = vsel %vm144, %v189, 0
    %193 = vmatprep.subr.bf16.mxu0 0
    %194 = vmatpush1.bf16.xpose.msra.mxu0 %v146
    %195 = vmatprep.subr.bf16.mxu0 0
    %196 = vmatpush1.bf16.xpose.msra.mxu0 0
    %197 = vmatprep.subr.bf16.mxu0 0
    %198 = vmatpush1.bf16.xpose.msra.mxu0 0
    %199 = vmatprep.subr.bf16.mxu0 0
    %200 = vmatpush1.bf16.xpose.msra.mxu0 0
    %201 = vmatprep.subr.bf16.mxu0 0
    %202 = vmatpush1.bf16.xpose.msra.mxu0 0
    %203 = vmatprep.subr.bf16.mxu0 0
    %204 = vmatpush1.bf16.xpose.msra.mxu0 0
    %205 = vmatprep.subr.bf16.mxu0 0
    %206 = vmatpush1.bf16.xpose.msra.mxu0 0
    %207 = vmatprep.subr.bf16.mxu0 0
    %208 = vmatpush1.bf16.xpose.msra.mxu0 0
    %209 = vmatprep.subr.bf16.mxu0 0
    %210 = vmatpush1.bf16.xpose.msra.mxu0 0
    %211 = vmatprep.subr.bf16.mxu0 0
    %212 = vmatpush1.bf16.xpose.msra.mxu0 0
    %213 = vmatprep.subr.bf16.mxu0 0
    %214 = vmatpush1.bf16.xpose.msra.mxu0 0
    %215 = vmatprep.subr.bf16.mxu0 0
    %216 = vmatpush1.bf16.xpose.msra.mxu0 0
    %217 = vmatprep.subr.bf16.mxu0 0
    %218 = vmatpush1.bf16.xpose.msra.mxu0 0
    %219 = vmatprep.subr.bf16.mxu0 0
    %220 = vmatpush1.bf16.xpose.msra.mxu0 0
    %221 = vmatprep.subr.bf16.mxu0 0
    %222 = vmatpush1.bf16.xpose.msra.mxu0 0
    %223 = vmatprep.subr.bf16.mxu0 0
    %224 = vmatpush1.bf16.xpose.msra.mxu0 0
    %225 = vmatprep.mubr.bf16.mxu0 0
    %226 = vmatmul.mubr.bf16.gmra.mrb[0].mxu0 %v191
    %v227 = vpop.f32.mrb[0].mxu0
    %v228 = vadd.f32 0.0, %v227
    %v229 = vpop.f32.mrb[0].mxu0
    %v230 = vpop.f32.mrb[0].mxu0
    %v231 = vpop.f32.mrb[0].mxu0
    %232 = vdwg.mxu0
    %v233 = vld [vmem:[%s6] sm:$0x1]
    %v234 = vld [vmem:[%s1] sm:$0xf]
    %v235 = vunpack.c.l.bf16 %v234
    %237 = vset.pattern.permute.xlu0 0
    %238 = vperm.xlu0 %237, %v183
    %v239 = vpop.permute.xlu0 %238
    %v241 = vlaneseq
    %v242 = vshrl.u32 %v241, 7
    %v243 = vsub.s32 0, %v242
    %v244 = vrot.slane %v228, %v243
    %v245 = vadd.f32 %v239, %v244
    %v246 = vmul.f32 %v245, 0.2
    %v247 = vmax.f32 %v245, %v246
    %v248 = vadd.f32 %v247, %v235
    %v249 = vsel %vm62, %v248, -inf
    %250 = vmax.xlane.f32.xlu0 %v249
    %v251 = vpop.xlane.xlu0 %250
    %v252 = vsub.f32 %v248, %v251
    %v253 = vmul.f32 %v252, 1.442695
    %v254 = vpow.pop %v253
    %v255 = vsel %vm62, %v254, 0.0
    %256 = vadd.xlane.f32.xlu0 %v255
    %v257 = vpop.xlane.xlu0 %256
    %v258 = vpack.c.bf16 %v254, %v254
    %v260 = vsel %vm62, %v258, 0
    %v262 = vsel %vm66, %v111, 0
    %264 = vmatprep.subr.bf16.mxu0 0
    %265 = vmatpush1.bf16.msra.mxu0 %v262
    %266 = vmatprep.subr.bf16.mxu0 0
    %267 = vmatpush1.bf16.msra.mxu0 0
    %268 = vmatprep.subr.bf16.mxu0 0
    %269 = vmatpush1.bf16.msra.mxu0 0
    %270 = vmatprep.subr.bf16.mxu0 0
    %271 = vmatpush1.bf16.msra.mxu0 0
    %272 = vmatprep.subr.bf16.mxu0 0
    %273 = vmatpush1.bf16.msra.mxu0 0
    %274 = vmatprep.subr.bf16.mxu0 0
    %275 = vmatpush1.bf16.msra.mxu0 0
    %276 = vmatprep.subr.bf16.mxu0 0
    %277 = vmatpush1.bf16.msra.mxu0 0
    %278 = vmatprep.subr.bf16.mxu0 0
    %279 = vmatpush1.bf16.msra.mxu0 0
    %280 = vmatprep.subr.bf16.mxu0 0
    %281 = vmatpush1.bf16.msra.mxu0 0
    %282 = vmatprep.subr.bf16.mxu0 0
    %283 = vmatpush1.bf16.msra.mxu0 0
    %284 = vmatprep.subr.bf16.mxu0 0
    %285 = vmatpush1.bf16.msra.mxu0 0
    %286 = vmatprep.subr.bf16.mxu0 0
    %287 = vmatpush1.bf16.msra.mxu0 0
    %288 = vmatprep.subr.bf16.mxu0 0
    %289 = vmatpush1.bf16.msra.mxu0 0
    %290 = vmatprep.subr.bf16.mxu0 0
    %291 = vmatpush1.bf16.msra.mxu0 0
    %292 = vmatprep.subr.bf16.mxu0 0
    %293 = vmatpush1.bf16.msra.mxu0 0
    %294 = vmatprep.subr.bf16.mxu0 0
    %295 = vmatpush1.bf16.msra.mxu0 0
    %296 = vmatprep.mubr.bf16.mxu0 0
    %297 = vmatmul.mubr.bf16.gmra.mrb[0].mxu0 %v260
    %v298 = vpop.f32.mrb[0].mxu0
    %v299 = vadd.f32 0.0, %v298
    %v300 = vpop.f32.mrb[0].mxu0
    %v301 = vpop.f32.mrb[0].mxu0
    %v302 = vpop.f32.mrb[0].mxu0
    %303 = vdwg.mxu0
    %v304 = vrcp.pop %v257
    %v305 = vmul.f32 %v299, %v304
    %v307 = vlaneseq
    %v308 = vshrl.u32 %v307, 7
    %v309 = vsub.s32 0, %v308
    %v310 = vrot.slane %v233, %v309
    %v312 = vadd.f32 %v305, %v310
    %v313 = vmax.f32 %v312, 0.0
    %vm314 = vcmask 130048
    %315 = vst.msk [vmem:[#allocation2] sm:$0xff] %vm314, %v313
    %316 = vset.pattern.permute.xlu0 1
    %317 = vperm.xlu0 %316, %v183
    %v318 = vpop.permute.xlu0 %317
    %v320 = vlaneseq
    %v321 = vshrl.u32 %v320, 7
    %v322 = vsub.s32 1, %v321
    %v323 = vrot.slane %v228, %v322
    %v324 = vadd.f32 %v318, %v323
    %v325 = vmul.f32 %v324, 0.2
    %v326 = vmax.f32 %v324, %v325
    %v327 = vadd.f32 %v326, %v235
    %v328 = vsel %vm62, %v327, -inf
    %329 = vmax.xlane.f32.xlu0 %v328
    %v330 = vpop.xlane.xlu0 %329
    %v331 = vsub.f32 %v327, %v330
    %v332 = vmul.f32 %v331, 1.442695
    %v333 = vpow.pop %v332
    %v334 = vsel %vm62, %v333, 0.0
    %335 = vadd.xlane.f32.xlu0 %v334
    %v336 = vpop.xlane.xlu0 %335
    %v337 = vpack.c.bf16 %v333, %v333
    %339 = vrot.lane.b32.xlu0 %v111, 112
    %v340 = vpop.permute.xlu0 %339
    %v342 = vsel %vm62, %v337, 0
    %v345 = vsel %vm66, %v340, 0
    %347 = vmatprep.subr.bf16.mxu0 0
    %348 = vmatpush1.bf16.msra.mxu0 %v345
    %349 = vmatprep.subr.bf16.mxu0 0
    %350 = vmatpush1.bf16.msra.mxu0 0
    %351 = vmatprep.subr.bf16.mxu0 0
    %352 = vmatpush1.bf16.msra.mxu0 0
    %353 = vmatprep.subr.bf16.mxu0 0
    %354 = vmatpush1.bf16.msra.mxu0 0
    %355 = vmatprep.subr.bf16.mxu0 0
    %356 = vmatpush1.bf16.msra.mxu0 0
    %357 = vmatprep.subr.bf16.mxu0 0
    %358 = vmatpush1.bf16.msra.mxu0 0
    %359 = vmatprep.subr.bf16.mxu0 0
    %360 = vmatpush1.bf16.msra.mxu0 0
    %361 = vmatprep.subr.bf16.mxu0 0
    %362 = vmatpush1.bf16.msra.mxu0 0
    %363 = vmatprep.subr.bf16.mxu0 0
    %364 = vmatpush1.bf16.msra.mxu0 0
    %365 = vmatprep.subr.bf16.mxu0 0
    %366 = vmatpush1.bf16.msra.mxu0 0
    %367 = vmatprep.subr.bf16.mxu0 0
    %368 = vmatpush1.bf16.msra.mxu0 0
    %369 = vmatprep.subr.bf16.mxu0 0
    %370 = vmatpush1.bf16.msra.mxu0 0
    %371 = vmatprep.subr.bf16.mxu0 0
    %372 = vmatpush1.bf16.msra.mxu0 0
    %373 = vmatprep.subr.bf16.mxu0 0
    %374 = vmatpush1.bf16.msra.mxu0 0
    %375 = vmatprep.subr.bf16.mxu0 0
    %376 = vmatpush1.bf16.msra.mxu0 0
    %377 = vmatprep.subr.bf16.mxu0 0
    %378 = vmatpush1.bf16.msra.mxu0 0
    %379 = vmatprep.mubr.bf16.mxu0 0
    %380 = vmatmul.mubr.bf16.gmra.mrb[0].mxu0 %v342
    %v381 = vpop.f32.mrb[0].mxu0
    %v382 = vadd.f32 0.0, %v381
    %v383 = vpop.f32.mrb[0].mxu0
    %v384 = vpop.f32.mrb[0].mxu0
    %v385 = vpop.f32.mrb[0].mxu0
    %386 = vdwg.mxu0
    %v387 = vrcp.pop %v336
    %v388 = vmul.f32 %v382, %v387
    %389 = vrot.lane.b32.xlu0 %v310, 112
    %v390 = vpop.permute.xlu0 %389
    %v392 = vadd.f32 %v388, %v390
    %v393 = vmax.f32 %v392, 0.0
    %395 = vrot.lane.b32.xlu0 %v393, 16
    %v396 = vpop.permute.xlu0 %395
    %vm398 = vcmask 261248
    %399 = vst.msk [vmem:[#allocation2] sm:$0xff] %vm398, %v396
    %400 = vset.pattern.permute.xlu0 2
    %401 = vperm.xlu0 %400, %v183
    %v402 = vpop.permute.xlu0 %401
    %v404 = vlaneseq
    %v405 = vshrl.u32 %v404, 7
    %v406 = vsub.s32 2, %v405
    %v407 = vrot.slane %v228, %v406
    %v408 = vadd.f32 %v402, %v407
    %v409 = vmul.f32 %v408, 0.2
    %v410 = vmax.f32 %v408, %v409
    %v411 = vadd.f32 %v410, %v235
    %v412 = vsel %vm62, %v411, -inf
    %413 = vmax.xlane.f32.xlu0 %v412
    %v414 = vpop.xlane.xlu0 %413
    %v415 = vsub.f32 %v411, %v414
    %v416 = vmul.f32 %v415, 1.442695
    %v417 = vpow.pop %v416
    %v418 = vsel %vm62, %v417, 0.0
    %419 = vadd.xlane.f32.xlu0 %v418
    %v420 = vpop.xlane.xlu0 %419
    %v421 = vpack.c.bf16 %v417, %v417
    %422 = vrot.lane.b32.xlu0 %v111, 96
    %v423 = vpop.permute.xlu0 %422
    %v425 = vsel %vm62, %v421, 0
    %v428 = vsel %vm66, %v423, 0
    %430 = vmatprep.subr.bf16.mxu0 0
    %431 = vmatpush1.bf16.msra.mxu0 %v428
    %432 = vmatprep.subr.bf16.mxu0 0
    %433 = vmatpush1.bf16.msra.mxu0 0
    %434 = vmatprep.subr.bf16.mxu0 0
    %435 = vmatpush1.bf16.msra.mxu0 0
    %436 = vmatprep.subr.bf16.mxu0 0
    %437 = vmatpush1.bf16.msra.mxu0 0
    %438 = vmatprep.subr.bf16.mxu0 0
    %439 = vmatpush1.bf16.msra.mxu0 0
    %440 = vmatprep.subr.bf16.mxu0 0
    %441 = vmatpush1.bf16.msra.mxu0 0
    %442 = vmatprep.subr.bf16.mxu0 0
    %443 = vmatpush1.bf16.msra.mxu0 0
    %444 = vmatprep.subr.bf16.mxu0 0
    %445 = vmatpush1.bf16.msra.mxu0 0
    %446 = vmatprep.subr.bf16.mxu0 0
    %447 = vmatpush1.bf16.msra.mxu0 0
    %448 = vmatprep.subr.bf16.mxu0 0
    %449 = vmatpush1.bf16.msra.mxu0 0
    %450 = vmatprep.subr.bf16.mxu0 0
    %451 = vmatpush1.bf16.msra.mxu0 0
    %452 = vmatprep.subr.bf16.mxu0 0
    %453 = vmatpush1.bf16.msra.mxu0 0
    %454 = vmatprep.subr.bf16.mxu0 0
    %455 = vmatpush1.bf16.msra.mxu0 0
    %456 = vmatprep.subr.bf16.mxu0 0
    %457 = vmatpush1.bf16.msra.mxu0 0
    %458 = vmatprep.subr.bf16.mxu0 0
    %459 = vmatpush1.bf16.msra.mxu0 0
    %460 = vmatprep.subr.bf16.mxu0 0
    %461 = vmatpush1.bf16.msra.mxu0 0
    %462 = vmatprep.mubr.bf16.mxu0 0
    %463 = vmatmul.mubr.bf16.gmra.mrb[0].mxu0 %v425
    %v464 = vpop.f32.mrb[0].mxu0
    %v465 = vadd.f32 0.0, %v464
    %v466 = vpop.f32.mrb[0].mxu0
    %v467 = vpop.f32.mrb[0].mxu0
    %v468 = vpop.f32.mrb[0].mxu0
    %469 = vdwg.mxu0
    %v470 = vrcp.pop %v420
    %v471 = vmul.f32 %v465, %v470
    %472 = vrot.lane.b32.xlu0 %v310, 96
    %v473 = vpop.permute.xlu0 %472
    %v475 = vadd.f32 %v471, %v473
    %v476 = vmax.f32 %v475, 0.0
    %478 = vrot.lane.b32.xlu0 %v476, 32
    %v479 = vpop.permute.xlu0 %478
    %vm481 = vcmask 392448
    %482 = vst.msk [vmem:[#allocation2] sm:$0xff] %vm481, %v479
    %483 = vset.pattern.permute.xlu0 3
    %484 = vperm.xlu0 %483, %v183
    %v485 = vpop.permute.xlu0 %484
    %v487 = vlaneseq
    %v488 = vshrl.u32 %v487, 7
    %v489 = vsub.s32 3, %v488
    %v490 = vrot.slane %v228, %v489
    %v491 = vadd.f32 %v485, %v490
    %v492 = vmul.f32 %v491, 0.2
    %v493 = vmax.f32 %v491, %v492
    %v494 = vadd.f32 %v493, %v235
    %v495 = vsel %vm62, %v494, -inf
    %496 = vmax.xlane.f32.xlu0 %v495
    %v497 = vpop.xlane.xlu0 %496
    %v498 = vsub.f32 %v494, %v497
    %v499 = vmul.f32 %v498, 1.442695
    %v500 = vpow.pop %v499
    %v501 = vsel %vm62, %v500, 0.0
    %502 = vadd.xlane.f32.xlu0 %v501
    %v503 = vpop.xlane.xlu0 %502
    %v504 = vpack.c.bf16 %v500, %v500
    %505 = vrot.lane.b32.xlu0 %v111, 80
    %v506 = vpop.permute.xlu0 %505
    %v508 = vsel %vm62, %v504, 0
    %v511 = vsel %vm66, %v506, 0
    %513 = vmatprep.subr.bf16.mxu0 0
    %514 = vmatpush1.bf16.msra.mxu0 %v511
    %515 = vmatprep.subr.bf16.mxu0 0
    %516 = vmatpush1.bf16.msra.mxu0 0
    %517 = vmatprep.subr.bf16.mxu0 0
    %518 = vmatpush1.bf16.msra.mxu0 0
    %519 = vmatprep.subr.bf16.mxu0 0
    %520 = vmatpush1.bf16.msra.mxu0 0
    %521 = vmatprep.subr.bf16.mxu0 0
    %522 = vmatpush1.bf16.msra.mxu0 0
    %523 = vmatprep.subr.bf16.mxu0 0
    %524 = vmatpush1.bf16.msra.mxu0 0
    %525 = vmatprep.subr.bf16.mxu0 0
    %526 = vmatpush1.bf16.msra.mxu0 0
    %527 = vmatprep.subr.bf16.mxu0 0
    %528 = vmatpush1.bf16.msra.mxu0 0
    %529 = vmatprep.subr.bf16.mxu0 0
    %530 = vmatpush1.bf16.msra.mxu0 0
    %531 = vmatprep.subr.bf16.mxu0 0
    %532 = vmatpush1.bf16.msra.mxu0 0
    %533 = vmatprep.subr.bf16.mxu0 0
    %534 = vmatpush1.bf16.msra.mxu0 0
    %535 = vmatprep.subr.bf16.mxu0 0
    %536 = vmatpush1.bf16.msra.mxu0 0
    %537 = vmatprep.subr.bf16.mxu0 0
    %538 = vmatpush1.bf16.msra.mxu0 0
    %539 = vmatprep.subr.bf16.mxu0 0
    %540 = vmatpush1.bf16.msra.mxu0 0
    %541 = vmatprep.subr.bf16.mxu0 0
    %542 = vmatpush1.bf16.msra.mxu0 0
    %543 = vmatprep.subr.bf16.mxu0 0
    %544 = vmatpush1.bf16.msra.mxu0 0
    %545 = vmatprep.mubr.bf16.mxu0 0
    %546 = vmatmul.mubr.bf16.gmra.mrb[0].mxu0 %v508
    %v547 = vpop.f32.mrb[0].mxu0
    %v548 = vadd.f32 0.0, %v547
    %v549 = vpop.f32.mrb[0].mxu0
    %v550 = vpop.f32.mrb[0].mxu0
    %v551 = vpop.f32.mrb[0].mxu0
    %552 = vdwg.mxu0
    %v553 = vrcp.pop %v503
    %v554 = vmul.f32 %v548, %v553
    %555 = vrot.lane.b32.xlu0 %v310, 80
    %v556 = vpop.permute.xlu0 %555
    %v558 = vadd.f32 %v554, %v556
    %v559 = vmax.f32 %v558, 0.0
    %561 = vrot.lane.b32.xlu0 %v559, 48
    %v562 = vpop.permute.xlu0 %561
    %vm564 = vcmask 523648
    %565 = vst.msk [vmem:[#allocation2] sm:$0xff] %vm564, %v562
    %s566 = scalar_lea.vmem %s1, 4
    %v567 = vld [vmem:[%s566] sm:$0xf]
    %v568 = vunpack.c.l.bf16 %v567
    %570 = vset.pattern.permute.xlu0 0
    %571 = vperm.xlu0 %570, %v186
    %v572 = vpop.permute.xlu0 %571
    %v574 = vadd.f32 %v572, %v244
    %v575 = vmul.f32 %v574, 0.2
    %v576 = vmax.f32 %v574, %v575
    %578 = vrot.lane.b32.xlu0 %v568, 8
    %v579 = vpop.permute.xlu0 %578
    %v581 = vadd.f32 %v576, %v579
    %vm582 = vcmask 130112
    %v583 = vsel %vm582, %v581, -inf
    %584 = vmax.xlane.f32.xlu0 %v583
    %v585 = vpop.xlane.xlu0 %584
    %v586 = vsub.f32 %v581, %v585
    %v587 = vmul.f32 %v586, 1.442695
    %v588 = vpow.pop %v587
    %590 = vrot.lane.b32.xlu0 %v588, 120
    %v591 = vpop.permute.xlu0 %590
    %v593 = vsel %vm62, %v591, 0.0
    %594 = vadd.xlane.f32.xlu0 %v593
    %v595 = vpop.xlane.xlu0 %594
    %v596 = vpack.c.bf16 %v588, %v588
    %598 = vrot.lane.b32.xlu0 %v596, 120
    %v599 = vpop.permute.xlu0 %598
    %v600 = vrot.slane %v111, 4
    %v602 = vsel %vm62, %v599, 0
    %v605 = vsel %vm66, %v600, 0
    %607 = vmatprep.subr.bf16.mxu0 0
    %608 = vmatpush1.bf16.msra.mxu0 %v605
    %609 = vmatprep.subr.bf16.mxu0 0
    %610 = vmatpush1.bf16.msra.mxu0 0
    %611 = vmatprep.subr.bf16.mxu0 0
    %612 = vmatpush1.bf16.msra.mxu0 0
    %613 = vmatprep.subr.bf16.mxu0 0
    %614 = vmatpush1.bf16.msra.mxu0 0
    %615 = vmatprep.subr.bf16.mxu0 0
    %616 = vmatpush1.bf16.msra.mxu0 0
    %617 = vmatprep.subr.bf16.mxu0 0
    %618 = vmatpush1.bf16.msra.mxu0 0
    %619 = vmatprep.subr.bf16.mxu0 0
    %620 = vmatpush1.bf16.msra.mxu0 0
    %621 = vmatprep.subr.bf16.mxu0 0
    %622 = vmatpush1.bf16.msra.mxu0 0
    %623 = vmatprep.subr.bf16.mxu0 0
    %624 = vmatpush1.bf16.msra.mxu0 0
    %625 = vmatprep.subr.bf16.mxu0 0
    %626 = vmatpush1.bf16.msra.mxu0 0
    %627 = vmatprep.subr.bf16.mxu0 0
    %628 = vmatpush1.bf16.msra.mxu0 0
    %629 = vmatprep.subr.bf16.mxu0 0
    %630 = vmatpush1.bf16.msra.mxu0 0
    %631 = vmatprep.subr.bf16.mxu0 0
    %632 = vmatpush1.bf16.msra.mxu0 0
    %633 = vmatprep.subr.bf16.mxu0 0
    %634 = vmatpush1.bf16.msra.mxu0 0
    %635 = vmatprep.subr.bf16.mxu0 0
    %636 = vmatpush1.bf16.msra.mxu0 0
    %637 = vmatprep.subr.bf16.mxu0 0
    %638 = vmatpush1.bf16.msra.mxu0 0
    %639 = vmatprep.mubr.bf16.mxu0 0
    %640 = vmatmul.mubr.bf16.gmra.mrb[0].mxu0 %v602
    %v641 = vpop.f32.mrb[0].mxu0
    %v642 = vadd.f32 0.0, %v641
    %v643 = vpop.f32.mrb[0].mxu0
    %v644 = vpop.f32.mrb[0].mxu0
    %v645 = vpop.f32.mrb[0].mxu0
    %646 = vdwg.mxu0
    %v647 = vrcp.pop %v595
    %v648 = vmul.f32 %v642, %v647
    %v649 = vadd.f32 %v648, %v310
    %v650 = vmax.f32 %v649, 0.0
    %651 = vst.msk [vmem:[#allocation2 + $0x8] sm:$0xff] %vm314, %v650
    %652 = vset.pattern.permute.xlu0 1
    %653 = vperm.xlu0 %652, %v186
    %v654 = vpop.permute.xlu0 %653
    %v656 = vadd.f32 %v654, %v323
    %v657 = vmul.f32 %v656, 0.2
    %v658 = vmax.f32 %v656, %v657
    %v659 = vadd.f32 %v658, %v579
    %v660 = vsel %vm582, %v659, -inf
    %661 = vmax.xlane.f32.xlu0 %v660
    %v662 = vpop.xlane.xlu0 %661
    %v663 = vsub.f32 %v659, %v662
    %v664 = vmul.f32 %v663, 1.442695
    %v665 = vpow.pop %v664
    %667 = vrot.lane.b32.xlu0 %v665, 120
    %v668 = vpop.permute.xlu0 %667
    %v670 = vsel %vm62, %v668, 0.0
    %671 = vadd.xlane.f32.xlu0 %v670
    %v672 = vpop.xlane.xlu0 %671
    %v673 = vpack.c.bf16 %v665, %v665
    %675 = vrot.lane.b32.xlu0 %v673, 120
    %v676 = vpop.permute.xlu0 %675
    %677 = vrot.lane.b32.xlu0 %v600, 112
    %v678 = vpop.permute.xlu0 %677
    %v680 = vsel %vm62, %v676, 0
    %v683 = vsel %vm66, %v678, 0
    %685 = vmatprep.subr.bf16.mxu0 0
    %686 = vmatpush1.bf16.msra.mxu0 %v683
    %687 = vmatprep.subr.bf16.mxu0 0
    %688 = vmatpush1.bf16.msra.mxu0 0
    %689 = vmatprep.subr.bf16.mxu0 0
    %690 = vmatpush1.bf16.msra.mxu0 0
    %691 = vmatprep.subr.bf16.mxu0 0
    %692 = vmatpush1.bf16.msra.mxu0 0
    %693 = vmatprep.subr.bf16.mxu0 0
    %694 = vmatpush1.bf16.msra.mxu0 0
    %695 = vmatprep.subr.bf16.mxu0 0
    %696 = vmatpush1.bf16.msra.mxu0 0
    %697 = vmatprep.subr.bf16.mxu0 0
    %698 = vmatpush1.bf16.msra.mxu0 0
    %699 = vmatprep.subr.bf16.mxu0 0
    %700 = vmatpush1.bf16.msra.mxu0 0
    %701 = vmatprep.subr.bf16.mxu0 0
    %702 = vmatpush1.bf16.msra.mxu0 0
    %703 = vmatprep.subr.bf16.mxu0 0
    %704 = vmatpush1.bf16.msra.mxu0 0
    %705 = vmatprep.subr.bf16.mxu0 0
    %706 = vmatpush1.bf16.msra.mxu0 0
    %707 = vmatprep.subr.bf16.mxu0 0
    %708 = vmatpush1.bf16.msra.mxu0 0
    %709 = vmatprep.subr.bf16.mxu0 0
    %710 = vmatpush1.bf16.msra.mxu0 0
    %711 = vmatprep.subr.bf16.mxu0 0
    %712 = vmatpush1.bf16.msra.mxu0 0
    %713 = vmatprep.subr.bf16.mxu0 0
    %714 = vmatpush1.bf16.msra.mxu0 0
    %715 = vmatprep.subr.bf16.mxu0 0
    %716 = vmatpush1.bf16.msra.mxu0 0
    %717 = vmatprep.mubr.bf16.mxu0 0
    %718 = vmatmul.mubr.bf16.gmra.mrb[0].mxu0 %v680
    %v719 = vpop.f32.mrb[0].mxu0
    %v720 = vadd.f32 0.0, %v719
    %v721 = vpop.f32.mrb[0].mxu0
    %v722 = vpop.f32.mrb[0].mxu0
    %v723 = vpop.f32.mrb[0].mxu0
    %724 = vdwg.mxu0
    %v725 = vrcp.pop %v672
    %v726 = vmul.f32 %v720, %v725
    %v727 = vadd.f32 %v726, %v390
    %v728 = vmax.f32 %v727, 0.0
    %730 = vrot.lane.b32.xlu0 %v728, 16
    %v731 = vpop.permute.xlu0 %730
    %733 = vst.msk [vmem:[#allocation2 + $0x8] sm:$0xff] %vm398, %v731
    %734 = vset.pattern.permute.xlu0 2
    %735 = vperm.xlu0 %734, %v186
    %v736 = vpop.permute.xlu0 %735
    %v738 = vadd.f32 %v736, %v407
    %v739 = vmul.f32 %v738, 0.2
    %v740 = vmax.f32 %v738, %v739
    %v741 = vadd.f32 %v740, %v579
    %v742 = vsel %vm582, %v741, -inf
    %743 = vmax.xlane.f32.xlu0 %v742
    %v744 = vpop.xlane.xlu0 %743
    %v745 = vsub.f32 %v741, %v744
    %v746 = vmul.f32 %v745, 1.442695
    %v747 = vpow.pop %v746
    %749 = vrot.lane.b32.xlu0 %v747, 120
    %v750 = vpop.permute.xlu0 %749
    %v752 = vsel %vm62, %v750, 0.0
    %753 = vadd.xlane.f32.xlu0 %v752
    %v754 = vpop.xlane.xlu0 %753
    %v755 = vpack.c.bf16 %v747, %v747
    %757 = vrot.lane.b32.xlu0 %v755, 120
    %v758 = vpop.permute.xlu0 %757
    %759 = vrot.lane.b32.xlu0 %v600, 96
    %v760 = vpop.permute.xlu0 %759
    %v762 = vsel %vm62, %v758, 0
    %v765 = vsel %vm66, %v760, 0
    %767 = vmatprep.subr.bf16.mxu0 0
    %768 = vmatpush1.bf16.msra.mxu0 %v765
    %769 = vmatprep.subr.bf16.mxu0 0
    %770 = vmatpush1.bf16.msra.mxu0 0
    %771 = vmatprep.subr.bf16.mxu0 0
    %772 = vmatpush1.bf16.msra.mxu0 0
    %773 = vmatprep.subr.bf16.mxu0 0
    %774 = vmatpush1.bf16.msra.mxu0 0
    %775 = vmatprep.subr.bf16.mxu0 0
    %776 = vmatpush1.bf16.msra.mxu0 0
    %777 = vmatprep.subr.bf16.mxu0 0
    %778 = vmatpush1.bf16.msra.mxu0 0
    %779 = vmatprep.subr.bf16.mxu0 0
    %780 = vmatpush1.bf16.msra.mxu0 0
    %781 = vmatprep.subr.bf16.mxu0 0
    %782 = vmatpush1.bf16.msra.mxu0 0
    %783 = vmatprep.subr.bf16.mxu0 0
    %784 = vmatpush1.bf16.msra.mxu0 0
    %785 = vmatprep.subr.bf16.mxu0 0
    %786 = vmatpush1.bf16.msra.mxu0 0
    %787 = vmatprep.subr.bf16.mxu0 0
    %788 = vmatpush1.bf16.msra.mxu0 0
    %789 = vmatprep.subr.bf16.mxu0 0
    %790 = vmatpush1.bf16.msra.mxu0 0
    %791 = vmatprep.subr.bf16.mxu0 0
    %792 = vmatpush1.bf16.msra.mxu0 0
    %793 = vmatprep.subr.bf16.mxu0 0
    %794 = vmatpush1.bf16.msra.mxu0 0
    %795 = vmatprep.subr.bf16.mxu0 0
    %796 = vmatpush1.bf16.msra.mxu0 0
    %797 = vmatprep.subr.bf16.mxu0 0
    %798 = vmatpush1.bf16.msra.mxu0 0
    %799 = vmatprep.mubr.bf16.mxu0 0
    %800 = vmatmul.mubr.bf16.gmra.mrb[0].mxu0 %v762
    %v801 = vpop.f32.mrb[0].mxu0
    %v802 = vadd.f32 0.0, %v801
    %v803 = vpop.f32.mrb[0].mxu0
    %v804 = vpop.f32.mrb[0].mxu0
    %v805 = vpop.f32.mrb[0].mxu0
    %806 = vdwg.mxu0
    %v807 = vrcp.pop %v754
    %v808 = vmul.f32 %v802, %v807
    %v809 = vadd.f32 %v808, %v473
    %v810 = vmax.f32 %v809, 0.0
    %812 = vrot.lane.b32.xlu0 %v810, 32
    %v813 = vpop.permute.xlu0 %812
    %815 = vst.msk [vmem:[#allocation2 + $0x8] sm:$0xff] %vm481, %v813
    %816 = vset.pattern.permute.xlu0 3
    %817 = vperm.xlu0 %816, %v186
    %v818 = vpop.permute.xlu0 %817
    %v820 = vadd.f32 %v818, %v490
    %v821 = vmul.f32 %v820, 0.2
    %v822 = vmax.f32 %v820, %v821
    %v823 = vadd.f32 %v822, %v579
    %v824 = vsel %vm582, %v823, -inf
    %825 = vmax.xlane.f32.xlu0 %v824
    %v826 = vpop.xlane.xlu0 %825
    %v827 = vsub.f32 %v823, %v826
    %v828 = vmul.f32 %v827, 1.442695
    %v829 = vpow.pop %v828
    %831 = vrot.lane.b32.xlu0 %v829, 120
    %v832 = vpop.permute.xlu0 %831
    %v834 = vsel %vm62, %v832, 0.0
    %835 = vadd.xlane.f32.xlu0 %v834
    %v836 = vpop.xlane.xlu0 %835
    %v837 = vpack.c.bf16 %v829, %v829
    %839 = vrot.lane.b32.xlu0 %v837, 120
    %v840 = vpop.permute.xlu0 %839
    %841 = vrot.lane.b32.xlu0 %v600, 80
    %v842 = vpop.permute.xlu0 %841
    %v844 = vsel %vm62, %v840, 0
    %v847 = vsel %vm66, %v842, 0
    %849 = vmatprep.subr.bf16.mxu0 0
    %850 = vmatpush1.bf16.msra.mxu0 %v847
    %851 = vmatprep.subr.bf16.mxu0 0
    %852 = vmatpush1.bf16.msra.mxu0 0
    %853 = vmatprep.subr.bf16.mxu0 0
    %854 = vmatpush1.bf16.msra.mxu0 0
    %855 = vmatprep.subr.bf16.mxu0 0
    %856 = vmatpush1.bf16.msra.mxu0 0
    %857 = vmatprep.subr.bf16.mxu0 0
    %858 = vmatpush1.bf16.msra.mxu0 0
    %859 = vmatprep.subr.bf16.mxu0 0
    %860 = vmatpush1.bf16.msra.mxu0 0
    %861 = vmatprep.subr.bf16.mxu0 0
    %862 = vmatpush1.bf16.msra.mxu0 0
    %863 = vmatprep.subr.bf16.mxu0 0
    %864 = vmatpush1.bf16.msra.mxu0 0
    %865 = vmatprep.subr.bf16.mxu0 0
    %866 = vmatpush1.bf16.msra.mxu0 0
    %867 = vmatprep.subr.bf16.mxu0 0
    %868 = vmatpush1.bf16.msra.mxu0 0
    %869 = vmatprep.subr.bf16.mxu0 0
    %870 = vmatpush1.bf16.msra.mxu0 0
    %871 = vmatprep.subr.bf16.mxu0 0
    %872 = vmatpush1.bf16.msra.mxu0 0
    %873 = vmatprep.subr.bf16.mxu0 0
    %874 = vmatpush1.bf16.msra.mxu0 0
    %875 = vmatprep.subr.bf16.mxu0 0
    %876 = vmatpush1.bf16.msra.mxu0 0
    %877 = vmatprep.subr.bf16.mxu0 0
    %878 = vmatpush1.bf16.msra.mxu0 0
    %879 = vmatprep.subr.bf16.mxu0 0
    %880 = vmatpush1.bf16.msra.mxu0 0
    %881 = vmatprep.mubr.bf16.mxu0 0
    %882 = vmatmul.mubr.bf16.gmra.mrb[0].mxu0 %v844
    %v883 = vpop.f32.mrb[0].mxu0
    %v884 = vadd.f32 0.0, %v883
    %v885 = vpop.f32.mrb[0].mxu0
    %v886 = vpop.f32.mrb[0].mxu0
    %v887 = vpop.f32.mrb[0].mxu0
    %888 = vdwg.mxu0
    %v889 = vrcp.pop %v836
    %v890 = vmul.f32 %v884, %v889
    %v891 = vadd.f32 %v890, %v556
    %v892 = vmax.f32 %v891, 0.0
    %894 = vrot.lane.b32.xlu0 %v892, 48
    %v895 = vpop.permute.xlu0 %894
    %897 = vst.msk [vmem:[#allocation2 + $0x8] sm:$0xff] %vm564, %v895
    %v898 = vld [vmem:[#allocation2] sm:$0xff]
    %v899 = vld [vmem:[#allocation2 + $0x8] sm:$0xff]
    %v900 = vpack.c.bf16 %v899, %v898
    %v901 = vld [vmem:[%s7] sm:$0xf]
    %v902 = vld [vmem:[%s7 + $0x4] sm:$0xf]
    %v903 = vld [vmem:[%s7 + $0x8] sm:$0xf]
    %v904 = vld [vmem:[%s7 + $0xc] sm:$0xf]
    %v905 = vld [vmem:[%s7 + $0x10] sm:$0xf]
    %v906 = vld [vmem:[%s7 + $0x14] sm:$0xf]
    %v907 = vld [vmem:[%s7 + $0x18] sm:$0xf]
    %v908 = vld [vmem:[%s7 + $0x1c] sm:$0xf]
    %v917 = vunpack.c.l.b16 %v901
    %v918 = vunpack.c.l.b16 %v902
    %v919 = vunpack.c.l.b16 %v903
    %v920 = vunpack.c.l.b16 %v904
    %v921 = vunpack.c.l.b16 %v905
    %v922 = vunpack.c.l.b16 %v906
    %v923 = vunpack.c.l.b16 %v907
    %v924 = vunpack.c.l.b16 %v908
    %v925 = vpack.c.b16 %v918, %v917
    %v926 = vpack.c.b16 %v920, %v919
    %v927 = vpack.c.b16 %v922, %v921
    %v928 = vpack.c.b16 %v924, %v923
    %v934 = vsel %vm144, %v900, 0
    %936 = vmatprep.subr.bf16.mxu0 0
    %937 = vmatpush1.bf16.msra.mxu0 %v925
    %938 = vmatprep.subr.bf16.mxu0 0
    %939 = vmatpush1.bf16.msra.mxu0 %v926
    %940 = vmatprep.subr.bf16.mxu0 0
    %941 = vmatpush1.bf16.msra.mxu0 %v927
    %942 = vmatprep.subr.bf16.mxu0 0
    %943 = vmatpush1.bf16.msra.mxu0 %v928
    %944 = vmatprep.subr.bf16.mxu0 0
    %945 = vmatpush1.bf16.msra.mxu0 0
    %946 = vmatprep.subr.bf16.mxu0 0
    %947 = vmatpush1.bf16.msra.mxu0 0
    %948 = vmatprep.subr.bf16.mxu0 0
    %949 = vmatpush1.bf16.msra.mxu0 0
    %950 = vmatprep.subr.bf16.mxu0 0
    %951 = vmatpush1.bf16.msra.mxu0 0
    %952 = vmatprep.subr.bf16.mxu0 0
    %953 = vmatpush1.bf16.msra.mxu0 0
    %954 = vmatprep.subr.bf16.mxu0 0
    %955 = vmatpush1.bf16.msra.mxu0 0
    %956 = vmatprep.subr.bf16.mxu0 0
    %957 = vmatpush1.bf16.msra.mxu0 0
    %958 = vmatprep.subr.bf16.mxu0 0
    %959 = vmatpush1.bf16.msra.mxu0 0
    %960 = vmatprep.subr.bf16.mxu0 0
    %961 = vmatpush1.bf16.msra.mxu0 0
    %962 = vmatprep.subr.bf16.mxu0 0
    %963 = vmatpush1.bf16.msra.mxu0 0
    %964 = vmatprep.subr.bf16.mxu0 0
    %965 = vmatpush1.bf16.msra.mxu0 0
    %966 = vmatprep.subr.bf16.mxu0 0
    %967 = vmatpush1.bf16.msra.mxu0 0
    %968 = vmatprep.mubr.bf16.mxu0 0
    %969 = vmatmul.mubr.bf16.gmra.mrb[0].mxu0 %v934
    %v970 = vpop.f32.mrb[0].mxu0
    %v971 = vadd.f32 0.0, %v970
    %v972 = vpop.f32.mrb[0].mxu0
    %v973 = vpop.f32.mrb[0].mxu0
    %v974 = vadd.f32 0.0, %v973
    %v975 = vpop.f32.mrb[0].mxu0
    %976 = vdwg.mxu0
    %v977 = vpack.c.bf16 %v974, %v971
    %v978 = vld [vmem:[%s9] sm:$0xf]
    %v979 = vld [vmem:[%s9 + $0x4] sm:$0xf]
    %v980 = vld [vmem:[%s9 + $0x8] sm:$0xf]
    %v981 = vld [vmem:[%s9 + $0xc] sm:$0xf]
    %v982 = vld [vmem:[%s9 + $0x10] sm:$0xf]
    %v983 = vld [vmem:[%s9 + $0x14] sm:$0xf]
    %v984 = vld [vmem:[%s9 + $0x18] sm:$0xf]
    %v985 = vld [vmem:[%s9 + $0x1c] sm:$0xf]
    %v994 = vunpack.c.l.b16 %v978
    %v995 = vunpack.c.l.b16 %v979
    %v996 = vunpack.c.l.b16 %v980
    %v997 = vunpack.c.l.b16 %v981
    %v998 = vunpack.c.l.b16 %v982
    %v999 = vunpack.c.l.b16 %v983
    %v1000 = vunpack.c.l.b16 %v984
    %v1001 = vunpack.c.l.b16 %v985
    %v1002 = vpack.c.b16 %v995, %v994
    %v1003 = vpack.c.b16 %v997, %v996
    %v1004 = vpack.c.b16 %v999, %v998
    %v1005 = vpack.c.b16 %v1001, %v1000
    %v1011 = vsel %vm144, %v977, 0
    %1013 = vmatprep.subr.bf16.mxu0 0
    %1014 = vmatpush1.bf16.msra.mxu0 %v1002
    %1015 = vmatprep.subr.bf16.mxu0 0
    %1016 = vmatpush1.bf16.msra.mxu0 %v1003
    %1017 = vmatprep.subr.bf16.mxu0 0
    %1018 = vmatpush1.bf16.msra.mxu0 %v1004
    %1019 = vmatprep.subr.bf16.mxu0 0
    %1020 = vmatpush1.bf16.msra.mxu0 %v1005
    %1021 = vmatprep.subr.bf16.mxu0 0
    %1022 = vmatpush1.bf16.msra.mxu0 0
    %1023 = vmatprep.subr.bf16.mxu0 0
    %1024 = vmatpush1.bf16.msra.mxu0 0
    %1025 = vmatprep.subr.bf16.mxu0 0
    %1026 = vmatpush1.bf16.msra.mxu0 0
    %1027 = vmatprep.subr.bf16.mxu0 0
    %1028 = vmatpush1.bf16.msra.mxu0 0
    %1029 = vmatprep.subr.bf16.mxu0 0
    %1030 = vmatpush1.bf16.msra.mxu0 0
    %1031 = vmatprep.subr.bf16.mxu0 0
    %1032 = vmatpush1.bf16.msra.mxu0 0
    %1033 = vmatprep.subr.bf16.mxu0 0
    %1034 = vmatpush1.bf16.msra.mxu0 0
    %1035 = vmatprep.subr.bf16.mxu0 0
    %1036 = vmatpush1.bf16.msra.mxu0 0
    %1037 = vmatprep.subr.bf16.mxu0 0
    %1038 = vmatpush1.bf16.msra.mxu0 0
    %1039 = vmatprep.subr.bf16.mxu0 0
    %1040 = vmatpush1.bf16.msra.mxu0 0
    %1041 = vmatprep.subr.bf16.mxu0 0
    %1042 = vmatpush1.bf16.msra.mxu0 0
    %1043 = vmatprep.subr.bf16.mxu0 0
    %1044 = vmatpush1.bf16.msra.mxu0 0
    %1045 = vmatprep.mubr.bf16.mxu0 0
    %1046 = vmatmul.mubr.bf16.gmra.mrb[0].mxu0 %v1011
    %v1047 = vpop.f32.mrb[0].mxu0
    %v1048 = vadd.f32 0.0, %v1047
    %v1049 = vpop.f32.mrb[0].mxu0
    %v1050 = vpop.f32.mrb[0].mxu0
    %v1051 = vadd.f32 0.0, %v1050
    %v1052 = vpop.f32.mrb[0].mxu0
    %1053 = vdwg.mxu0
    %v1054 = vld [vmem:[%s8] sm:$0x3]
    %v1056 = vsel %vm144, %v1054, 0
    %1058 = vmatprep.subr.bf16.mxu0 0
    %1059 = vmatpush1.bf16.xpose.msra.mxu0 %v1011
    %1060 = vmatprep.subr.bf16.mxu0 0
    %1061 = vmatpush1.bf16.xpose.msra.mxu0 0
    %1062 = vmatprep.subr.bf16.mxu0 0
    %1063 = vmatpush1.bf16.xpose.msra.mxu0 0
    %1064 = vmatprep.subr.bf16.mxu0 0
    %1065 = vmatpush1.bf16.xpose.msra.mxu0 0
    %1066 = vmatprep.subr.bf16.mxu0 0
    %1067 = vmatpush1.bf16.xpose.msra.mxu0 0
    %1068 = vmatprep.subr.bf16.mxu0 0
    %1069 = vmatpush1.bf16.xpose.msra.mxu0 0
    %1070 = vmatprep.subr.bf16.mxu0 0
    %1071 = vmatpush1.bf16.xpose.msra.mxu0 0
    %1072 = vmatprep.subr.bf16.mxu0 0
    %1073 = vmatpush1.bf16.xpose.msra.mxu0 0
    %1074 = vmatprep.subr.bf16.mxu0 0
    %1075 = vmatpush1.bf16.xpose.msra.mxu0 0
    %1076 = vmatprep.subr.bf16.mxu0 0
    %1077 = vmatpush1.bf16.xpose.msra.mxu0 0
    %1078 = vmatprep.subr.bf16.mxu0 0
    %1079 = vmatpush1.bf16.xpose.msra.mxu0 0
    %1080 = vmatprep.subr.bf16.mxu0 0
    %1081 = vmatpush1.bf16.xpose.msra.mxu0 0
    %1082 = vmatprep.subr.bf16.mxu0 0
    %1083 = vmatpush1.bf16.xpose.msra.mxu0 0
    %1084 = vmatprep.subr.bf16.mxu0 0
    %1085 = vmatpush1.bf16.xpose.msra.mxu0 0
    %1086 = vmatprep.subr.bf16.mxu0 0
    %1087 = vmatpush1.bf16.xpose.msra.mxu0 0
    %1088 = vmatprep.subr.bf16.mxu0 0
    %1089 = vmatpush1.bf16.xpose.msra.mxu0 0
    %1090 = vmatprep.mubr.bf16.mxu0 0
    %1091 = vmatmul.mubr.bf16.gmra.mrb[0].mxu0 %v1056
    %v1092 = vpop.f32.mrb[0].mxu0
    %v1093 = vadd.f32 0.0, %v1092
    %v1094 = vpop.f32.mrb[0].mxu0
    %v1095 = vpop.f32.mrb[0].mxu0
    %v1096 = vpop.f32.mrb[0].mxu0
    %1097 = vdwg.mxu0
    %v1098 = vld [vmem:[%s10] sm:$0x1]
    %v1099 = vld [vmem:[%s1] sm:$0xf]
    %v1100 = vunpack.c.l.bf16 %v1099
    %1102 = vset.pattern.permute.xlu0 0
    %1103 = vperm.xlu0 %1102, %v1048
    %v1104 = vpop.permute.xlu0 %1103
    %v1106 = vlaneseq
    %v1107 = vshrl.u32 %v1106, 7
    %v1108 = vsub.s32 0, %v1107
    %v1109 = vrot.slane %v1093, %v1108
    %v1110 = vadd.f32 %v1104, %v1109
    %v1111 = vmul.f32 %v1110, 0.2
    %v1112 = vmax.f32 %v1110, %v1111
    %v1113 = vadd.f32 %v1112, %v1100
    %v1114 = vsel %vm62, %v1113, -inf
    %1115 = vmax.xlane.f32.xlu0 %v1114
    %v1116 = vpop.xlane.xlu0 %1115
    %v1117 = vsub.f32 %v1113, %v1116
    %v1118 = vmul.f32 %v1117, 1.442695
    %v1119 = vpow.pop %v1118
    %v1120 = vsel %vm62, %v1119, 0.0
    %1121 = vadd.xlane.f32.xlu0 %v1120
    %v1122 = vpop.xlane.xlu0 %1121
    %v1123 = vpack.c.bf16 %v1119, %v1119
    %v1125 = vsel %vm62, %v1123, 0
    %v1127 = vsel %vm66, %v977, 0
    %1129 = vmatprep.subr.bf16.mxu0 0
    %1130 = vmatpush1.bf16.msra.mxu0 %v1127
    %1131 = vmatprep.subr.bf16.mxu0 0
    %1132 = vmatpush1.bf16.msra.mxu0 0
    %1133 = vmatprep.subr.bf16.mxu0 0
    %1134 = vmatpush1.bf16.msra.mxu0 0
    %1135 = vmatprep.subr.bf16.mxu0 0
    %1136 = vmatpush1.bf16.msra.mxu0 0
    %1137 = vmatprep.subr.bf16.mxu0 0
    %1138 = vmatpush1.bf16.msra.mxu0 0
    %1139 = vmatprep.subr.bf16.mxu0 0
    %1140 = vmatpush1.bf16.msra.mxu0 0
    %1141 = vmatprep.subr.bf16.mxu0 0
    %1142 = vmatpush1.bf16.msra.mxu0 0
    %1143 = vmatprep.subr.bf16.mxu0 0
    %1144 = vmatpush1.bf16.msra.mxu0 0
    %1145 = vmatprep.subr.bf16.mxu0 0
    %1146 = vmatpush1.bf16.msra.mxu0 0
    %1147 = vmatprep.subr.bf16.mxu0 0
    %1148 = vmatpush1.bf16.msra.mxu0 0
    %1149 = vmatprep.subr.bf16.mxu0 0
    %1150 = vmatpush1.bf16.msra.mxu0 0
    %1151 = vmatprep.subr.bf16.mxu0 0
    %1152 = vmatpush1.bf16.msra.mxu0 0
    %1153 = vmatprep.subr.bf16.mxu0 0
    %1154 = vmatpush1.bf16.msra.mxu0 0
    %1155 = vmatprep.subr.bf16.mxu0 0
    %1156 = vmatpush1.bf16.msra.mxu0 0
    %1157 = vmatprep.subr.bf16.mxu0 0
    %1158 = vmatpush1.bf16.msra.mxu0 0
    %1159 = vmatprep.subr.bf16.mxu0 0
    %1160 = vmatpush1.bf16.msra.mxu0 0
    %1161 = vmatprep.mubr.bf16.mxu0 0
    %1162 = vmatmul.mubr.bf16.gmra.mrb[0].mxu0 %v1125
    %v1163 = vpop.f32.mrb[0].mxu0
    %v1164 = vadd.f32 0.0, %v1163
    %v1165 = vpop.f32.mrb[0].mxu0
    %v1166 = vpop.f32.mrb[0].mxu0
    %v1167 = vpop.f32.mrb[0].mxu0
    %1168 = vdwg.mxu0
    %v1169 = vrcp.pop %v1122
    %v1170 = vmul.f32 %v1164, %v1169
    %v1172 = vlaneseq
    %v1173 = vshrl.u32 %v1172, 7
    %v1174 = vsub.s32 0, %v1173
    %v1175 = vrot.slane %v1098, %v1174
    %v1177 = vadd.f32 %v1170, %v1175
    %v1178 = vmax.f32 %v1177, 0.0
    %1179 = vst.msk [vmem:[#allocation2] sm:$0xff] %vm314, %v1178
    %1180 = vset.pattern.permute.xlu0 1
    %1181 = vperm.xlu0 %1180, %v1048
    %v1182 = vpop.permute.xlu0 %1181
    %v1184 = vlaneseq
    %v1185 = vshrl.u32 %v1184, 7
    %v1186 = vsub.s32 1, %v1185
    %v1187 = vrot.slane %v1093, %v1186
    %v1188 = vadd.f32 %v1182, %v1187
    %v1189 = vmul.f32 %v1188, 0.2
    %v1190 = vmax.f32 %v1188, %v1189
    %v1191 = vadd.f32 %v1190, %v1100
    %v1192 = vsel %vm62, %v1191, -inf
    %1193 = vmax.xlane.f32.xlu0 %v1192
    %v1194 = vpop.xlane.xlu0 %1193
    %v1195 = vsub.f32 %v1191, %v1194
    %v1196 = vmul.f32 %v1195, 1.442695
    %v1197 = vpow.pop %v1196
    %v1198 = vsel %vm62, %v1197, 0.0
    %1199 = vadd.xlane.f32.xlu0 %v1198
    %v1200 = vpop.xlane.xlu0 %1199
    %v1201 = vpack.c.bf16 %v1197, %v1197
    %1203 = vrot.lane.b32.xlu0 %v977, 112
    %v1204 = vpop.permute.xlu0 %1203
    %v1206 = vsel %vm62, %v1201, 0
    %v1209 = vsel %vm66, %v1204, 0
    %1211 = vmatprep.subr.bf16.mxu0 0
    %1212 = vmatpush1.bf16.msra.mxu0 %v1209
    %1213 = vmatprep.subr.bf16.mxu0 0
    %1214 = vmatpush1.bf16.msra.mxu0 0
    %1215 = vmatprep.subr.bf16.mxu0 0
    %1216 = vmatpush1.bf16.msra.mxu0 0
    %1217 = vmatprep.subr.bf16.mxu0 0
    %1218 = vmatpush1.bf16.msra.mxu0 0
    %1219 = vmatprep.subr.bf16.mxu0 0
    %1220 = vmatpush1.bf16.msra.mxu0 0
    %1221 = vmatprep.subr.bf16.mxu0 0
    %1222 = vmatpush1.bf16.msra.mxu0 0
    %1223 = vmatprep.subr.bf16.mxu0 0
    %1224 = vmatpush1.bf16.msra.mxu0 0
    %1225 = vmatprep.subr.bf16.mxu0 0
    %1226 = vmatpush1.bf16.msra.mxu0 0
    %1227 = vmatprep.subr.bf16.mxu0 0
    %1228 = vmatpush1.bf16.msra.mxu0 0
    %1229 = vmatprep.subr.bf16.mxu0 0
    %1230 = vmatpush1.bf16.msra.mxu0 0
    %1231 = vmatprep.subr.bf16.mxu0 0
    %1232 = vmatpush1.bf16.msra.mxu0 0
    %1233 = vmatprep.subr.bf16.mxu0 0
    %1234 = vmatpush1.bf16.msra.mxu0 0
    %1235 = vmatprep.subr.bf16.mxu0 0
    %1236 = vmatpush1.bf16.msra.mxu0 0
    %1237 = vmatprep.subr.bf16.mxu0 0
    %1238 = vmatpush1.bf16.msra.mxu0 0
    %1239 = vmatprep.subr.bf16.mxu0 0
    %1240 = vmatpush1.bf16.msra.mxu0 0
    %1241 = vmatprep.subr.bf16.mxu0 0
    %1242 = vmatpush1.bf16.msra.mxu0 0
    %1243 = vmatprep.mubr.bf16.mxu0 0
    %1244 = vmatmul.mubr.bf16.gmra.mrb[0].mxu0 %v1206
    %v1245 = vpop.f32.mrb[0].mxu0
    %v1246 = vadd.f32 0.0, %v1245
    %v1247 = vpop.f32.mrb[0].mxu0
    %v1248 = vpop.f32.mrb[0].mxu0
    %v1249 = vpop.f32.mrb[0].mxu0
    %1250 = vdwg.mxu0
    %v1251 = vrcp.pop %v1200
    %v1252 = vmul.f32 %v1246, %v1251
    %1253 = vrot.lane.b32.xlu0 %v1175, 112
    %v1254 = vpop.permute.xlu0 %1253
    %v1256 = vadd.f32 %v1252, %v1254
    %v1257 = vmax.f32 %v1256, 0.0
    %1259 = vrot.lane.b32.xlu0 %v1257, 16
    %v1260 = vpop.permute.xlu0 %1259
    %1262 = vst.msk [vmem:[#allocation2] sm:$0xff] %vm398, %v1260
    %1263 = vset.pattern.permute.xlu0 2
    %1264 = vperm.xlu0 %1263, %v1048
    %v1265 = vpop.permute.xlu0 %1264
    %v1267 = vlaneseq
    %v1268 = vshrl.u32 %v1267, 7
    %v1269 = vsub.s32 2, %v1268
    %v1270 = vrot.slane %v1093, %v1269
    %v1271 = vadd.f32 %v1265, %v1270
    %v1272 = vmul.f32 %v1271, 0.2
    %v1273 = vmax.f32 %v1271, %v1272
    %v1274 = vadd.f32 %v1273, %v1100
    %v1275 = vsel %vm62, %v1274, -inf
    %1276 = vmax.xlane.f32.xlu0 %v1275
    %v1277 = vpop.xlane.xlu0 %1276
    %v1278 = vsub.f32 %v1274, %v1277
    %v1279 = vmul.f32 %v1278, 1.442695
    %v1280 = vpow.pop %v1279
    %v1281 = vsel %vm62, %v1280, 0.0
    %1282 = vadd.xlane.f32.xlu0 %v1281
    %v1283 = vpop.xlane.xlu0 %1282
    %v1284 = vpack.c.bf16 %v1280, %v1280
    %1285 = vrot.lane.b32.xlu0 %v977, 96
    %v1286 = vpop.permute.xlu0 %1285
    %v1288 = vsel %vm62, %v1284, 0
    %v1291 = vsel %vm66, %v1286, 0
    %1293 = vmatprep.subr.bf16.mxu0 0
    %1294 = vmatpush1.bf16.msra.mxu0 %v1291
    %1295 = vmatprep.subr.bf16.mxu0 0
    %1296 = vmatpush1.bf16.msra.mxu0 0
    %1297 = vmatprep.subr.bf16.mxu0 0
    %1298 = vmatpush1.bf16.msra.mxu0 0
    %1299 = vmatprep.subr.bf16.mxu0 0
    %1300 = vmatpush1.bf16.msra.mxu0 0
    %1301 = vmatprep.subr.bf16.mxu0 0
    %1302 = vmatpush1.bf16.msra.mxu0 0
    %1303 = vmatprep.subr.bf16.mxu0 0
    %1304 = vmatpush1.bf16.msra.mxu0 0
    %1305 = vmatprep.subr.bf16.mxu0 0
    %1306 = vmatpush1.bf16.msra.mxu0 0
    %1307 = vmatprep.subr.bf16.mxu0 0
    %1308 = vmatpush1.bf16.msra.mxu0 0
    %1309 = vmatprep.subr.bf16.mxu0 0
    %1310 = vmatpush1.bf16.msra.mxu0 0
    %1311 = vmatprep.subr.bf16.mxu0 0
    %1312 = vmatpush1.bf16.msra.mxu0 0
    %1313 = vmatprep.subr.bf16.mxu0 0
    %1314 = vmatpush1.bf16.msra.mxu0 0
    %1315 = vmatprep.subr.bf16.mxu0 0
    %1316 = vmatpush1.bf16.msra.mxu0 0
    %1317 = vmatprep.subr.bf16.mxu0 0
    %1318 = vmatpush1.bf16.msra.mxu0 0
    %1319 = vmatprep.subr.bf16.mxu0 0
    %1320 = vmatpush1.bf16.msra.mxu0 0
    %1321 = vmatprep.subr.bf16.mxu0 0
    %1322 = vmatpush1.bf16.msra.mxu0 0
    %1323 = vmatprep.subr.bf16.mxu0 0
    %1324 = vmatpush1.bf16.msra.mxu0 0
    %1325 = vmatprep.mubr.bf16.mxu0 0
    %1326 = vmatmul.mubr.bf16.gmra.mrb[0].mxu0 %v1288
    %v1327 = vpop.f32.mrb[0].mxu0
    %v1328 = vadd.f32 0.0, %v1327
    %v1329 = vpop.f32.mrb[0].mxu0
    %v1330 = vpop.f32.mrb[0].mxu0
    %v1331 = vpop.f32.mrb[0].mxu0
    %1332 = vdwg.mxu0
    %v1333 = vrcp.pop %v1283
    %v1334 = vmul.f32 %v1328, %v1333
    %1335 = vrot.lane.b32.xlu0 %v1175, 96
    %v1336 = vpop.permute.xlu0 %1335
    %v1338 = vadd.f32 %v1334, %v1336
    %v1339 = vmax.f32 %v1338, 0.0
    %1341 = vrot.lane.b32.xlu0 %v1339, 32
    %v1342 = vpop.permute.xlu0 %1341
    %1344 = vst.msk [vmem:[#allocation2] sm:$0xff] %vm481, %v1342
    %1345 = vset.pattern.permute.xlu0 3
    %1346 = vperm.xlu0 %1345, %v1048
    %v1347 = vpop.permute.xlu0 %1346
    %v1349 = vlaneseq
    %v1350 = vshrl.u32 %v1349, 7
    %v1351 = vsub.s32 3, %v1350
    %v1352 = vrot.slane %v1093, %v1351
    %v1353 = vadd.f32 %v1347, %v1352
    %v1354 = vmul.f32 %v1353, 0.2
    %v1355 = vmax.f32 %v1353, %v1354
    %v1356 = vadd.f32 %v1355, %v1100
    %v1357 = vsel %vm62, %v1356, -inf
    %1358 = vmax.xlane.f32.xlu0 %v1357
    %v1359 = vpop.xlane.xlu0 %1358
    %v1360 = vsub.f32 %v1356, %v1359
    %v1361 = vmul.f32 %v1360, 1.442695
    %v1362 = vpow.pop %v1361
    %v1363 = vsel %vm62, %v1362, 0.0
    %1364 = vadd.xlane.f32.xlu0 %v1363
    %v1365 = vpop.xlane.xlu0 %1364
    %v1366 = vpack.c.bf16 %v1362, %v1362
    %1367 = vrot.lane.b32.xlu0 %v977, 80
    %v1368 = vpop.permute.xlu0 %1367
    %v1370 = vsel %vm62, %v1366, 0
    %v1373 = vsel %vm66, %v1368, 0
    %1375 = vmatprep.subr.bf16.mxu0 0
    %1376 = vmatpush1.bf16.msra.mxu0 %v1373
    %1377 = vmatprep.subr.bf16.mxu0 0
    %1378 = vmatpush1.bf16.msra.mxu0 0
    %1379 = vmatprep.subr.bf16.mxu0 0
    %1380 = vmatpush1.bf16.msra.mxu0 0
    %1381 = vmatprep.subr.bf16.mxu0 0
    %1382 = vmatpush1.bf16.msra.mxu0 0
    %1383 = vmatprep.subr.bf16.mxu0 0
    %1384 = vmatpush1.bf16.msra.mxu0 0
    %1385 = vmatprep.subr.bf16.mxu0 0
    %1386 = vmatpush1.bf16.msra.mxu0 0
    %1387 = vmatprep.subr.bf16.mxu0 0
    %1388 = vmatpush1.bf16.msra.mxu0 0
    %1389 = vmatprep.subr.bf16.mxu0 0
    %1390 = vmatpush1.bf16.msra.mxu0 0
    %1391 = vmatprep.subr.bf16.mxu0 0
    %1392 = vmatpush1.bf16.msra.mxu0 0
    %1393 = vmatprep.subr.bf16.mxu0 0
    %1394 = vmatpush1.bf16.msra.mxu0 0
    %1395 = vmatprep.subr.bf16.mxu0 0
    %1396 = vmatpush1.bf16.msra.mxu0 0
    %1397 = vmatprep.subr.bf16.mxu0 0
    %1398 = vmatpush1.bf16.msra.mxu0 0
    %1399 = vmatprep.subr.bf16.mxu0 0
    %1400 = vmatpush1.bf16.msra.mxu0 0
    %1401 = vmatprep.subr.bf16.mxu0 0
    %1402 = vmatpush1.bf16.msra.mxu0 0
    %1403 = vmatprep.subr.bf16.mxu0 0
    %1404 = vmatpush1.bf16.msra.mxu0 0
    %1405 = vmatprep.subr.bf16.mxu0 0
    %1406 = vmatpush1.bf16.msra.mxu0 0
    %1407 = vmatprep.mubr.bf16.mxu0 0
    %1408 = vmatmul.mubr.bf16.gmra.mrb[0].mxu0 %v1370
    %v1409 = vpop.f32.mrb[0].mxu0
    %v1410 = vadd.f32 0.0, %v1409
    %v1411 = vpop.f32.mrb[0].mxu0
    %v1412 = vpop.f32.mrb[0].mxu0
    %v1413 = vpop.f32.mrb[0].mxu0
    %1414 = vdwg.mxu0
    %v1415 = vrcp.pop %v1365
    %v1416 = vmul.f32 %v1410, %v1415
    %1417 = vrot.lane.b32.xlu0 %v1175, 80
    %v1418 = vpop.permute.xlu0 %1417
    %v1420 = vadd.f32 %v1416, %v1418
    %v1421 = vmax.f32 %v1420, 0.0
    %1423 = vrot.lane.b32.xlu0 %v1421, 48
    %v1424 = vpop.permute.xlu0 %1423
    %1426 = vst.msk [vmem:[#allocation2] sm:$0xff] %vm564, %v1424
    %v1427 = vld [vmem:[%s566] sm:$0xf]
    %v1428 = vunpack.c.l.bf16 %v1427
    %1430 = vset.pattern.permute.xlu0 0
    %1431 = vperm.xlu0 %1430, %v1051
    %v1432 = vpop.permute.xlu0 %1431
    %v1434 = vadd.f32 %v1432, %v1109
    %v1435 = vmul.f32 %v1434, 0.2
    %v1436 = vmax.f32 %v1434, %v1435
    %1438 = vrot.lane.b32.xlu0 %v1428, 8
    %v1439 = vpop.permute.xlu0 %1438
    %v1441 = vadd.f32 %v1436, %v1439
    %v1442 = vsel %vm582, %v1441, -inf
    %1443 = vmax.xlane.f32.xlu0 %v1442
    %v1444 = vpop.xlane.xlu0 %1443
    %v1445 = vsub.f32 %v1441, %v1444
    %v1446 = vmul.f32 %v1445, 1.442695
    %v1447 = vpow.pop %v1446
    %1449 = vrot.lane.b32.xlu0 %v1447, 120
    %v1450 = vpop.permute.xlu0 %1449
    %v1452 = vsel %vm62, %v1450, 0.0
    %1453 = vadd.xlane.f32.xlu0 %v1452
    %v1454 = vpop.xlane.xlu0 %1453
    %v1455 = vpack.c.bf16 %v1447, %v1447
    %1457 = vrot.lane.b32.xlu0 %v1455, 120
    %v1458 = vpop.permute.xlu0 %1457
    %v1459 = vrot.slane %v977, 4
    %v1461 = vsel %vm62, %v1458, 0
    %v1464 = vsel %vm66, %v1459, 0
    %1466 = vmatprep.subr.bf16.mxu0 0
    %1467 = vmatpush1.bf16.msra.mxu0 %v1464
    %1468 = vmatprep.subr.bf16.mxu0 0
    %1469 = vmatpush1.bf16.msra.mxu0 0
    %1470 = vmatprep.subr.bf16.mxu0 0
    %1471 = vmatpush1.bf16.msra.mxu0 0
    %1472 = vmatprep.subr.bf16.mxu0 0
    %1473 = vmatpush1.bf16.msra.mxu0 0
    %1474 = vmatprep.subr.bf16.mxu0 0
    %1475 = vmatpush1.bf16.msra.mxu0 0
    %1476 = vmatprep.subr.bf16.mxu0 0
    %1477 = vmatpush1.bf16.msra.mxu0 0
    %1478 = vmatprep.subr.bf16.mxu0 0
    %1479 = vmatpush1.bf16.msra.mxu0 0
    %1480 = vmatprep.subr.bf16.mxu0 0
    %1481 = vmatpush1.bf16.msra.mxu0 0
    %1482 = vmatprep.subr.bf16.mxu0 0
    %1483 = vmatpush1.bf16.msra.mxu0 0
    %1484 = vmatprep.subr.bf16.mxu0 0
    %1485 = vmatpush1.bf16.msra.mxu0 0
    %1486 = vmatprep.subr.bf16.mxu0 0
    %1487 = vmatpush1.bf16.msra.mxu0 0
    %1488 = vmatprep.subr.bf16.mxu0 0
    %1489 = vmatpush1.bf16.msra.mxu0 0
    %1490 = vmatprep.subr.bf16.mxu0 0
    %1491 = vmatpush1.bf16.msra.mxu0 0
    %1492 = vmatprep.subr.bf16.mxu0 0
    %1493 = vmatpush1.bf16.msra.mxu0 0
    %1494 = vmatprep.subr.bf16.mxu0 0
    %1495 = vmatpush1.bf16.msra.mxu0 0
    %1496 = vmatprep.subr.bf16.mxu0 0
    %1497 = vmatpush1.bf16.msra.mxu0 0
    %1498 = vmatprep.mubr.bf16.mxu0 0
    %1499 = vmatmul.mubr.bf16.gmra.mrb[0].mxu0 %v1461
    %v1500 = vpop.f32.mrb[0].mxu0
    %v1501 = vadd.f32 0.0, %v1500
    %v1502 = vpop.f32.mrb[0].mxu0
    %v1503 = vpop.f32.mrb[0].mxu0
    %v1504 = vpop.f32.mrb[0].mxu0
    %1505 = vdwg.mxu0
    %v1506 = vrcp.pop %v1454
    %v1507 = vmul.f32 %v1501, %v1506
    %v1508 = vadd.f32 %v1507, %v1175
    %v1509 = vmax.f32 %v1508, 0.0
    %1510 = vst.msk [vmem:[#allocation2 + $0x8] sm:$0xff] %vm314, %v1509
    %1511 = vset.pattern.permute.xlu0 1
    %1512 = vperm.xlu0 %1511, %v1051
    %v1513 = vpop.permute.xlu0 %1512
    %v1515 = vadd.f32 %v1513, %v1187
    %v1516 = vmul.f32 %v1515, 0.2
    %v1517 = vmax.f32 %v1515, %v1516
    %v1518 = vadd.f32 %v1517, %v1439
    %v1519 = vsel %vm582, %v1518, -inf
    %1520 = vmax.xlane.f32.xlu0 %v1519
    %v1521 = vpop.xlane.xlu0 %1520
    %v1522 = vsub.f32 %v1518, %v1521
    %v1523 = vmul.f32 %v1522, 1.442695
    %v1524 = vpow.pop %v1523
    %1526 = vrot.lane.b32.xlu0 %v1524, 120
    %v1527 = vpop.permute.xlu0 %1526
    %v1529 = vsel %vm62, %v1527, 0.0
    %1530 = vadd.xlane.f32.xlu0 %v1529
    %v1531 = vpop.xlane.xlu0 %1530
    %v1532 = vpack.c.bf16 %v1524, %v1524
    %1534 = vrot.lane.b32.xlu0 %v1532, 120
    %v1535 = vpop.permute.xlu0 %1534
    %1536 = vrot.lane.b32.xlu0 %v1459, 112
    %v1537 = vpop.permute.xlu0 %1536
    %v1539 = vsel %vm62, %v1535, 0
    %v1542 = vsel %vm66, %v1537, 0
    %1544 = vmatprep.subr.bf16.mxu0 0
    %1545 = vmatpush1.bf16.msra.mxu0 %v1542
    %1546 = vmatprep.subr.bf16.mxu0 0
    %1547 = vmatpush1.bf16.msra.mxu0 0
    %1548 = vmatprep.subr.bf16.mxu0 0
    %1549 = vmatpush1.bf16.msra.mxu0 0
    %1550 = vmatprep.subr.bf16.mxu0 0
    %1551 = vmatpush1.bf16.msra.mxu0 0
    %1552 = vmatprep.subr.bf16.mxu0 0
    %1553 = vmatpush1.bf16.msra.mxu0 0
    %1554 = vmatprep.subr.bf16.mxu0 0
    %1555 = vmatpush1.bf16.msra.mxu0 0
    %1556 = vmatprep.subr.bf16.mxu0 0
    %1557 = vmatpush1.bf16.msra.mxu0 0
    %1558 = vmatprep.subr.bf16.mxu0 0
    %1559 = vmatpush1.bf16.msra.mxu0 0
    %1560 = vmatprep.subr.bf16.mxu0 0
    %1561 = vmatpush1.bf16.msra.mxu0 0
    %1562 = vmatprep.subr.bf16.mxu0 0
    %1563 = vmatpush1.bf16.msra.mxu0 0
    %1564 = vmatprep.subr.bf16.mxu0 0
    %1565 = vmatpush1.bf16.msra.mxu0 0
    %1566 = vmatprep.subr.bf16.mxu0 0
    %1567 = vmatpush1.bf16.msra.mxu0 0
    %1568 = vmatprep.subr.bf16.mxu0 0
    %1569 = vmatpush1.bf16.msra.mxu0 0
    %1570 = vmatprep.subr.bf16.mxu0 0
    %1571 = vmatpush1.bf16.msra.mxu0 0
    %1572 = vmatprep.subr.bf16.mxu0 0
    %1573 = vmatpush1.bf16.msra.mxu0 0
    %1574 = vmatprep.subr.bf16.mxu0 0
    %1575 = vmatpush1.bf16.msra.mxu0 0
    %1576 = vmatprep.mubr.bf16.mxu0 0
    %1577 = vmatmul.mubr.bf16.gmra.mrb[0].mxu0 %v1539
    %v1578 = vpop.f32.mrb[0].mxu0
    %v1579 = vadd.f32 0.0, %v1578
    %v1580 = vpop.f32.mrb[0].mxu0
    %v1581 = vpop.f32.mrb[0].mxu0
    %v1582 = vpop.f32.mrb[0].mxu0
    %1583 = vdwg.mxu0
    %v1584 = vrcp.pop %v1531
    %v1585 = vmul.f32 %v1579, %v1584
    %v1586 = vadd.f32 %v1585, %v1254
    %v1587 = vmax.f32 %v1586, 0.0
    %1589 = vrot.lane.b32.xlu0 %v1587, 16
    %v1590 = vpop.permute.xlu0 %1589
    %1592 = vst.msk [vmem:[#allocation2 + $0x8] sm:$0xff] %vm398, %v1590
    %1593 = vset.pattern.permute.xlu0 2
    %1594 = vperm.xlu0 %1593, %v1051
    %v1595 = vpop.permute.xlu0 %1594
    %v1597 = vadd.f32 %v1595, %v1270
    %v1598 = vmul.f32 %v1597, 0.2
    %v1599 = vmax.f32 %v1597, %v1598
    %v1600 = vadd.f32 %v1599, %v1439
    %v1601 = vsel %vm582, %v1600, -inf
    %1602 = vmax.xlane.f32.xlu0 %v1601
    %v1603 = vpop.xlane.xlu0 %1602
    %v1604 = vsub.f32 %v1600, %v1603
    %v1605 = vmul.f32 %v1604, 1.442695
    %v1606 = vpow.pop %v1605
    %1608 = vrot.lane.b32.xlu0 %v1606, 120
    %v1609 = vpop.permute.xlu0 %1608
    %v1611 = vsel %vm62, %v1609, 0.0
    %1612 = vadd.xlane.f32.xlu0 %v1611
    %v1613 = vpop.xlane.xlu0 %1612
    %v1614 = vpack.c.bf16 %v1606, %v1606
    %1616 = vrot.lane.b32.xlu0 %v1614, 120
    %v1617 = vpop.permute.xlu0 %1616
    %1618 = vrot.lane.b32.xlu0 %v1459, 96
    %v1619 = vpop.permute.xlu0 %1618
    %v1621 = vsel %vm62, %v1617, 0
    %v1624 = vsel %vm66, %v1619, 0
    %1626 = vmatprep.subr.bf16.mxu0 0
    %1627 = vmatpush1.bf16.msra.mxu0 %v1624
    %1628 = vmatprep.subr.bf16.mxu0 0
    %1629 = vmatpush1.bf16.msra.mxu0 0
    %1630 = vmatprep.subr.bf16.mxu0 0
    %1631 = vmatpush1.bf16.msra.mxu0 0
    %1632 = vmatprep.subr.bf16.mxu0 0
    %1633 = vmatpush1.bf16.msra.mxu0 0
    %1634 = vmatprep.subr.bf16.mxu0 0
    %1635 = vmatpush1.bf16.msra.mxu0 0
    %1636 = vmatprep.subr.bf16.mxu0 0
    %1637 = vmatpush1.bf16.msra.mxu0 0
    %1638 = vmatprep.subr.bf16.mxu0 0
    %1639 = vmatpush1.bf16.msra.mxu0 0
    %1640 = vmatprep.subr.bf16.mxu0 0
    %1641 = vmatpush1.bf16.msra.mxu0 0
    %1642 = vmatprep.subr.bf16.mxu0 0
    %1643 = vmatpush1.bf16.msra.mxu0 0
    %1644 = vmatprep.subr.bf16.mxu0 0
    %1645 = vmatpush1.bf16.msra.mxu0 0
    %1646 = vmatprep.subr.bf16.mxu0 0
    %1647 = vmatpush1.bf16.msra.mxu0 0
    %1648 = vmatprep.subr.bf16.mxu0 0
    %1649 = vmatpush1.bf16.msra.mxu0 0
    %1650 = vmatprep.subr.bf16.mxu0 0
    %1651 = vmatpush1.bf16.msra.mxu0 0
    %1652 = vmatprep.subr.bf16.mxu0 0
    %1653 = vmatpush1.bf16.msra.mxu0 0
    %1654 = vmatprep.subr.bf16.mxu0 0
    %1655 = vmatpush1.bf16.msra.mxu0 0
    %1656 = vmatprep.subr.bf16.mxu0 0
    %1657 = vmatpush1.bf16.msra.mxu0 0
    %1658 = vmatprep.mubr.bf16.mxu0 0
    %1659 = vmatmul.mubr.bf16.gmra.mrb[0].mxu0 %v1621
    %v1660 = vpop.f32.mrb[0].mxu0
    %v1661 = vadd.f32 0.0, %v1660
    %v1662 = vpop.f32.mrb[0].mxu0
    %v1663 = vpop.f32.mrb[0].mxu0
    %v1664 = vpop.f32.mrb[0].mxu0
    %1665 = vdwg.mxu0
    %v1666 = vrcp.pop %v1613
    %v1667 = vmul.f32 %v1661, %v1666
    %v1668 = vadd.f32 %v1667, %v1336
    %v1669 = vmax.f32 %v1668, 0.0
    %1671 = vrot.lane.b32.xlu0 %v1669, 32
    %v1672 = vpop.permute.xlu0 %1671
    %1674 = vst.msk [vmem:[#allocation2 + $0x8] sm:$0xff] %vm481, %v1672
    %1675 = vset.pattern.permute.xlu0 3
    %1676 = vperm.xlu0 %1675, %v1051
    %v1677 = vpop.permute.xlu0 %1676
    %v1679 = vadd.f32 %v1677, %v1352
    %v1680 = vmul.f32 %v1679, 0.2
    %v1681 = vmax.f32 %v1679, %v1680
    %v1682 = vadd.f32 %v1681, %v1439
    %v1683 = vsel %vm582, %v1682, -inf
    %1684 = vmax.xlane.f32.xlu0 %v1683
    %v1685 = vpop.xlane.xlu0 %1684
    %v1686 = vsub.f32 %v1682, %v1685
    %v1687 = vmul.f32 %v1686, 1.442695
    %v1688 = vpow.pop %v1687
    %1690 = vrot.lane.b32.xlu0 %v1688, 120
    %v1691 = vpop.permute.xlu0 %1690
    %v1693 = vsel %vm62, %v1691, 0.0
    %1694 = vadd.xlane.f32.xlu0 %v1693
    %v1695 = vpop.xlane.xlu0 %1694
    %v1696 = vpack.c.bf16 %v1688, %v1688
    %1698 = vrot.lane.b32.xlu0 %v1696, 120
    %v1699 = vpop.permute.xlu0 %1698
    %1700 = vrot.lane.b32.xlu0 %v1459, 80
    %v1701 = vpop.permute.xlu0 %1700
    %v1703 = vsel %vm62, %v1699, 0
    %v1706 = vsel %vm66, %v1701, 0
    %1708 = vmatprep.subr.bf16.mxu0 0
    %1709 = vmatpush1.bf16.msra.mxu0 %v1706
    %1710 = vmatprep.subr.bf16.mxu0 0
    %1711 = vmatpush1.bf16.msra.mxu0 0
    %1712 = vmatprep.subr.bf16.mxu0 0
    %1713 = vmatpush1.bf16.msra.mxu0 0
    %1714 = vmatprep.subr.bf16.mxu0 0
    %1715 = vmatpush1.bf16.msra.mxu0 0
    %1716 = vmatprep.subr.bf16.mxu0 0
    %1717 = vmatpush1.bf16.msra.mxu0 0
    %1718 = vmatprep.subr.bf16.mxu0 0
    %1719 = vmatpush1.bf16.msra.mxu0 0
    %1720 = vmatprep.subr.bf16.mxu0 0
    %1721 = vmatpush1.bf16.msra.mxu0 0
    %1722 = vmatprep.subr.bf16.mxu0 0
    %1723 = vmatpush1.bf16.msra.mxu0 0
    %1724 = vmatprep.subr.bf16.mxu0 0
    %1725 = vmatpush1.bf16.msra.mxu0 0
    %1726 = vmatprep.subr.bf16.mxu0 0
    %1727 = vmatpush1.bf16.msra.mxu0 0
    %1728 = vmatprep.subr.bf16.mxu0 0
    %1729 = vmatpush1.bf16.msra.mxu0 0
    %1730 = vmatprep.subr.bf16.mxu0 0
    %1731 = vmatpush1.bf16.msra.mxu0 0
    %1732 = vmatprep.subr.bf16.mxu0 0
    %1733 = vmatpush1.bf16.msra.mxu0 0
    %1734 = vmatprep.subr.bf16.mxu0 0
    %1735 = vmatpush1.bf16.msra.mxu0 0
    %1736 = vmatprep.subr.bf16.mxu0 0
    %1737 = vmatpush1.bf16.msra.mxu0 0
    %1738 = vmatprep.subr.bf16.mxu0 0
    %1739 = vmatpush1.bf16.msra.mxu0 0
    %1740 = vmatprep.mubr.bf16.mxu0 0
    %1741 = vmatmul.mubr.bf16.gmra.mrb[0].mxu0 %v1703
    %v1742 = vpop.f32.mrb[0].mxu0
    %v1743 = vadd.f32 0.0, %v1742
    %v1744 = vpop.f32.mrb[0].mxu0
    %v1745 = vpop.f32.mrb[0].mxu0
    %v1746 = vpop.f32.mrb[0].mxu0
    %1747 = vdwg.mxu0
    %v1748 = vrcp.pop %v1695
    %v1749 = vmul.f32 %v1743, %v1748
    %v1750 = vadd.f32 %v1749, %v1418
    %v1751 = vmax.f32 %v1750, 0.0
    %1753 = vrot.lane.b32.xlu0 %v1751, 48
    %v1754 = vpop.permute.xlu0 %1753
    %1756 = vst.msk [vmem:[#allocation2 + $0x8] sm:$0xff] %vm564, %v1754
    %v1757 = vld [vmem:[#allocation2] sm:$0xff]
    %v1758 = vld [vmem:[#allocation2 + $0x8] sm:$0xff]
    %v1759 = vpack.c.bf16 %v1758, %v1757
    %v1760 = vld [vmem:[%s11] sm:$0xf]
    %v1761 = vld [vmem:[%s11 + $0x4] sm:$0xf]
    %v1762 = vld [vmem:[%s11 + $0x8] sm:$0xf]
    %v1763 = vld [vmem:[%s11 + $0xc] sm:$0xf]
    %v1764 = vld [vmem:[%s11 + $0x10] sm:$0xf]
    %v1765 = vld [vmem:[%s11 + $0x14] sm:$0xf]
    %v1766 = vld [vmem:[%s11 + $0x18] sm:$0xf]
    %v1767 = vld [vmem:[%s11 + $0x1c] sm:$0xf]
    %v1776 = vunpack.c.l.b16 %v1760
    %v1777 = vunpack.c.l.b16 %v1761
    %v1778 = vunpack.c.l.b16 %v1762
    %v1779 = vunpack.c.l.b16 %v1763
    %v1780 = vunpack.c.l.b16 %v1764
    %v1781 = vunpack.c.l.b16 %v1765
    %v1782 = vunpack.c.l.b16 %v1766
    %v1783 = vunpack.c.l.b16 %v1767
    %v1784 = vpack.c.b16 %v1777, %v1776
    %v1785 = vpack.c.b16 %v1779, %v1778
    %v1786 = vpack.c.b16 %v1781, %v1780
    %v1787 = vpack.c.b16 %v1783, %v1782
    %v1793 = vsel %vm144, %v1759, 0
    %1795 = vmatprep.subr.bf16.mxu0 0
    %1796 = vmatpush1.bf16.msra.mxu0 %v1784
    %1797 = vmatprep.subr.bf16.mxu0 0
    %1798 = vmatpush1.bf16.msra.mxu0 %v1785
    %1799 = vmatprep.subr.bf16.mxu0 0
    %1800 = vmatpush1.bf16.msra.mxu0 %v1786
    %1801 = vmatprep.subr.bf16.mxu0 0
    %1802 = vmatpush1.bf16.msra.mxu0 %v1787
    %1803 = vmatprep.subr.bf16.mxu0 0
    %1804 = vmatpush1.bf16.msra.mxu0 0
    %1805 = vmatprep.subr.bf16.mxu0 0
    %1806 = vmatpush1.bf16.msra.mxu0 0
    %1807 = vmatprep.subr.bf16.mxu0 0
    %1808 = vmatpush1.bf16.msra.mxu0 0
    %1809 = vmatprep.subr.bf16.mxu0 0
    %1810 = vmatpush1.bf16.msra.mxu0 0
    %1811 = vmatprep.subr.bf16.mxu0 0
    %1812 = vmatpush1.bf16.msra.mxu0 0
    %1813 = vmatprep.subr.bf16.mxu0 0
    %1814 = vmatpush1.bf16.msra.mxu0 0
    %1815 = vmatprep.subr.bf16.mxu0 0
    %1816 = vmatpush1.bf16.msra.mxu0 0
    %1817 = vmatprep.subr.bf16.mxu0 0
    %1818 = vmatpush1.bf16.msra.mxu0 0
    %1819 = vmatprep.subr.bf16.mxu0 0
    %1820 = vmatpush1.bf16.msra.mxu0 0
    %1821 = vmatprep.subr.bf16.mxu0 0
    %1822 = vmatpush1.bf16.msra.mxu0 0
    %1823 = vmatprep.subr.bf16.mxu0 0
    %1824 = vmatpush1.bf16.msra.mxu0 0
    %1825 = vmatprep.subr.bf16.mxu0 0
    %1826 = vmatpush1.bf16.msra.mxu0 0
    %1827 = vmatprep.mubr.bf16.mxu0 0
    %1828 = vmatmul.mubr.bf16.gmra.mrb[0].mxu0 %v1793
    %v1829 = vpop.f32.mrb[0].mxu0
    %v1830 = vadd.f32 0.0, %v1829
    %v1831 = vpop.f32.mrb[0].mxu0
    %v1832 = vpop.f32.mrb[0].mxu0
    %v1833 = vadd.f32 0.0, %v1832
    %v1834 = vpop.f32.mrb[0].mxu0
    %1835 = vdwg.mxu0
    %v1836 = vpack.c.bf16 %v1833, %v1830
    %v1837 = vld [vmem:[%s13] sm:$0xf]
    %v1838 = vld [vmem:[%s13 + $0x4] sm:$0xf]
    %v1839 = vld [vmem:[%s13 + $0x8] sm:$0xf]
    %v1840 = vld [vmem:[%s13 + $0xc] sm:$0xf]
    %v1841 = vld [vmem:[%s13 + $0x10] sm:$0xf]
    %v1842 = vld [vmem:[%s13 + $0x14] sm:$0xf]
    %v1843 = vld [vmem:[%s13 + $0x18] sm:$0xf]
    %v1844 = vld [vmem:[%s13 + $0x1c] sm:$0xf]
    %v1853 = vunpack.c.l.b16 %v1837
    %v1854 = vunpack.c.l.b16 %v1838
    %v1855 = vunpack.c.l.b16 %v1839
    %v1856 = vunpack.c.l.b16 %v1840
    %v1857 = vunpack.c.l.b16 %v1841
    %v1858 = vunpack.c.l.b16 %v1842
    %v1859 = vunpack.c.l.b16 %v1843
    %v1860 = vunpack.c.l.b16 %v1844
    %v1861 = vpack.c.b16 %v1854, %v1853
    %v1862 = vpack.c.b16 %v1856, %v1855
    %v1863 = vpack.c.b16 %v1858, %v1857
    %v1864 = vpack.c.b16 %v1860, %v1859
    %v1870 = vsel %vm144, %v1836, 0
    %1872 = vmatprep.subr.bf16.mxu0 0
    %1873 = vmatpush1.bf16.msra.mxu0 %v1861
    %1874 = vmatprep.subr.bf16.mxu0 0
    %1875 = vmatpush1.bf16.msra.mxu0 %v1862
    %1876 = vmatprep.subr.bf16.mxu0 0
    %1877 = vmatpush1.bf16.msra.mxu0 %v1863
    %1878 = vmatprep.subr.bf16.mxu0 0
    %1879 = vmatpush1.bf16.msra.mxu0 %v1864
    %1880 = vmatprep.subr.bf16.mxu0 0
    %1881 = vmatpush1.bf16.msra.mxu0 0
    %1882 = vmatprep.subr.bf16.mxu0 0
    %1883 = vmatpush1.bf16.msra.mxu0 0
    %1884 = vmatprep.subr.bf16.mxu0 0
    %1885 = vmatpush1.bf16.msra.mxu0 0
    %1886 = vmatprep.subr.bf16.mxu0 0
    %1887 = vmatpush1.bf16.msra.mxu0 0
    %1888 = vmatprep.subr.bf16.mxu0 0
    %1889 = vmatpush1.bf16.msra.mxu0 0
    %1890 = vmatprep.subr.bf16.mxu0 0
    %1891 = vmatpush1.bf16.msra.mxu0 0
    %1892 = vmatprep.subr.bf16.mxu0 0
    %1893 = vmatpush1.bf16.msra.mxu0 0
    %1894 = vmatprep.subr.bf16.mxu0 0
    %1895 = vmatpush1.bf16.msra.mxu0 0
    %1896 = vmatprep.subr.bf16.mxu0 0
    %1897 = vmatpush1.bf16.msra.mxu0 0
    %1898 = vmatprep.subr.bf16.mxu0 0
    %1899 = vmatpush1.bf16.msra.mxu0 0
    %1900 = vmatprep.subr.bf16.mxu0 0
    %1901 = vmatpush1.bf16.msra.mxu0 0
    %1902 = vmatprep.subr.bf16.mxu0 0
    %1903 = vmatpush1.bf16.msra.mxu0 0
    %1904 = vmatprep.mubr.bf16.mxu0 0
    %1905 = vmatmul.mubr.bf16.gmra.mrb[0].mxu0 %v1870
    %v1906 = vpop.f32.mrb[0].mxu0
    %v1907 = vadd.f32 0.0, %v1906
    %v1908 = vpop.f32.mrb[0].mxu0
    %v1909 = vpop.f32.mrb[0].mxu0
    %v1910 = vadd.f32 0.0, %v1909
    %v1911 = vpop.f32.mrb[0].mxu0
    %1912 = vdwg.mxu0
    %v1913 = vld [vmem:[%s12] sm:$0x3]
    %v1915 = vsel %vm144, %v1913, 0
    %1917 = vmatprep.subr.bf16.mxu0 0
    %1918 = vmatpush1.bf16.xpose.msra.mxu0 %v1870
    %1919 = vmatprep.subr.bf16.mxu0 0
    %1920 = vmatpush1.bf16.xpose.msra.mxu0 0
    %1921 = vmatprep.subr.bf16.mxu0 0
    %1922 = vmatpush1.bf16.xpose.msra.mxu0 0
    %1923 = vmatprep.subr.bf16.mxu0 0
    %1924 = vmatpush1.bf16.xpose.msra.mxu0 0
    %1925 = vmatprep.subr.bf16.mxu0 0
    %1926 = vmatpush1.bf16.xpose.msra.mxu0 0
    %1927 = vmatprep.subr.bf16.mxu0 0
    %1928 = vmatpush1.bf16.xpose.msra.mxu0 0
    %1929 = vmatprep.subr.bf16.mxu0 0
    %1930 = vmatpush1.bf16.xpose.msra.mxu0 0
    %1931 = vmatprep.subr.bf16.mxu0 0
    %1932 = vmatpush1.bf16.xpose.msra.mxu0 0
    %1933 = vmatprep.subr.bf16.mxu0 0
    %1934 = vmatpush1.bf16.xpose.msra.mxu0 0
    %1935 = vmatprep.subr.bf16.mxu0 0
    %1936 = vmatpush1.bf16.xpose.msra.mxu0 0
    %1937 = vmatprep.subr.bf16.mxu0 0
    %1938 = vmatpush1.bf16.xpose.msra.mxu0 0
    %1939 = vmatprep.subr.bf16.mxu0 0
    %1940 = vmatpush1.bf16.xpose.msra.mxu0 0
    %1941 = vmatprep.subr.bf16.mxu0 0
    %1942 = vmatpush1.bf16.xpose.msra.mxu0 0
    %1943 = vmatprep.subr.bf16.mxu0 0
    %1944 = vmatpush1.bf16.xpose.msra.mxu0 0
    %1945 = vmatprep.subr.bf16.mxu0 0
    %1946 = vmatpush1.bf16.xpose.msra.mxu0 0
    %1947 = vmatprep.subr.bf16.mxu0 0
    %1948 = vmatpush1.bf16.xpose.msra.mxu0 0
    %1949 = vmatprep.mubr.bf16.mxu0 0
    %1950 = vmatmul.mubr.bf16.gmra.mrb[0].mxu0 %v1915
    %v1951 = vpop.f32.mrb[0].mxu0
    %v1952 = vadd.f32 0.0, %v1951
    %v1953 = vpop.f32.mrb[0].mxu0
    %v1954 = vpop.f32.mrb[0].mxu0
    %v1955 = vpop.f32.mrb[0].mxu0
    %1956 = vdwg.mxu0
    %v1957 = vld [vmem:[%s14] sm:$0x1]
    %v1958 = vld [vmem:[%s1] sm:$0xf]
    %v1959 = vunpack.c.l.bf16 %v1958
    %1961 = vset.pattern.permute.xlu0 0
    %1962 = vperm.xlu0 %1961, %v1907
    %v1963 = vpop.permute.xlu0 %1962
    %v1965 = vlaneseq
    %v1966 = vshrl.u32 %v1965, 7
    %v1967 = vsub.s32 0, %v1966
    %v1968 = vrot.slane %v1952, %v1967
    %v1969 = vadd.f32 %v1963, %v1968
    %v1970 = vmul.f32 %v1969, 0.2
    %v1971 = vmax.f32 %v1969, %v1970
    %v1972 = vadd.f32 %v1971, %v1959
    %v1973 = vsel %vm62, %v1972, -inf
    %1974 = vmax.xlane.f32.xlu0 %v1973
    %v1975 = vpop.xlane.xlu0 %1974
    %v1976 = vsub.f32 %v1972, %v1975
    %v1977 = vmul.f32 %v1976, 1.442695
    %v1978 = vpow.pop %v1977
    %v1979 = vsel %vm62, %v1978, 0.0
    %1980 = vadd.xlane.f32.xlu0 %v1979
    %v1981 = vpop.xlane.xlu0 %1980
    %v1982 = vpack.c.bf16 %v1978, %v1978
    %v1984 = vsel %vm62, %v1982, 0
    %v1986 = vsel %vm66, %v1836, 0
    %1988 = vmatprep.subr.bf16.mxu0 0
    %1989 = vmatpush1.bf16.msra.mxu0 %v1986
    %1990 = vmatprep.subr.bf16.mxu0 0
    %1991 = vmatpush1.bf16.msra.mxu0 0
    %1992 = vmatprep.subr.bf16.mxu0 0
    %1993 = vmatpush1.bf16.msra.mxu0 0
    %1994 = vmatprep.subr.bf16.mxu0 0
    %1995 = vmatpush1.bf16.msra.mxu0 0
    %1996 = vmatprep.subr.bf16.mxu0 0
    %1997 = vmatpush1.bf16.msra.mxu0 0
    %1998 = vmatprep.subr.bf16.mxu0 0
    %1999 = vmatpush1.bf16.msra.mxu0 0
    %2000 = vmatprep.subr.bf16.mxu0 0
    %2001 = vmatpush1.bf16.msra.mxu0 0
    %2002 = vmatprep.subr.bf16.mxu0 0
    %2003 = vmatpush1.bf16.msra.mxu0 0
    %2004 = vmatprep.subr.bf16.mxu0 0
    %2005 = vmatpush1.bf16.msra.mxu0 0
    %2006 = vmatprep.subr.bf16.mxu0 0
    %2007 = vmatpush1.bf16.msra.mxu0 0
    %2008 = vmatprep.subr.bf16.mxu0 0
    %2009 = vmatpush1.bf16.msra.mxu0 0
    %2010 = vmatprep.subr.bf16.mxu0 0
    %2011 = vmatpush1.bf16.msra.mxu0 0
    %2012 = vmatprep.subr.bf16.mxu0 0
    %2013 = vmatpush1.bf16.msra.mxu0 0
    %2014 = vmatprep.subr.bf16.mxu0 0
    %2015 = vmatpush1.bf16.msra.mxu0 0
    %2016 = vmatprep.subr.bf16.mxu0 0
    %2017 = vmatpush1.bf16.msra.mxu0 0
    %2018 = vmatprep.subr.bf16.mxu0 0
    %2019 = vmatpush1.bf16.msra.mxu0 0
    %2020 = vmatprep.mubr.bf16.mxu0 0
    %2021 = vmatmul.mubr.bf16.gmra.mrb[0].mxu0 %v1984
    %v2022 = vpop.f32.mrb[0].mxu0
    %v2023 = vadd.f32 0.0, %v2022
    %v2024 = vpop.f32.mrb[0].mxu0
    %v2025 = vpop.f32.mrb[0].mxu0
    %v2026 = vpop.f32.mrb[0].mxu0
    %2027 = vdwg.mxu0
    %v2028 = vrcp.pop %v1981
    %v2029 = vmul.f32 %v2023, %v2028
    %v2031 = vlaneseq
    %v2032 = vshrl.u32 %v2031, 7
    %v2033 = vsub.s32 0, %v2032
    %v2034 = vrot.slane %v1957, %v2033
    %v2036 = vadd.f32 %v2029, %v2034
    %v2037 = vmax.f32 %v2036, 0.0
    %2038 = vst.msk [vmem:[#allocation2] sm:$0xff] %vm314, %v2037
    %2039 = vset.pattern.permute.xlu0 1
    %2040 = vperm.xlu0 %2039, %v1907
    %v2041 = vpop.permute.xlu0 %2040
    %v2043 = vlaneseq
    %v2044 = vshrl.u32 %v2043, 7
    %v2045 = vsub.s32 1, %v2044
    %v2046 = vrot.slane %v1952, %v2045
    %v2047 = vadd.f32 %v2041, %v2046
    %v2048 = vmul.f32 %v2047, 0.2
    %v2049 = vmax.f32 %v2047, %v2048
    %v2050 = vadd.f32 %v2049, %v1959
    %v2051 = vsel %vm62, %v2050, -inf
    %2052 = vmax.xlane.f32.xlu0 %v2051
    %v2053 = vpop.xlane.xlu0 %2052
    %v2054 = vsub.f32 %v2050, %v2053
    %v2055 = vmul.f32 %v2054, 1.442695
    %v2056 = vpow.pop %v2055
    %v2057 = vsel %vm62, %v2056, 0.0
    %2058 = vadd.xlane.f32.xlu0 %v2057
    %v2059 = vpop.xlane.xlu0 %2058
    %v2060 = vpack.c.bf16 %v2056, %v2056
    %2062 = vrot.lane.b32.xlu0 %v1836, 112
    %v2063 = vpop.permute.xlu0 %2062
    %v2065 = vsel %vm62, %v2060, 0
    %v2068 = vsel %vm66, %v2063, 0
    %2070 = vmatprep.subr.bf16.mxu0 0
    %2071 = vmatpush1.bf16.msra.mxu0 %v2068
    %2072 = vmatprep.subr.bf16.mxu0 0
    %2073 = vmatpush1.bf16.msra.mxu0 0
    %2074 = vmatprep.subr.bf16.mxu0 0
    %2075 = vmatpush1.bf16.msra.mxu0 0
    %2076 = vmatprep.subr.bf16.mxu0 0
    %2077 = vmatpush1.bf16.msra.mxu0 0
    %2078 = vmatprep.subr.bf16.mxu0 0
    %2079 = vmatpush1.bf16.msra.mxu0 0
    %2080 = vmatprep.subr.bf16.mxu0 0
    %2081 = vmatpush1.bf16.msra.mxu0 0
    %2082 = vmatprep.subr.bf16.mxu0 0
    %2083 = vmatpush1.bf16.msra.mxu0 0
    %2084 = vmatprep.subr.bf16.mxu0 0
    %2085 = vmatpush1.bf16.msra.mxu0 0
    %2086 = vmatprep.subr.bf16.mxu0 0
    %2087 = vmatpush1.bf16.msra.mxu0 0
    %2088 = vmatprep.subr.bf16.mxu0 0
    %2089 = vmatpush1.bf16.msra.mxu0 0
    %2090 = vmatprep.subr.bf16.mxu0 0
    %2091 = vmatpush1.bf16.msra.mxu0 0
    %2092 = vmatprep.subr.bf16.mxu0 0
    %2093 = vmatpush1.bf16.msra.mxu0 0
    %2094 = vmatprep.subr.bf16.mxu0 0
    %2095 = vmatpush1.bf16.msra.mxu0 0
    %2096 = vmatprep.subr.bf16.mxu0 0
    %2097 = vmatpush1.bf16.msra.mxu0 0
    %2098 = vmatprep.subr.bf16.mxu0 0
    %2099 = vmatpush1.bf16.msra.mxu0 0
    %2100 = vmatprep.subr.bf16.mxu0 0
    %2101 = vmatpush1.bf16.msra.mxu0 0
    %2102 = vmatprep.mubr.bf16.mxu0 0
    %2103 = vmatmul.mubr.bf16.gmra.mrb[0].mxu0 %v2065
    %v2104 = vpop.f32.mrb[0].mxu0
    %v2105 = vadd.f32 0.0, %v2104
    %v2106 = vpop.f32.mrb[0].mxu0
    %v2107 = vpop.f32.mrb[0].mxu0
    %v2108 = vpop.f32.mrb[0].mxu0
    %2109 = vdwg.mxu0
    %v2110 = vrcp.pop %v2059
    %v2111 = vmul.f32 %v2105, %v2110
    %2112 = vrot.lane.b32.xlu0 %v2034, 112
    %v2113 = vpop.permute.xlu0 %2112
    %v2115 = vadd.f32 %v2111, %v2113
    %v2116 = vmax.f32 %v2115, 0.0
    %2118 = vrot.lane.b32.xlu0 %v2116, 16
    %v2119 = vpop.permute.xlu0 %2118
    %2121 = vst.msk [vmem:[#allocation2] sm:$0xff] %vm398, %v2119
    %2122 = vset.pattern.permute.xlu0 2
    %2123 = vperm.xlu0 %2122, %v1907
    %v2124 = vpop.permute.xlu0 %2123
    %v2126 = vlaneseq
    %v2127 = vshrl.u32 %v2126, 7
    %v2128 = vsub.s32 2, %v2127
    %v2129 = vrot.slane %v1952, %v2128
    %v2130 = vadd.f32 %v2124, %v2129
    %v2131 = vmul.f32 %v2130, 0.2
    %v2132 = vmax.f32 %v2130, %v2131
    %v2133 = vadd.f32 %v2132, %v1959
    %v2134 = vsel %vm62, %v2133, -inf
    %2135 = vmax.xlane.f32.xlu0 %v2134
    %v2136 = vpop.xlane.xlu0 %2135
    %v2137 = vsub.f32 %v2133, %v2136
    %v2138 = vmul.f32 %v2137, 1.442695
    %v2139 = vpow.pop %v2138
    %v2140 = vsel %vm62, %v2139, 0.0
    %2141 = vadd.xlane.f32.xlu0 %v2140
    %v2142 = vpop.xlane.xlu0 %2141
    %v2143 = vpack.c.bf16 %v2139, %v2139
    %2144 = vrot.lane.b32.xlu0 %v1836, 96
    %v2145 = vpop.permute.xlu0 %2144
    %v2147 = vsel %vm62, %v2143, 0
    %v2150 = vsel %vm66, %v2145, 0
    %2152 = vmatprep.subr.bf16.mxu0 0
    %2153 = vmatpush1.bf16.msra.mxu0 %v2150
    %2154 = vmatprep.subr.bf16.mxu0 0
    %2155 = vmatpush1.bf16.msra.mxu0 0
    %2156 = vmatprep.subr.bf16.mxu0 0
    %2157 = vmatpush1.bf16.msra.mxu0 0
    %2158 = vmatprep.subr.bf16.mxu0 0
    %2159 = vmatpush1.bf16.msra.mxu0 0
    %2160 = vmatprep.subr.bf16.mxu0 0
    %2161 = vmatpush1.bf16.msra.mxu0 0
    %2162 = vmatprep.subr.bf16.mxu0 0
    %2163 = vmatpush1.bf16.msra.mxu0 0
    %2164 = vmatprep.subr.bf16.mxu0 0
    %2165 = vmatpush1.bf16.msra.mxu0 0
    %2166 = vmatprep.subr.bf16.mxu0 0
    %2167 = vmatpush1.bf16.msra.mxu0 0
    %2168 = vmatprep.subr.bf16.mxu0 0
    %2169 = vmatpush1.bf16.msra.mxu0 0
    %2170 = vmatprep.subr.bf16.mxu0 0
    %2171 = vmatpush1.bf16.msra.mxu0 0
    %2172 = vmatprep.subr.bf16.mxu0 0
    %2173 = vmatpush1.bf16.msra.mxu0 0
    %2174 = vmatprep.subr.bf16.mxu0 0
    %2175 = vmatpush1.bf16.msra.mxu0 0
    %2176 = vmatprep.subr.bf16.mxu0 0
    %2177 = vmatpush1.bf16.msra.mxu0 0
    %2178 = vmatprep.subr.bf16.mxu0 0
    %2179 = vmatpush1.bf16.msra.mxu0 0
    %2180 = vmatprep.subr.bf16.mxu0 0
    %2181 = vmatpush1.bf16.msra.mxu0 0
    %2182 = vmatprep.subr.bf16.mxu0 0
    %2183 = vmatpush1.bf16.msra.mxu0 0
    %2184 = vmatprep.mubr.bf16.mxu0 0
    %2185 = vmatmul.mubr.bf16.gmra.mrb[0].mxu0 %v2147
    %v2186 = vpop.f32.mrb[0].mxu0
    %v2187 = vadd.f32 0.0, %v2186
    %v2188 = vpop.f32.mrb[0].mxu0
    %v2189 = vpop.f32.mrb[0].mxu0
    %v2190 = vpop.f32.mrb[0].mxu0
    %2191 = vdwg.mxu0
    %v2192 = vrcp.pop %v2142
    %v2193 = vmul.f32 %v2187, %v2192
    %2194 = vrot.lane.b32.xlu0 %v2034, 96
    %v2195 = vpop.permute.xlu0 %2194
    %v2197 = vadd.f32 %v2193, %v2195
    %v2198 = vmax.f32 %v2197, 0.0
    %2200 = vrot.lane.b32.xlu0 %v2198, 32
    %v2201 = vpop.permute.xlu0 %2200
    %2203 = vst.msk [vmem:[#allocation2] sm:$0xff] %vm481, %v2201
    %2204 = vset.pattern.permute.xlu0 3
    %2205 = vperm.xlu0 %2204, %v1907
    %v2206 = vpop.permute.xlu0 %2205
    %v2208 = vlaneseq
    %v2209 = vshrl.u32 %v2208, 7
    %v2210 = vsub.s32 3, %v2209
    %v2211 = vrot.slane %v1952, %v2210
    %v2212 = vadd.f32 %v2206, %v2211
    %v2213 = vmul.f32 %v2212, 0.2
    %v2214 = vmax.f32 %v2212, %v2213
    %v2215 = vadd.f32 %v2214, %v1959
    %v2216 = vsel %vm62, %v2215, -inf
    %2217 = vmax.xlane.f32.xlu0 %v2216
    %v2218 = vpop.xlane.xlu0 %2217
    %v2219 = vsub.f32 %v2215, %v2218
    %v2220 = vmul.f32 %v2219, 1.442695
    %v2221 = vpow.pop %v2220
    %v2222 = vsel %vm62, %v2221, 0.0
    %2223 = vadd.xlane.f32.xlu0 %v2222
    %v2224 = vpop.xlane.xlu0 %2223
    %v2225 = vpack.c.bf16 %v2221, %v2221
    %2226 = vrot.lane.b32.xlu0 %v1836, 80
    %v2227 = vpop.permute.xlu0 %2226
    %v2229 = vsel %vm62, %v2225, 0
    %v2232 = vsel %vm66, %v2227, 0
    %2234 = vmatprep.subr.bf16.mxu0 0
    %2235 = vmatpush1.bf16.msra.mxu0 %v2232
    %2236 = vmatprep.subr.bf16.mxu0 0
    %2237 = vmatpush1.bf16.msra.mxu0 0
    %2238 = vmatprep.subr.bf16.mxu0 0
    %2239 = vmatpush1.bf16.msra.mxu0 0
    %2240 = vmatprep.subr.bf16.mxu0 0
    %2241 = vmatpush1.bf16.msra.mxu0 0
    %2242 = vmatprep.subr.bf16.mxu0 0
    %2243 = vmatpush1.bf16.msra.mxu0 0
    %2244 = vmatprep.subr.bf16.mxu0 0
    %2245 = vmatpush1.bf16.msra.mxu0 0
    %2246 = vmatprep.subr.bf16.mxu0 0
    %2247 = vmatpush1.bf16.msra.mxu0 0
    %2248 = vmatprep.subr.bf16.mxu0 0
    %2249 = vmatpush1.bf16.msra.mxu0 0
    %2250 = vmatprep.subr.bf16.mxu0 0
    %2251 = vmatpush1.bf16.msra.mxu0 0
    %2252 = vmatprep.subr.bf16.mxu0 0
    %2253 = vmatpush1.bf16.msra.mxu0 0
    %2254 = vmatprep.subr.bf16.mxu0 0
    %2255 = vmatpush1.bf16.msra.mxu0 0
    %2256 = vmatprep.subr.bf16.mxu0 0
    %2257 = vmatpush1.bf16.msra.mxu0 0
    %2258 = vmatprep.subr.bf16.mxu0 0
    %2259 = vmatpush1.bf16.msra.mxu0 0
    %2260 = vmatprep.subr.bf16.mxu0 0
    %2261 = vmatpush1.bf16.msra.mxu0 0
    %2262 = vmatprep.subr.bf16.mxu0 0
    %2263 = vmatpush1.bf16.msra.mxu0 0
    %2264 = vmatprep.subr.bf16.mxu0 0
    %2265 = vmatpush1.bf16.msra.mxu0 0
    %2266 = vmatprep.mubr.bf16.mxu0 0
    %2267 = vmatmul.mubr.bf16.gmra.mrb[0].mxu0 %v2229
    %v2268 = vpop.f32.mrb[0].mxu0
    %v2269 = vadd.f32 0.0, %v2268
    %v2270 = vpop.f32.mrb[0].mxu0
    %v2271 = vpop.f32.mrb[0].mxu0
    %v2272 = vpop.f32.mrb[0].mxu0
    %2273 = vdwg.mxu0
    %v2274 = vrcp.pop %v2224
    %v2275 = vmul.f32 %v2269, %v2274
    %2276 = vrot.lane.b32.xlu0 %v2034, 80
    %v2277 = vpop.permute.xlu0 %2276
    %v2279 = vadd.f32 %v2275, %v2277
    %v2280 = vmax.f32 %v2279, 0.0
    %2282 = vrot.lane.b32.xlu0 %v2280, 48
    %v2283 = vpop.permute.xlu0 %2282
    %2285 = vst.msk [vmem:[#allocation2] sm:$0xff] %vm564, %v2283
    %v2286 = vld [vmem:[%s566] sm:$0xf]
    %v2287 = vunpack.c.l.bf16 %v2286
    %2289 = vset.pattern.permute.xlu0 0
    %2290 = vperm.xlu0 %2289, %v1910
    %v2291 = vpop.permute.xlu0 %2290
    %v2293 = vadd.f32 %v2291, %v1968
    %v2294 = vmul.f32 %v2293, 0.2
    %v2295 = vmax.f32 %v2293, %v2294
    %2297 = vrot.lane.b32.xlu0 %v2287, 8
    %v2298 = vpop.permute.xlu0 %2297
    %v2300 = vadd.f32 %v2295, %v2298
    %v2301 = vsel %vm582, %v2300, -inf
    %2302 = vmax.xlane.f32.xlu0 %v2301
    %v2303 = vpop.xlane.xlu0 %2302
    %v2304 = vsub.f32 %v2300, %v2303
    %v2305 = vmul.f32 %v2304, 1.442695
    %v2306 = vpow.pop %v2305
    %2308 = vrot.lane.b32.xlu0 %v2306, 120
    %v2309 = vpop.permute.xlu0 %2308
    %v2311 = vsel %vm62, %v2309, 0.0
    %2312 = vadd.xlane.f32.xlu0 %v2311
    %v2313 = vpop.xlane.xlu0 %2312
    %v2314 = vpack.c.bf16 %v2306, %v2306
    %2316 = vrot.lane.b32.xlu0 %v2314, 120
    %v2317 = vpop.permute.xlu0 %2316
    %v2318 = vrot.slane %v1836, 4
    %v2320 = vsel %vm62, %v2317, 0
    %v2323 = vsel %vm66, %v2318, 0
    %2325 = vmatprep.subr.bf16.mxu0 0
    %2326 = vmatpush1.bf16.msra.mxu0 %v2323
    %2327 = vmatprep.subr.bf16.mxu0 0
    %2328 = vmatpush1.bf16.msra.mxu0 0
    %2329 = vmatprep.subr.bf16.mxu0 0
    %2330 = vmatpush1.bf16.msra.mxu0 0
    %2331 = vmatprep.subr.bf16.mxu0 0
    %2332 = vmatpush1.bf16.msra.mxu0 0
    %2333 = vmatprep.subr.bf16.mxu0 0
    %2334 = vmatpush1.bf16.msra.mxu0 0
    %2335 = vmatprep.subr.bf16.mxu0 0
    %2336 = vmatpush1.bf16.msra.mxu0 0
    %2337 = vmatprep.subr.bf16.mxu0 0
    %2338 = vmatpush1.bf16.msra.mxu0 0
    %2339 = vmatprep.subr.bf16.mxu0 0
    %2340 = vmatpush1.bf16.msra.mxu0 0
    %2341 = vmatprep.subr.bf16.mxu0 0
    %2342 = vmatpush1.bf16.msra.mxu0 0
    %2343 = vmatprep.subr.bf16.mxu0 0
    %2344 = vmatpush1.bf16.msra.mxu0 0
    %2345 = vmatprep.subr.bf16.mxu0 0
    %2346 = vmatpush1.bf16.msra.mxu0 0
    %2347 = vmatprep.subr.bf16.mxu0 0
    %2348 = vmatpush1.bf16.msra.mxu0 0
    %2349 = vmatprep.subr.bf16.mxu0 0
    %2350 = vmatpush1.bf16.msra.mxu0 0
    %2351 = vmatprep.subr.bf16.mxu0 0
    %2352 = vmatpush1.bf16.msra.mxu0 0
    %2353 = vmatprep.subr.bf16.mxu0 0
    %2354 = vmatpush1.bf16.msra.mxu0 0
    %2355 = vmatprep.subr.bf16.mxu0 0
    %2356 = vmatpush1.bf16.msra.mxu0 0
    %2357 = vmatprep.mubr.bf16.mxu0 0
    %2358 = vmatmul.mubr.bf16.gmra.mrb[0].mxu0 %v2320
    %v2359 = vpop.f32.mrb[0].mxu0
    %v2360 = vadd.f32 0.0, %v2359
    %v2361 = vpop.f32.mrb[0].mxu0
    %v2362 = vpop.f32.mrb[0].mxu0
    %v2363 = vpop.f32.mrb[0].mxu0
    %2364 = vdwg.mxu0
    %v2365 = vrcp.pop %v2313
    %v2366 = vmul.f32 %v2360, %v2365
    %v2367 = vadd.f32 %v2366, %v2034
    %v2368 = vmax.f32 %v2367, 0.0
    %2369 = vst.msk [vmem:[#allocation2 + $0x8] sm:$0xff] %vm314, %v2368
    %2370 = vset.pattern.permute.xlu0 1
    %2371 = vperm.xlu0 %2370, %v1910
    %v2372 = vpop.permute.xlu0 %2371
    %v2374 = vadd.f32 %v2372, %v2046
    %v2375 = vmul.f32 %v2374, 0.2
    %v2376 = vmax.f32 %v2374, %v2375
    %v2377 = vadd.f32 %v2376, %v2298
    %v2378 = vsel %vm582, %v2377, -inf
    %2379 = vmax.xlane.f32.xlu0 %v2378
    %v2380 = vpop.xlane.xlu0 %2379
    %v2381 = vsub.f32 %v2377, %v2380
    %v2382 = vmul.f32 %v2381, 1.442695
    %v2383 = vpow.pop %v2382
    %2385 = vrot.lane.b32.xlu0 %v2383, 120
    %v2386 = vpop.permute.xlu0 %2385
    %v2388 = vsel %vm62, %v2386, 0.0
    %2389 = vadd.xlane.f32.xlu0 %v2388
    %v2390 = vpop.xlane.xlu0 %2389
    %v2391 = vpack.c.bf16 %v2383, %v2383
    %2393 = vrot.lane.b32.xlu0 %v2391, 120
    %v2394 = vpop.permute.xlu0 %2393
    %2395 = vrot.lane.b32.xlu0 %v2318, 112
    %v2396 = vpop.permute.xlu0 %2395
    %v2398 = vsel %vm62, %v2394, 0
    %v2401 = vsel %vm66, %v2396, 0
    %2403 = vmatprep.subr.bf16.mxu0 0
    %2404 = vmatpush1.bf16.msra.mxu0 %v2401
    %2405 = vmatprep.subr.bf16.mxu0 0
    %2406 = vmatpush1.bf16.msra.mxu0 0
    %2407 = vmatprep.subr.bf16.mxu0 0
    %2408 = vmatpush1.bf16.msra.mxu0 0
    %2409 = vmatprep.subr.bf16.mxu0 0
    %2410 = vmatpush1.bf16.msra.mxu0 0
    %2411 = vmatprep.subr.bf16.mxu0 0
    %2412 = vmatpush1.bf16.msra.mxu0 0
    %2413 = vmatprep.subr.bf16.mxu0 0
    %2414 = vmatpush1.bf16.msra.mxu0 0
    %2415 = vmatprep.subr.bf16.mxu0 0
    %2416 = vmatpush1.bf16.msra.mxu0 0
    %2417 = vmatprep.subr.bf16.mxu0 0
    %2418 = vmatpush1.bf16.msra.mxu0 0
    %2419 = vmatprep.subr.bf16.mxu0 0
    %2420 = vmatpush1.bf16.msra.mxu0 0
    %2421 = vmatprep.subr.bf16.mxu0 0
    %2422 = vmatpush1.bf16.msra.mxu0 0
    %2423 = vmatprep.subr.bf16.mxu0 0
    %2424 = vmatpush1.bf16.msra.mxu0 0
    %2425 = vmatprep.subr.bf16.mxu0 0
    %2426 = vmatpush1.bf16.msra.mxu0 0
    %2427 = vmatprep.subr.bf16.mxu0 0
    %2428 = vmatpush1.bf16.msra.mxu0 0
    %2429 = vmatprep.subr.bf16.mxu0 0
    %2430 = vmatpush1.bf16.msra.mxu0 0
    %2431 = vmatprep.subr.bf16.mxu0 0
    %2432 = vmatpush1.bf16.msra.mxu0 0
    %2433 = vmatprep.subr.bf16.mxu0 0
    %2434 = vmatpush1.bf16.msra.mxu0 0
    %2435 = vmatprep.mubr.bf16.mxu0 0
    %2436 = vmatmul.mubr.bf16.gmra.mrb[0].mxu0 %v2398
    %v2437 = vpop.f32.mrb[0].mxu0
    %v2438 = vadd.f32 0.0, %v2437
    %v2439 = vpop.f32.mrb[0].mxu0
    %v2440 = vpop.f32.mrb[0].mxu0
    %v2441 = vpop.f32.mrb[0].mxu0
    %2442 = vdwg.mxu0
    %v2443 = vrcp.pop %v2390
    %v2444 = vmul.f32 %v2438, %v2443
    %v2445 = vadd.f32 %v2444, %v2113
    %v2446 = vmax.f32 %v2445, 0.0
    %2448 = vrot.lane.b32.xlu0 %v2446, 16
    %v2449 = vpop.permute.xlu0 %2448
    %2451 = vst.msk [vmem:[#allocation2 + $0x8] sm:$0xff] %vm398, %v2449
    %2452 = vset.pattern.permute.xlu0 2
    %2453 = vperm.xlu0 %2452, %v1910
    %v2454 = vpop.permute.xlu0 %2453
    %v2456 = vadd.f32 %v2454, %v2129
    %v2457 = vmul.f32 %v2456, 0.2
    %v2458 = vmax.f32 %v2456, %v2457
    %v2459 = vadd.f32 %v2458, %v2298
    %v2460 = vsel %vm582, %v2459, -inf
    %2461 = vmax.xlane.f32.xlu0 %v2460
    %v2462 = vpop.xlane.xlu0 %2461
    %v2463 = vsub.f32 %v2459, %v2462
    %v2464 = vmul.f32 %v2463, 1.442695
    %v2465 = vpow.pop %v2464
    %2467 = vrot.lane.b32.xlu0 %v2465, 120
    %v2468 = vpop.permute.xlu0 %2467
    %v2470 = vsel %vm62, %v2468, 0.0
    %2471 = vadd.xlane.f32.xlu0 %v2470
    %v2472 = vpop.xlane.xlu0 %2471
    %v2473 = vpack.c.bf16 %v2465, %v2465
    %2475 = vrot.lane.b32.xlu0 %v2473, 120
    %v2476 = vpop.permute.xlu0 %2475
    %2477 = vrot.lane.b32.xlu0 %v2318, 96
    %v2478 = vpop.permute.xlu0 %2477
    %v2480 = vsel %vm62, %v2476, 0
    %v2483 = vsel %vm66, %v2478, 0
    %2485 = vmatprep.subr.bf16.mxu0 0
    %2486 = vmatpush1.bf16.msra.mxu0 %v2483
    %2487 = vmatprep.subr.bf16.mxu0 0
    %2488 = vmatpush1.bf16.msra.mxu0 0
    %2489 = vmatprep.subr.bf16.mxu0 0
    %2490 = vmatpush1.bf16.msra.mxu0 0
    %2491 = vmatprep.subr.bf16.mxu0 0
    %2492 = vmatpush1.bf16.msra.mxu0 0
    %2493 = vmatprep.subr.bf16.mxu0 0
    %2494 = vmatpush1.bf16.msra.mxu0 0
    %2495 = vmatprep.subr.bf16.mxu0 0
    %2496 = vmatpush1.bf16.msra.mxu0 0
    %2497 = vmatprep.subr.bf16.mxu0 0
    %2498 = vmatpush1.bf16.msra.mxu0 0
    %2499 = vmatprep.subr.bf16.mxu0 0
    %2500 = vmatpush1.bf16.msra.mxu0 0
    %2501 = vmatprep.subr.bf16.mxu0 0
    %2502 = vmatpush1.bf16.msra.mxu0 0
    %2503 = vmatprep.subr.bf16.mxu0 0
    %2504 = vmatpush1.bf16.msra.mxu0 0
    %2505 = vmatprep.subr.bf16.mxu0 0
    %2506 = vmatpush1.bf16.msra.mxu0 0
    %2507 = vmatprep.subr.bf16.mxu0 0
    %2508 = vmatpush1.bf16.msra.mxu0 0
    %2509 = vmatprep.subr.bf16.mxu0 0
    %2510 = vmatpush1.bf16.msra.mxu0 0
    %2511 = vmatprep.subr.bf16.mxu0 0
    %2512 = vmatpush1.bf16.msra.mxu0 0
    %2513 = vmatprep.subr.bf16.mxu0 0
    %2514 = vmatpush1.bf16.msra.mxu0 0
    %2515 = vmatprep.subr.bf16.mxu0 0
    %2516 = vmatpush1.bf16.msra.mxu0 0
    %2517 = vmatprep.mubr.bf16.mxu0 0
    %2518 = vmatmul.mubr.bf16.gmra.mrb[0].mxu0 %v2480
    %v2519 = vpop.f32.mrb[0].mxu0
    %v2520 = vadd.f32 0.0, %v2519
    %v2521 = vpop.f32.mrb[0].mxu0
    %v2522 = vpop.f32.mrb[0].mxu0
    %v2523 = vpop.f32.mrb[0].mxu0
    %2524 = vdwg.mxu0
    %v2525 = vrcp.pop %v2472
    %v2526 = vmul.f32 %v2520, %v2525
    %v2527 = vadd.f32 %v2526, %v2195
    %v2528 = vmax.f32 %v2527, 0.0
    %2530 = vrot.lane.b32.xlu0 %v2528, 32
    %v2531 = vpop.permute.xlu0 %2530
    %2533 = vst.msk [vmem:[#allocation2 + $0x8] sm:$0xff] %vm481, %v2531
    %2534 = vset.pattern.permute.xlu0 3
    %2535 = vperm.xlu0 %2534, %v1910
    %v2536 = vpop.permute.xlu0 %2535
    %v2538 = vadd.f32 %v2536, %v2211
    %v2539 = vmul.f32 %v2538, 0.2
    %v2540 = vmax.f32 %v2538, %v2539
    %v2541 = vadd.f32 %v2540, %v2298
    %v2542 = vsel %vm582, %v2541, -inf
    %2543 = vmax.xlane.f32.xlu0 %v2542
    %v2544 = vpop.xlane.xlu0 %2543
    %v2545 = vsub.f32 %v2541, %v2544
    %v2546 = vmul.f32 %v2545, 1.442695
    %v2547 = vpow.pop %v2546
    %2549 = vrot.lane.b32.xlu0 %v2547, 120
    %v2550 = vpop.permute.xlu0 %2549
    %v2552 = vsel %vm62, %v2550, 0.0
    %2553 = vadd.xlane.f32.xlu0 %v2552
    %v2554 = vpop.xlane.xlu0 %2553
    %v2555 = vpack.c.bf16 %v2547, %v2547
    %2557 = vrot.lane.b32.xlu0 %v2555, 120
    %v2558 = vpop.permute.xlu0 %2557
    %2559 = vrot.lane.b32.xlu0 %v2318, 80
    %v2560 = vpop.permute.xlu0 %2559
    %v2562 = vsel %vm62, %v2558, 0
    %v2565 = vsel %vm66, %v2560, 0
    %2567 = vmatprep.subr.bf16.mxu0 0
    %2568 = vmatpush1.bf16.msra.mxu0 %v2565
    %2569 = vmatprep.subr.bf16.mxu0 0
    %2570 = vmatpush1.bf16.msra.mxu0 0
    %2571 = vmatprep.subr.bf16.mxu0 0
    %2572 = vmatpush1.bf16.msra.mxu0 0
    %2573 = vmatprep.subr.bf16.mxu0 0
    %2574 = vmatpush1.bf16.msra.mxu0 0
    %2575 = vmatprep.subr.bf16.mxu0 0
    %2576 = vmatpush1.bf16.msra.mxu0 0
    %2577 = vmatprep.subr.bf16.mxu0 0
    %2578 = vmatpush1.bf16.msra.mxu0 0
    %2579 = vmatprep.subr.bf16.mxu0 0
    %2580 = vmatpush1.bf16.msra.mxu0 0
    %2581 = vmatprep.subr.bf16.mxu0 0
    %2582 = vmatpush1.bf16.msra.mxu0 0
    %2583 = vmatprep.subr.bf16.mxu0 0
    %2584 = vmatpush1.bf16.msra.mxu0 0
    %2585 = vmatprep.subr.bf16.mxu0 0
    %2586 = vmatpush1.bf16.msra.mxu0 0
    %2587 = vmatprep.subr.bf16.mxu0 0
    %2588 = vmatpush1.bf16.msra.mxu0 0
    %2589 = vmatprep.subr.bf16.mxu0 0
    %2590 = vmatpush1.bf16.msra.mxu0 0
    %2591 = vmatprep.subr.bf16.mxu0 0
    %2592 = vmatpush1.bf16.msra.mxu0 0
    %2593 = vmatprep.subr.bf16.mxu0 0
    %2594 = vmatpush1.bf16.msra.mxu0 0
    %2595 = vmatprep.subr.bf16.mxu0 0
    %2596 = vmatpush1.bf16.msra.mxu0 0
    %2597 = vmatprep.subr.bf16.mxu0 0
    %2598 = vmatpush1.bf16.msra.mxu0 0
    %2599 = vmatprep.mubr.bf16.mxu0 0
    %2600 = vmatmul.mubr.bf16.gmra.mrb[0].mxu0 %v2562
    %v2601 = vpop.f32.mrb[0].mxu0
    %v2602 = vadd.f32 0.0, %v2601
    %v2603 = vpop.f32.mrb[0].mxu0
    %v2604 = vpop.f32.mrb[0].mxu0
    %v2605 = vpop.f32.mrb[0].mxu0
    %2606 = vdwg.mxu0
    %v2607 = vrcp.pop %v2554
    %v2608 = vmul.f32 %v2602, %v2607
    %v2609 = vadd.f32 %v2608, %v2277
    %v2610 = vmax.f32 %v2609, 0.0
    %2612 = vrot.lane.b32.xlu0 %v2610, 48
    %v2613 = vpop.permute.xlu0 %2612
    %2615 = vst.msk [vmem:[#allocation2 + $0x8] sm:$0xff] %vm564, %v2613
    %v2616 = vld [vmem:[#allocation2] sm:$0xff]
    %v2617 = vld [vmem:[#allocation2 + $0x8] sm:$0xff]
    %v2618 = vld [vmem:[%s2] sm:$0x1]
    %v2620 = vsel %vm62, %v2618, 0
    %2622 = vmatprep.subr.mxu0 0.0
    %2623 = vmatpush1.msra.mxu0 %v2616
    %2624 = vmatprep.subr.mxu0 0.0
    %2625 = vmatpush1.msra.mxu0 0.0
    %2626 = vmatprep.subr.mxu0 0.0
    %2627 = vmatpush1.msra.mxu0 0.0
    %2628 = vmatprep.subr.mxu0 0.0
    %2629 = vmatpush1.msra.mxu0 0.0
    %2630 = vmatprep.subr.mxu0 0.0
    %2631 = vmatpush1.msra.mxu0 0.0
    %2632 = vmatprep.subr.mxu0 0.0
    %2633 = vmatpush1.msra.mxu0 0.0
    %2634 = vmatprep.subr.mxu0 0.0
    %2635 = vmatpush1.msra.mxu0 0.0
    %2636 = vmatprep.subr.mxu0 0.0
    %2637 = vmatpush1.msra.mxu0 0.0
    %2638 = vmatprep.subr.mxu0 0.0
    %2639 = vmatpush1.msra.mxu0 0.0
    %2640 = vmatprep.subr.mxu0 0.0
    %2641 = vmatpush1.msra.mxu0 0.0
    %2642 = vmatprep.subr.mxu0 0.0
    %2643 = vmatpush1.msra.mxu0 0.0
    %2644 = vmatprep.subr.mxu0 0.0
    %2645 = vmatpush1.msra.mxu0 0.0
    %2646 = vmatprep.subr.mxu0 0.0
    %2647 = vmatpush1.msra.mxu0 0.0
    %2648 = vmatprep.subr.mxu0 0.0
    %2649 = vmatpush1.msra.mxu0 0.0
    %2650 = vmatprep.subr.mxu0 0.0
    %2651 = vmatpush1.msra.mxu0 0.0
    %2652 = vmatprep.subr.mxu0 0.0
    %2653 = vmatpush1.msra.mxu0 0.0
    %2654 = vmatprep.subr.mxu0 0.0
    %2655 = vmatpush1.msra.mxu0 0.0
    %2656 = vmatprep.subr.mxu0 0.0
    %2657 = vmatpush1.msra.mxu0 0.0
    %2658 = vmatprep.subr.mxu0 0.0
    %2659 = vmatpush1.msra.mxu0 0.0
    %2660 = vmatprep.subr.mxu0 0.0
    %2661 = vmatpush1.msra.mxu0 0.0
    %2662 = vmatprep.subr.mxu0 0.0
    %2663 = vmatpush1.msra.mxu0 0.0
    %2664 = vmatprep.subr.mxu0 0.0
    %2665 = vmatpush1.msra.mxu0 0.0
    %2666 = vmatprep.subr.mxu0 0.0
    %2667 = vmatpush1.msra.mxu0 0.0
    %2668 = vmatprep.subr.mxu0 0.0
    %2669 = vmatpush1.msra.mxu0 0.0
    %2670 = vmatprep.subr.mxu0 0.0
    %2671 = vmatpush1.msra.mxu0 0.0
    %2672 = vmatprep.subr.mxu0 0.0
    %2673 = vmatpush1.msra.mxu0 0.0
    %2674 = vmatprep.subr.mxu0 0.0
    %2675 = vmatpush1.msra.mxu0 0.0
    %2676 = vmatprep.subr.mxu0 0.0
    %2677 = vmatpush1.msra.mxu0 0.0
    %2678 = vmatprep.subr.mxu0 0.0
    %2679 = vmatpush1.msra.mxu0 0.0
    %2680 = vmatprep.subr.mxu0 0.0
    %2681 = vmatpush1.msra.mxu0 0.0
    %2682 = vmatprep.subr.mxu0 0.0
    %2683 = vmatpush1.msra.mxu0 0.0
    %2684 = vmatprep.subr.mxu0 0.0
    %2685 = vmatpush1.msra.mxu0 0.0
    %2686 = vmatprep.mubr.f32.mxu0 0.0
    %2687 = vmatmul.mubr.f32.gmra.mrb[0].mxu0 %v2620
    %v2688 = vpop.f32.mrb[0].mxu0
    %v2689 = vadd.f32 0.0, %v2688
    %v2690 = vpop.f32.mrb[0].mxu0
    %2691 = vdwg.mxu0
    %vm2692 = vcmask 516096
    %2693 = vst.msk [vmem:[#allocation3] sm:$0x1] %vm2692, %v2689
    %s2694 = scalar_lea.vmem %s2, 1
    %v2695 = vld [vmem:[%s2694] sm:$0x1]
    %v2697 = vsel %vm62, %v2695, 0
    %2699 = vmatprep.subr.mxu0 0.0
    %2700 = vmatpush1.msra.mxu0 %v2617
    %2701 = vmatprep.subr.mxu0 0.0
    %2702 = vmatpush1.msra.mxu0 0.0
    %2703 = vmatprep.subr.mxu0 0.0
    %2704 = vmatpush1.msra.mxu0 0.0
    %2705 = vmatprep.subr.mxu0 0.0
    %2706 = vmatpush1.msra.mxu0 0.0
    %2707 = vmatprep.subr.mxu0 0.0
    %2708 = vmatpush1.msra.mxu0 0.0
    %2709 = vmatprep.subr.mxu0 0.0
    %2710 = vmatpush1.msra.mxu0 0.0
    %2711 = vmatprep.subr.mxu0 0.0
    %2712 = vmatpush1.msra.mxu0 0.0
    %2713 = vmatprep.subr.mxu0 0.0
    %2714 = vmatpush1.msra.mxu0 0.0
    %2715 = vmatprep.subr.mxu0 0.0
    %2716 = vmatpush1.msra.mxu0 0.0
    %2717 = vmatprep.subr.mxu0 0.0
    %2718 = vmatpush1.msra.mxu0 0.0
    %2719 = vmatprep.subr.mxu0 0.0
    %2720 = vmatpush1.msra.mxu0 0.0
    %2721 = vmatprep.subr.mxu0 0.0
    %2722 = vmatpush1.msra.mxu0 0.0
    %2723 = vmatprep.subr.mxu0 0.0
    %2724 = vmatpush1.msra.mxu0 0.0
    %2725 = vmatprep.subr.mxu0 0.0
    %2726 = vmatpush1.msra.mxu0 0.0
    %2727 = vmatprep.subr.mxu0 0.0
    %2728 = vmatpush1.msra.mxu0 0.0
    %2729 = vmatprep.subr.mxu0 0.0
    %2730 = vmatpush1.msra.mxu0 0.0
    %2731 = vmatprep.subr.mxu0 0.0
    %2732 = vmatpush1.msra.mxu0 0.0
    %2733 = vmatprep.subr.mxu0 0.0
    %2734 = vmatpush1.msra.mxu0 0.0
    %2735 = vmatprep.subr.mxu0 0.0
    %2736 = vmatpush1.msra.mxu0 0.0
    %2737 = vmatprep.subr.mxu0 0.0
    %2738 = vmatpush1.msra.mxu0 0.0
    %2739 = vmatprep.subr.mxu0 0.0
    %2740 = vmatpush1.msra.mxu0 0.0
    %2741 = vmatprep.subr.mxu0 0.0
    %2742 = vmatpush1.msra.mxu0 0.0
    %2743 = vmatprep.subr.mxu0 0.0
    %2744 = vmatpush1.msra.mxu0 0.0
    %2745 = vmatprep.subr.mxu0 0.0
    %2746 = vmatpush1.msra.mxu0 0.0
    %2747 = vmatprep.subr.mxu0 0.0
    %2748 = vmatpush1.msra.mxu0 0.0
    %2749 = vmatprep.subr.mxu0 0.0
    %2750 = vmatpush1.msra.mxu0 0.0
    %2751 = vmatprep.subr.mxu0 0.0
    %2752 = vmatpush1.msra.mxu0 0.0
    %2753 = vmatprep.subr.mxu0 0.0
    %2754 = vmatpush1.msra.mxu0 0.0
    %2755 = vmatprep.subr.mxu0 0.0
    %2756 = vmatpush1.msra.mxu0 0.0
    %2757 = vmatprep.subr.mxu0 0.0
    %2758 = vmatpush1.msra.mxu0 0.0
    %2759 = vmatprep.subr.mxu0 0.0
    %2760 = vmatpush1.msra.mxu0 0.0
    %2761 = vmatprep.subr.mxu0 0.0
    %2762 = vmatpush1.msra.mxu0 0.0
    %2763 = vmatprep.mubr.f32.mxu0 0.0
    %2764 = vmatmul.mubr.f32.gmra.mrb[0].mxu0 %v2697
    %v2765 = vpop.f32.mrb[0].mxu0
    %v2766 = vadd.f32 0.0, %v2765
    %v2767 = vpop.f32.mrb[0].mxu0
    %2768 = vdwg.mxu0
    %2769 = vst.msk [vmem:[#allocation3 + $0x1] sm:$0x1] %vm2692, %v2766
    %v2770 = vld [vmem:[#allocation3] sm:$0x3]
    %v2771 = vpack.c.bf16 %v2770, %v2770
    %v2772 = vld [vmem:[%s15] sm:$0xf]
    %v2773 = vld [vmem:[%s15 + $0x4] sm:$0xf]
    %v2774 = vld [vmem:[%s15 + $0x8] sm:$0xf]
    %v2775 = vld [vmem:[%s15 + $0xc] sm:$0xf]
    %v2776 = vld [vmem:[%s15 + $0x10] sm:$0xf]
    %v2777 = vld [vmem:[%s15 + $0x14] sm:$0xf]
    %v2778 = vld [vmem:[%s15 + $0x18] sm:$0xf]
    %v2779 = vld [vmem:[%s15 + $0x1c] sm:$0xf]
    %v2780 = vld [vmem:[%s16] sm:$0x1]
    %v2782 = vlaneseq
    %v2783 = vshrl.u32 %v2782, 7
    %v2784 = vsub.s32 0, %v2783
    %v2785 = vrot.slane %v2780, %v2784
    %v2795 = vunpack.c.l.b16 %v2772
    %v2796 = vunpack.c.l.b16 %v2773
    %v2797 = vunpack.c.l.b16 %v2774
    %v2798 = vunpack.c.l.b16 %v2775
    %v2799 = vunpack.c.l.b16 %v2776
    %v2800 = vunpack.c.l.b16 %v2777
    %v2801 = vunpack.c.l.b16 %v2778
    %v2802 = vunpack.c.l.b16 %v2779
    %v2803 = vpack.c.b16 %v2796, %v2795
    %v2804 = vpack.c.b16 %v2798, %v2797
    %v2805 = vpack.c.b16 %v2800, %v2799
    %v2806 = vpack.c.b16 %v2802, %v2801
    %v2812 = vsel %vm144, %v2771, 0
    %2814 = vmatprep.subr.bf16.mxu0 0
    %2815 = vmatpush1.bf16.msra.mxu0 %v2803
    %2816 = vmatprep.subr.bf16.mxu0 0
    %2817 = vmatpush1.bf16.msra.mxu0 %v2804
    %2818 = vmatprep.subr.bf16.mxu0 0
    %2819 = vmatpush1.bf16.msra.mxu0 %v2805
    %2820 = vmatprep.subr.bf16.mxu0 0
    %2821 = vmatpush1.bf16.msra.mxu0 %v2806
    %2822 = vmatprep.subr.bf16.mxu0 0
    %2823 = vmatpush1.bf16.msra.mxu0 0
    %2824 = vmatprep.subr.bf16.mxu0 0
    %2825 = vmatpush1.bf16.msra.mxu0 0
    %2826 = vmatprep.subr.bf16.mxu0 0
    %2827 = vmatpush1.bf16.msra.mxu0 0
    %2828 = vmatprep.subr.bf16.mxu0 0
    %2829 = vmatpush1.bf16.msra.mxu0 0
    %2830 = vmatprep.subr.bf16.mxu0 0
    %2831 = vmatpush1.bf16.msra.mxu0 0
    %2832 = vmatprep.subr.bf16.mxu0 0
    %2833 = vmatpush1.bf16.msra.mxu0 0
    %2834 = vmatprep.subr.bf16.mxu0 0
    %2835 = vmatpush1.bf16.msra.mxu0 0
    %2836 = vmatprep.subr.bf16.mxu0 0
    %2837 = vmatpush1.bf16.msra.mxu0 0
    %2838 = vmatprep.subr.bf16.mxu0 0
    %2839 = vmatpush1.bf16.msra.mxu0 0
    %2840 = vmatprep.subr.bf16.mxu0 0
    %2841 = vmatpush1.bf16.msra.mxu0 0
    %2842 = vmatprep.subr.bf16.mxu0 0
    %2843 = vmatpush1.bf16.msra.mxu0 0
    %2844 = vmatprep.subr.bf16.mxu0 0
    %2845 = vmatpush1.bf16.msra.mxu0 0
    %2846 = vmatprep.mubr.bf16.mxu0 0
    %2847 = vmatmul.mubr.bf16.gmra.mrb[0].mxu0 %v2812
    %v2848 = vpop.f32.mrb[0].mxu0
    %v2849 = vadd.f32 %v2785, %v2848
    %v2850 = vpop.f32.mrb[0].mxu0
    %v2851 = vpop.f32.mrb[0].mxu0
    %v2852 = vpop.f32.mrb[0].mxu0
    %2853 = vdwg.mxu0
    %vm2854 = vcmask 58368
    %2855 = vst.msk [vmem:[#allocation4] sm:$0x3] %vm2854, %v2849
    // Predicated region
    $region70: #{tpu_custom_call.1} parent=1 // pred_check
      _
    $region71: #{tpu_custom_call.1} parent=1 // pred_check_branch
      %2857 = sbr.rel (0) target = $region73
    $region72: #{tpu_custom_call.1} parent=1 // pred_region
      %s2859 = ssub.s32 32, 32
      %2860 = vsyncadd [#allocation5], %s2859
      %s2862 = sshll.u32 [#allocation4], 4
      %s2863 = int_to_ptr.vmem [resolvable:$true] %s2862
      %2865 = dma.vmem_to_hbm [thread:$0]  %s2863, 32, %s17, [#allocation5]
    $region73: #{tpu_custom_call.1} parent=1 // pred_fallthru
      _
    // Predicated region
    $region74: #{tpu_custom_call.1} parent=1 // pred_check
      _
    $region75: #{tpu_custom_call.1} parent=1 // pred_check_branch
      %2867 = sbr.rel (0) target = $region77
    $region76: #{tpu_custom_call.1} parent=1 // pred_region
      %2868 = dma.done [#allocation5], 32
    $region77: #{tpu_custom_call.1} parent=1 // pred_fallthru
      _
    %2869 = vsyncpa [#allocation5], 1

</llo_original>
